<compile_context>
chip_gen: v5e
topology: v5e:2x2
jax: 0.10.0
libtpu: 0.0.40
codegen_flags: <defaults>
</compile_context>

<pallas_src>
import functools

import numpy as np
import jax
import jax.numpy as jnp
from jax.experimental import pallas as pl
from jax.experimental.pallas import tpu as pltpu


# ----------------------------------------------------------------------------
# Fused kernel: for a tile of Bt windows do
#   qkv = x2 @ Wqkv2            (complex 1x1 conv, real/imag packed)
#   per head: complex QK^T (+bias on real part), softmax on |attn|, A@V
#   y2  = attn_out @ Wproj2     (complex 1x1 conv)
# ----------------------------------------------------------------------------
def _fused_swin_attn_kernel(x_ref, wqkv_ref, wproj_ref, bias_ref, o_ref,
                            *, num_heads, scale):
    Bt, N, C2 = x_ref.shape
    C = C2 // 2
    d = C // num_heads

    x2 = x_ref[...]          # (Bt, N, 2C)   [xr | xi]
    wqkv2 = wqkv_ref[...]    # (2C, 6C)      columns pre-permuted per head
    wproj2 = wproj_ref[...]  # (2C, 2C)      rows pre-permuted to attn_out order
    bias = bias_ref[...]     # (nh, N, N)

    # complex qkv conv == one real matmul, contraction 2C
    dn_xw = (((2,), (0,)), ((), ()))
    qkv = jax.lax.dot_general(x2, wqkv2, dn_xw,
                              preferred_element_type=jnp.float32)  # (Bt, N, 6C)

    dn_qk = (((2,), (2,)), ((0,), (0,)))   # (Bt,N,2d) x (Bt,N,2d) -> (Bt,N,N)
    dn_pv = (((2,), (1,)), ((0,), (0,)))   # (Bt,N,2N) x (Bt,2N,2d) -> (Bt,N,2d)

    out_parts = []
    for h in range(num_heads):
        base = h * 6 * d
        # contiguous per-head slices thanks to host-side weight column permutation
        qcat = qkv[..., base: base + 2 * d]            # [qr | qi]
        kcat = qkv[..., base + 2 * d: base + 4 * d]    # [kr | ki]
        vtop = qkv[..., base + 4 * d: base + 6 * d]    # [vr | vi]

        qr = qcat[..., :d]
        qi = qcat[..., d:]
        q2cat = jnp.concatenate([qi, -qr], axis=-1)    # for the imaginary part

        # attn = q @ conj(k)^T * scale  (+ real-valued relative-position bias)
        ar = jax.lax.dot_general(qcat, kcat, dn_qk,
                                 preferred_element_type=jnp.float32)
        ai = jax.lax.dot_general(q2cat, kcat, dn_qk,
                                 preferred_element_type=jnp.float32)
        ar = ar * scale + bias[h][None, :, :]
        ai = ai * scale

        # softmax over magnitude, rescale complex attn
        mag = jnp.sqrt(ar * ar + ai * ai)
        m = jnp.max(mag, axis=-1, keepdims=True)
        e = jnp.exp(mag - m)
        attn_mag = e * pl.reciprocal(jnp.sum(e, axis=-1, keepdims=True),
                                     approx=False)
        factor = attn_mag * pl.reciprocal(mag + 1e-8, approx=False)
        ar = ar * factor
        ai = ai * factor

        # out = attn @ v in one matmul with contraction 2N
        vr = vtop[..., :d]
        vi = vtop[..., d:]
        vbot = jnp.concatenate([-vi, vr], axis=-1)              # (Bt, N, 2d)
        vcat = jnp.concatenate([vtop, vbot], axis=1)            # (Bt, 2N, 2d)
        p = jnp.concatenate([ar, ai], axis=-1)                  # (Bt, N, 2N)
        out_h = jax.lax.dot_general(p, vcat, dn_pv,
                                    preferred_element_type=jnp.float32)
        out_parts.append(out_h)                                 # (Bt, N, 2d)

    attn_out = jnp.concatenate(out_parts, axis=-1)              # (Bt, N, 2C)

    # complex projection conv == one real matmul (rows of wproj2 pre-permuted)
    y2 = jax.lax.dot_general(attn_out, wproj2, dn_xw,
                             preferred_element_type=jnp.float32)
    o_ref[...] = y2.astype(o_ref.dtype)


# ----------------------------------------------------------------------------
# Host-side weight stacking / permutations (tiny, done once per call).
# ----------------------------------------------------------------------------
def _stack_complex_weight(wr_t, wi_t):
    """[Cin,Cout] real/imag -> [2Cin, 2Cout] so [xr|xi] @ W2 = [yr|yi]."""
    top = jnp.concatenate([wr_t, wi_t], axis=1)
    bot = jnp.concatenate([-wi_t, wr_t], axis=1)
    return jnp.concatenate([top, bot], axis=0)


def _qkv_output_permutation(C, num_heads):
    """Permute qkv output columns so head h is contiguous: [qr qi kr ki vr vi]."""
    d = C // num_heads
    perm = []
    for h in range(num_heads):
        for base in (0, 3 * C, C, 4 * C, 2 * C, 5 * C):  # qr, qi, kr, ki, vr, vi
            perm.extend(range(base + h * d, base + (h + 1) * d))
    return np.asarray(perm, dtype=np.int32)


def _proj_input_permutation(C, num_heads):
    """Permute proj rows to match attn_out layout [h0_r h0_i h1_r h1_i ...]."""
    d = C // num_heads
    perm = []
    for h in range(num_heads):
        perm.extend(range(h * d, (h + 1) * d))           # real of head h
        perm.extend(range(C + h * d, C + (h + 1) * d))   # imag of head h
    return np.asarray(perm, dtype=np.int32)


def _pick_block_b(B):
    """Batch windows per grid step; keep >=2 steps so v7x's 2 TCs both get work."""
    for cand in (8, 4, 2, 1):
        if B % cand == 0 and B // cand >= 2:
            return cand
    return B


# ----------------------------------------------------------------------------
# Full forward: thin JAX glue (NCHW <-> token-major) around one fused pallas_call.
# ----------------------------------------------------------------------------
def complex_swin_attention_pallas(xr_nchw, xi_nchw, wqkv_r, wqkv_i,
                                  wproj_r, wproj_i, bias, num_heads, scale):
    """xr/xi: [B, C, H, W]; conv weights [Cout, Cin] (1x1 squeezed, torch layout);
    bias: [nh, N, N]. Returns (real, imag) outputs in NCHW."""
    B, C, H, W = xr_nchw.shape
    N = H * W

    # NCHW -> [B, N, 2C] with real | imag packed along the lane dim.
    xr = xr_nchw.reshape(B, C, N).transpose(0, 2, 1)
    xi = xi_nchw.reshape(B, C, N).transpose(0, 2, 1)
    x2 = jnp.concatenate([xr, xi], axis=-1)

    # Stacked complex weights ([Cin,Cout] orientation) + head-layout permutations.
    wqkv2 = _stack_complex_weight(wqkv_r.T, wqkv_i.T)        # (2C, 6C)
    wqkv2 = wqkv2[:, _qkv_output_permutation(C, num_heads)]
    wproj2 = _stack_complex_weight(wproj_r.T, wproj_i.T)     # (2C, 2C)
    wproj2 = wproj2[_proj_input_permutation(C, num_heads), :]

    block_b = _pick_block_b(B)
    nb = B // block_b

    kernel = functools.partial(_fused_swin_attn_kernel,
                               num_heads=num_heads, scale=float(scale))

    y2 = pl.pallas_call(
        kernel,
        out_shape=jax.ShapeDtypeStruct((B, N, 2 * C), jnp.float32),
        grid_spec=pltpu.PrefetchScalarGridSpec(
            num_scalar_prefetch=0,
            grid=(nb,),
            in_specs=[
                pl.BlockSpec((block_b, N, 2 * C), lambda i: (i, 0, 0)),
                pl.BlockSpec((2 * C, 6 * C), lambda i: (0, 0)),
                pl.BlockSpec((2 * C, 2 * C), lambda i: (0, 0)),
                pl.BlockSpec((num_heads, N, N), lambda i: (0, 0, 0)),
            ],
            out_specs=pl.BlockSpec((block_b, N, 2 * C), lambda i: (i, 0, 0)),
        ),
        compiler_params=pltpu.CompilerParams(
            dimension_semantics=("parallel",)),
    )(x2, wqkv2, wproj2, bias)

    # [B, N, 2C] -> NCHW real/imag
    yr = y2[..., :C].transpose(0, 2, 1).reshape(B, C, H, W)
    yi = y2[..., C:].transpose(0, 2, 1).reshape(B, C, H, W)
    return yr, yi


# ----------------------------------------------------------------------------
# Relative position index / bias (same construction as the PyTorch module).
# ----------------------------------------------------------------------------
def relative_position_index(Wh, Ww):
    coords = np.stack(np.meshgrid(np.arange(Wh), np.arange(Ww), indexing="ij"))
    coords_flatten = coords.reshape(2, -1)
    rel = coords_flatten[:, :, None] - coords_flatten[:, None, :]
    rel = rel.transpose(1, 2, 0).copy()
    rel[:, :, 0] += Wh - 1
    rel[:, :, 1] += Ww - 1
    rel[:, :, 0] *= 2 * Ww - 1
    return rel.sum(-1)  # (Wh*Ww, Wh*Ww)


# ----------------------------------------------------------------------------
# Pure-JAX reference (mirrors the PyTorch forward with complex64 arithmetic).
# ----------------------------------------------------------------------------
def reference_forward(x_c, wqkv_c, wproj_c, bias, num_heads, scale):
    B, C, H, W = x_c.shape
    N = H * W
    d = C // num_heads
    qkv = jnp.einsum("oc,bchw->bohw", wqkv_c, x_c)
    q, k, v = jnp.split(qkv, 3, axis=1)

    def rearr(t):  # b (h d) hh ww -> b h (hh ww) d
        return t.reshape(B, num_heads, d, N).transpose(0, 1, 3, 2)

    q, k, v = rearr(q), rearr(k), rearr(v)
    attn = jnp.einsum("bhnd,bhmd->bhnm", q, jnp.conj(k)) * scale
    attn = attn + bias[None].astype(attn.dtype)
    mag = jnp.abs(attn)
    attn_mag = jax.nn.softmax(mag, axis=-1)
    attn = attn * (attn_mag / (mag + 1e-8))
    out = jnp.einsum("bhnm,bhmd->bhnd", attn, v)
    out = out.transpose(0, 1, 3, 2).reshape(B, C, H, W)
    return jnp.einsum("oc,bchw->bohw", wproj_c, out)


if __name__ == "__main__":
    # attention is over the full window, so H, W == window_size
    B, dim, num_heads = 2, 32, 4
    Wh, Ww = 8, 8
    H, W = Wh, Ww
    N = H * W
    head_dim = dim // num_heads
    scale = head_dim ** (-0.5)

    key = jax.random.PRNGKey(0)
    ks = jax.random.split(key, 8)
    xr = jax.random.normal(ks[0], (B, dim, H, W), jnp.float32)
    xi = jax.random.normal(ks[1], (B, dim, H, W), jnp.float32)
    # 1x1 conv weights, stored as [Cout, Cin] (squeezed torch layout), no bias
    wqkv_r = jax.random.normal(ks[2], (3 * dim, dim), jnp.float32) * 0.1
    wqkv_i = jax.random.normal(ks[3], (3 * dim, dim), jnp.float32) * 0.1
    wproj_r = jax.random.normal(ks[4], (dim, dim), jnp.float32) * 0.1
    wproj_i = jax.random.normal(ks[5], (dim, dim), jnp.float32) * 0.1
    # relative position bias table (synthetic non-zero values to exercise the path)
    table = jax.random.normal(ks[6], ((2 * Wh - 1) * (2 * Ww - 1), num_heads),
                              jnp.float32) * 0.1
    rel_idx = relative_position_index(Wh, Ww)
    bias = jnp.asarray(np.asarray(table)[rel_idx.reshape(-1)]
                       .reshape(N, N, num_heads).transpose(2, 0, 1))  # [nh, N, N]

    # Pallas fused forward
    yr, yi = complex_swin_attention_pallas(
        xr, xi, wqkv_r, wqkv_i, wproj_r, wproj_i, bias, num_heads, scale)
    yr, yi = jax.block_until_ready((yr, yi))

    # reference forward in complex64
    x_c = xr.astype(jnp.complex64) + 1j * xi.astype(jnp.complex64)
    wqkv_c = wqkv_r.astype(jnp.complex64) + 1j * wqkv_i.astype(jnp.complex64)
    wproj_c = wproj_r.astype(jnp.complex64) + 1j * wproj_i.astype(jnp.complex64)
    y_ref = reference_forward(x_c, wqkv_c, wproj_c, bias, num_heads, scale)

    np.testing.assert_allclose(np.asarray(yr), np.real(np.asarray(y_ref)),
                               rtol=1e-3, atol=1e-3)
    np.testing.assert_allclose(np.asarray(yi), np.imag(np.asarray(y_ref)),
                               rtol=1e-3, atol=1e-3)
    print("KERNEL_OK")
</pallas_src>

<mosaic_0001>
module attributes {stable_mosaic.version = 11 : i64} {
  func.func @_fused_swin_attn_kernel(%arg0: i32, %arg1: memref<1x64x64xf32, #tpu.memory_space<vmem>>, %arg2: memref<64x192xf32, #tpu.memory_space<vmem>>, %arg3: memref<64x64xf32, #tpu.memory_space<vmem>>, %arg4: memref<4x64x64xf32, #tpu.memory_space<vmem>>, %arg5: memref<1x64x64xf32, #tpu.memory_space<vmem>>) attributes {dimension_semantics = [#tpu.dimension_semantics<parallel>], iteration_bounds = array<i64: 2>, scalar_prefetch = 0 : i64, scratch_operands = 0 : i64, tpu.core_type = #tpu.core_type<tc>, window_params = [{transform_indices = @transform_0, window_bounds = array<i64: 1, 64, 64>}, {pipeline_mode = #tpu.pipeline_mode<synchronous>, transform_indices = @transform_1, window_bounds = array<i64: 64, 192>}, {pipeline_mode = #tpu.pipeline_mode<synchronous>, transform_indices = @transform_2, window_bounds = array<i64: 64, 64>}, {pipeline_mode = #tpu.pipeline_mode<synchronous>, transform_indices = @transform_3, window_bounds = array<i64: 4, 64, 64>}, {transform_indices = @transform_4, window_bounds = array<i64: 1, 64, 64>}]} {
    %c0 = arith.constant 0 : index
    %c0_0 = arith.constant 0 : index
    %c0_1 = arith.constant 0 : index
    %0 = vector.load %arg1[%c0, %c0_0, %c0_1] : memref<1x64x64xf32, #tpu.memory_space<vmem>>, vector<1x64x64xf32>
    %c0_2 = arith.constant 0 : index
    %c0_3 = arith.constant 0 : index
    %1 = vector.load %arg2[%c0_2, %c0_3] : memref<64x192xf32, #tpu.memory_space<vmem>>, vector<64x192xf32>
    %c0_4 = arith.constant 0 : index
    %c0_5 = arith.constant 0 : index
    %2 = vector.load %arg3[%c0_4, %c0_5] : memref<64x64xf32, #tpu.memory_space<vmem>>, vector<64x64xf32>
    %c0_6 = arith.constant 0 : index
    %c0_7 = arith.constant 0 : index
    %c0_8 = arith.constant 0 : index
    %3 = vector.load %arg4[%c0_6, %c0_7, %c0_8] : memref<4x64x64xf32, #tpu.memory_space<vmem>>, vector<4x64x64xf32>
    %cst = arith.constant dense<0.000000e+00> : vector<1x64x192xf32>
    %4 = tpu.matmul %0, %1, %cst {dimension_numbers = #tpu.dot_dimension_numbers<[2], [0], [0, 1], [1], [0, 0, 0, 1, 1, 1], [], []>} : vector<1x64x64xf32>, vector<64x192xf32>, vector<1x64x192xf32> -> vector<1x64x192xf32>
    %5 = vector.extract_strided_slice %4 {offsets = [0, 0, 0], sizes = [1, 64, 16], strides = [1, 1, 1]} : vector<1x64x192xf32> to vector<1x64x16xf32>
    %6 = vector.extract_strided_slice %4 {offsets = [0, 0, 16], sizes = [1, 64, 16], strides = [1, 1, 1]} : vector<1x64x192xf32> to vector<1x64x16xf32>
    %7 = vector.extract_strided_slice %4 {offsets = [0, 0, 32], sizes = [1, 64, 16], strides = [1, 1, 1]} : vector<1x64x192xf32> to vector<1x64x16xf32>
    %8 = vector.extract_strided_slice %5 {offsets = [0, 0, 0], sizes = [1, 64, 8], strides = [1, 1, 1]} : vector<1x64x16xf32> to vector<1x64x8xf32>
    %9 = vector.extract_strided_slice %5 {offsets = [0, 0, 8], sizes = [1, 64, 8], strides = [1, 1, 1]} : vector<1x64x16xf32> to vector<1x64x8xf32>
    %cst_9 = arith.constant 0.000000e+00 : f32
    %10 = vector.broadcast %cst_9 : f32 to vector<1x64x8xf32>
    %11 = arith.subf %10, %8 : vector<1x64x8xf32>
    %12 = tpu.concatenate %9, %11 in 2 : vector<1x64x8xf32>, vector<1x64x8xf32> -> vector<1x64x16xf32>
    %cst_10 = arith.constant dense<0.000000e+00> : vector<1x64x64xf32>
    %13 = tpu.matmul %5, %6, %cst_10 {dimension_numbers = #tpu.dot_dimension_numbers<[2], [2], [1], [1], [0, 0, 0, 1, 1, 1], [0], [0]>} : vector<1x64x16xf32>, vector<1x64x16xf32>, vector<1x64x64xf32> -> vector<1x64x64xf32>
    %cst_11 = arith.constant dense<0.000000e+00> : vector<1x64x64xf32>
    %14 = tpu.matmul %12, %6, %cst_11 {dimension_numbers = #tpu.dot_dimension_numbers<[2], [2], [1], [1], [0, 0, 0, 1, 1, 1], [0], [0]>} : vector<1x64x16xf32>, vector<1x64x16xf32>, vector<1x64x64xf32> -> vector<1x64x64xf32>
    %cst_12 = arith.constant 0.353553385 : f32
    %15 = vector.broadcast %cst_12 : f32 to vector<1x64x64xf32>
    %16 = arith.mulf %13, %15 : vector<1x64x64xf32>
    %17 = vector.extract_strided_slice %3 {offsets = [0, 0, 0], sizes = [1, 64, 64], strides = [1, 1, 1]} : vector<4x64x64xf32> to vector<1x64x64xf32>
    %18 = vector.shape_cast %17 : vector<1x64x64xf32> to vector<64x64xf32>
    %19 = vector.shape_cast %18 : vector<64x64xf32> to vector<1x64x64xf32>
    %20 = arith.addf %16, %19 : vector<1x64x64xf32>
    %cst_13 = arith.constant 0.353553385 : f32
    %21 = vector.broadcast %cst_13 : f32 to vector<1x64x64xf32>
    %22 = arith.mulf %14, %21 : vector<1x64x64xf32>
    %23 = arith.mulf %20, %20 : vector<1x64x64xf32>
    %24 = arith.mulf %22, %22 : vector<1x64x64xf32>
    %25 = arith.addf %23, %24 : vector<1x64x64xf32>
    %26 = math.sqrt %25 : vector<1x64x64xf32>
    %cst_14 = arith.constant dense<0xFF800000> : vector<1x64xf32>
    %27 = vector.multi_reduction <maximumf>, %26, %cst_14 [2] : vector<1x64x64xf32> to vector<1x64xf32>
    %28 = vector.shape_cast %27 : vector<1x64xf32> to vector<1x64x1xf32>
    %29 = vector.broadcast %28 : vector<1x64x1xf32> to vector<1x64x64xf32>
    %30 = arith.subf %26, %29 : vector<1x64x64xf32>
    %31 = math.exp %30 : vector<1x64x64xf32>
    %cst_15 = arith.constant dense<0.000000e+00> : vector<1x64xf32>
    %32 = vector.multi_reduction <add>, %31, %cst_15 [2] : vector<1x64x64xf32> to vector<1x64xf32>
    %33 = vector.shape_cast %32 : vector<1x64xf32> to vector<1x64x1xf32>
    %34 = tpu.reciprocal %33 : vector<1x64x1xf32> -> vector<1x64x1xf32>
    %35 = vector.broadcast %34 : vector<1x64x1xf32> to vector<1x64x64xf32>
    %36 = arith.mulf %31, %35 : vector<1x64x64xf32>
    %cst_16 = arith.constant 9.99999993E-9 : f32
    %37 = vector.broadcast %cst_16 : f32 to vector<1x64x64xf32>
    %38 = arith.addf %26, %37 : vector<1x64x64xf32>
    %39 = tpu.reciprocal %38 : vector<1x64x64xf32> -> vector<1x64x64xf32>
    %40 = arith.mulf %36, %39 : vector<1x64x64xf32>
    %41 = arith.mulf %20, %40 : vector<1x64x64xf32>
    %42 = arith.mulf %22, %40 : vector<1x64x64xf32>
    %43 = vector.extract_strided_slice %7 {offsets = [0, 0, 0], sizes = [1, 64, 8], strides = [1, 1, 1]} : vector<1x64x16xf32> to vector<1x64x8xf32>
    %44 = vector.extract_strided_slice %7 {offsets = [0, 0, 8], sizes = [1, 64, 8], strides = [1, 1, 1]} : vector<1x64x16xf32> to vector<1x64x8xf32>
    %cst_17 = arith.constant 0.000000e+00 : f32
    %45 = vector.broadcast %cst_17 : f32 to vector<1x64x8xf32>
    %46 = arith.subf %45, %44 : vector<1x64x8xf32>
    %47 = tpu.concatenate %46, %43 in 2 : vector<1x64x8xf32>, vector<1x64x8xf32> -> vector<1x64x16xf32>
    %48 = tpu.concatenate %7, %47 in 1 : vector<1x64x16xf32>, vector<1x64x16xf32> -> vector<1x128x16xf32>
    %49 = tpu.concatenate %41, %42 in 2 : vector<1x64x64xf32>, vector<1x64x64xf32> -> vector<1x64x128xf32>
    %cst_18 = arith.constant dense<0.000000e+00> : vector<1x64x16xf32>
    %50 = tpu.matmul %49, %48, %cst_18 {dimension_numbers = #tpu.dot_dimension_numbers<[2], [1], [1], [2], [0, 0, 0, 1, 1, 2], [0], [0]>} : vector<1x64x128xf32>, vector<1x128x16xf32>, vector<1x64x16xf32> -> vector<1x64x16xf32>
    %51 = vector.extract_strided_slice %4 {offsets = [0, 0, 48], sizes = [1, 64, 16], strides = [1, 1, 1]} : vector<1x64x192xf32> to vector<1x64x16xf32>
    %52 = vector.extract_strided_slice %4 {offsets = [0, 0, 64], sizes = [1, 64, 16], strides = [1, 1, 1]} : vector<1x64x192xf32> to vector<1x64x16xf32>
    %53 = vector.extract_strided_slice %4 {offsets = [0, 0, 80], sizes = [1, 64, 16], strides = [1, 1, 1]} : vector<1x64x192xf32> to vector<1x64x16xf32>
    %54 = vector.extract_strided_slice %51 {offsets = [0, 0, 0], sizes = [1, 64, 8], strides = [1, 1, 1]} : vector<1x64x16xf32> to vector<1x64x8xf32>
    %55 = vector.extract_strided_slice %51 {offsets = [0, 0, 8], sizes = [1, 64, 8], strides = [1, 1, 1]} : vector<1x64x16xf32> to vector<1x64x8xf32>
    %cst_19 = arith.constant 0.000000e+00 : f32
    %56 = vector.broadcast %cst_19 : f32 to vector<1x64x8xf32>
    %57 = arith.subf %56, %54 : vector<1x64x8xf32>
    %58 = tpu.concatenate %55, %57 in 2 : vector<1x64x8xf32>, vector<1x64x8xf32> -> vector<1x64x16xf32>
    %cst_20 = arith.constant dense<0.000000e+00> : vector<1x64x64xf32>
    %59 = tpu.matmul %51, %52, %cst_20 {dimension_numbers = #tpu.dot_dimension_numbers<[2], [2], [1], [1], [0, 0, 0, 1, 1, 1], [0], [0]>} : vector<1x64x16xf32>, vector<1x64x16xf32>, vector<1x64x64xf32> -> vector<1x64x64xf32>
    %cst_21 = arith.constant dense<0.000000e+00> : vector<1x64x64xf32>
    %60 = tpu.matmul %58, %52, %cst_21 {dimension_numbers = #tpu.dot_dimension_numbers<[2], [2], [1], [1], [0, 0, 0, 1, 1, 1], [0], [0]>} : vector<1x64x16xf32>, vector<1x64x16xf32>, vector<1x64x64xf32> -> vector<1x64x64xf32>
    %cst_22 = arith.constant 0.353553385 : f32
    %61 = vector.broadcast %cst_22 : f32 to vector<1x64x64xf32>
    %62 = arith.mulf %59, %61 : vector<1x64x64xf32>
    %63 = vector.extract_strided_slice %3 {offsets = [1, 0, 0], sizes = [1, 64, 64], strides = [1, 1, 1]} : vector<4x64x64xf32> to vector<1x64x64xf32>
    %64 = vector.shape_cast %63 : vector<1x64x64xf32> to vector<64x64xf32>
    %65 = vector.shape_cast %64 : vector<64x64xf32> to vector<1x64x64xf32>
    %66 = arith.addf %62, %65 : vector<1x64x64xf32>
    %cst_23 = arith.constant 0.353553385 : f32
    %67 = vector.broadcast %cst_23 : f32 to vector<1x64x64xf32>
    %68 = arith.mulf %60, %67 : vector<1x64x64xf32>
    %69 = arith.mulf %66, %66 : vector<1x64x64xf32>
    %70 = arith.mulf %68, %68 : vector<1x64x64xf32>
    %71 = arith.addf %69, %70 : vector<1x64x64xf32>
    %72 = math.sqrt %71 : vector<1x64x64xf32>
    %cst_24 = arith.constant dense<0xFF800000> : vector<1x64xf32>
    %73 = vector.multi_reduction <maximumf>, %72, %cst_24 [2] : vector<1x64x64xf32> to vector<1x64xf32>
    %74 = vector.shape_cast %73 : vector<1x64xf32> to vector<1x64x1xf32>
    %75 = vector.broadcast %74 : vector<1x64x1xf32> to vector<1x64x64xf32>
    %76 = arith.subf %72, %75 : vector<1x64x64xf32>
    %77 = math.exp %76 : vector<1x64x64xf32>
    %cst_25 = arith.constant dense<0.000000e+00> : vector<1x64xf32>
    %78 = vector.multi_reduction <add>, %77, %cst_25 [2] : vector<1x64x64xf32> to vector<1x64xf32>
    %79 = vector.shape_cast %78 : vector<1x64xf32> to vector<1x64x1xf32>
    %80 = tpu.reciprocal %79 : vector<1x64x1xf32> -> vector<1x64x1xf32>
    %81 = vector.broadcast %80 : vector<1x64x1xf32> to vector<1x64x64xf32>
    %82 = arith.mulf %77, %81 : vector<1x64x64xf32>
    %cst_26 = arith.constant 9.99999993E-9 : f32
    %83 = vector.broadcast %cst_26 : f32 to vector<1x64x64xf32>
    %84 = arith.addf %72, %83 : vector<1x64x64xf32>
    %85 = tpu.reciprocal %84 : vector<1x64x64xf32> -> vector<1x64x64xf32>
    %86 = arith.mulf %82, %85 : vector<1x64x64xf32>
    %87 = arith.mulf %66, %86 : vector<1x64x64xf32>
    %88 = arith.mulf %68, %86 : vector<1x64x64xf32>
    %89 = vector.extract_strided_slice %53 {offsets = [0, 0, 0], sizes = [1, 64, 8], strides = [1, 1, 1]} : vector<1x64x16xf32> to vector<1x64x8xf32>
    %90 = vector.extract_strided_slice %53 {offsets = [0, 0, 8], sizes = [1, 64, 8], strides = [1, 1, 1]} : vector<1x64x16xf32> to vector<1x64x8xf32>
    %cst_27 = arith.constant 0.000000e+00 : f32
    %91 = vector.broadcast %cst_27 : f32 to vector<1x64x8xf32>
    %92 = arith.subf %91, %90 : vector<1x64x8xf32>
    %93 = tpu.concatenate %92, %89 in 2 : vector<1x64x8xf32>, vector<1x64x8xf32> -> vector<1x64x16xf32>
    %94 = tpu.concatenate %53, %93 in 1 : vector<1x64x16xf32>, vector<1x64x16xf32> -> vector<1x128x16xf32>
    %95 = tpu.concatenate %87, %88 in 2 : vector<1x64x64xf32>, vector<1x64x64xf32> -> vector<1x64x128xf32>
    %cst_28 = arith.constant dense<0.000000e+00> : vector<1x64x16xf32>
    %96 = tpu.matmul %95, %94, %cst_28 {dimension_numbers = #tpu.dot_dimension_numbers<[2], [1], [1], [2], [0, 0, 0, 1, 1, 2], [0], [0]>} : vector<1x64x128xf32>, vector<1x128x16xf32>, vector<1x64x16xf32> -> vector<1x64x16xf32>
    %97 = vector.extract_strided_slice %4 {offsets = [0, 0, 96], sizes = [1, 64, 16], strides = [1, 1, 1]} : vector<1x64x192xf32> to vector<1x64x16xf32>
    %98 = vector.extract_strided_slice %4 {offsets = [0, 0, 112], sizes = [1, 64, 16], strides = [1, 1, 1]} : vector<1x64x192xf32> to vector<1x64x16xf32>
    %99 = vector.extract_strided_slice %4 {offsets = [0, 0, 128], sizes = [1, 64, 16], strides = [1, 1, 1]} : vector<1x64x192xf32> to vector<1x64x16xf32>
    %100 = vector.extract_strided_slice %97 {offsets = [0, 0, 0], sizes = [1, 64, 8], strides = [1, 1, 1]} : vector<1x64x16xf32> to vector<1x64x8xf32>
    %101 = vector.extract_strided_slice %97 {offsets = [0, 0, 8], sizes = [1, 64, 8], strides = [1, 1, 1]} : vector<1x64x16xf32> to vector<1x64x8xf32>
    %cst_29 = arith.constant 0.000000e+00 : f32
    %102 = vector.broadcast %cst_29 : f32 to vector<1x64x8xf32>
    %103 = arith.subf %102, %100 : vector<1x64x8xf32>
    %104 = tpu.concatenate %101, %103 in 2 : vector<1x64x8xf32>, vector<1x64x8xf32> -> vector<1x64x16xf32>
    %cst_30 = arith.constant dense<0.000000e+00> : vector<1x64x64xf32>
    %105 = tpu.matmul %97, %98, %cst_30 {dimension_numbers = #tpu.dot_dimension_numbers<[2], [2], [1], [1], [0, 0, 0, 1, 1, 1], [0], [0]>} : vector<1x64x16xf32>, vector<1x64x16xf32>, vector<1x64x64xf32> -> vector<1x64x64xf32>
    %cst_31 = arith.constant dense<0.000000e+00> : vector<1x64x64xf32>
    %106 = tpu.matmul %104, %98, %cst_31 {dimension_numbers = #tpu.dot_dimension_numbers<[2], [2], [1], [1], [0, 0, 0, 1, 1, 1], [0], [0]>} : vector<1x64x16xf32>, vector<1x64x16xf32>, vector<1x64x64xf32> -> vector<1x64x64xf32>
    %cst_32 = arith.constant 0.353553385 : f32
    %107 = vector.broadcast %cst_32 : f32 to vector<1x64x64xf32>
    %108 = arith.mulf %105, %107 : vector<1x64x64xf32>
    %109 = vector.extract_strided_slice %3 {offsets = [2, 0, 0], sizes = [1, 64, 64], strides = [1, 1, 1]} : vector<4x64x64xf32> to vector<1x64x64xf32>
    %110 = vector.shape_cast %109 : vector<1x64x64xf32> to vector<64x64xf32>
    %111 = vector.shape_cast %110 : vector<64x64xf32> to vector<1x64x64xf32>
    %112 = arith.addf %108, %111 : vector<1x64x64xf32>
    %cst_33 = arith.constant 0.353553385 : f32
    %113 = vector.broadcast %cst_33 : f32 to vector<1x64x64xf32>
    %114 = arith.mulf %106, %113 : vector<1x64x64xf32>
    %115 = arith.mulf %112, %112 : vector<1x64x64xf32>
    %116 = arith.mulf %114, %114 : vector<1x64x64xf32>
    %117 = arith.addf %115, %116 : vector<1x64x64xf32>
    %118 = math.sqrt %117 : vector<1x64x64xf32>
    %cst_34 = arith.constant dense<0xFF800000> : vector<1x64xf32>
    %119 = vector.multi_reduction <maximumf>, %118, %cst_34 [2] : vector<1x64x64xf32> to vector<1x64xf32>
    %120 = vector.shape_cast %119 : vector<1x64xf32> to vector<1x64x1xf32>
    %121 = vector.broadcast %120 : vector<1x64x1xf32> to vector<1x64x64xf32>
    %122 = arith.subf %118, %121 : vector<1x64x64xf32>
    %123 = math.exp %122 : vector<1x64x64xf32>
    %cst_35 = arith.constant dense<0.000000e+00> : vector<1x64xf32>
    %124 = vector.multi_reduction <add>, %123, %cst_35 [2] : vector<1x64x64xf32> to vector<1x64xf32>
    %125 = vector.shape_cast %124 : vector<1x64xf32> to vector<1x64x1xf32>
    %126 = tpu.reciprocal %125 : vector<1x64x1xf32> -> vector<1x64x1xf32>
    %127 = vector.broadcast %126 : vector<1x64x1xf32> to vector<1x64x64xf32>
    %128 = arith.mulf %123, %127 : vector<1x64x64xf32>
    %cst_36 = arith.constant 9.99999993E-9 : f32
    %129 = vector.broadcast %cst_36 : f32 to vector<1x64x64xf32>
    %130 = arith.addf %118, %129 : vector<1x64x64xf32>
    %131 = tpu.reciprocal %130 : vector<1x64x64xf32> -> vector<1x64x64xf32>
    %132 = arith.mulf %128, %131 : vector<1x64x64xf32>
    %133 = arith.mulf %112, %132 : vector<1x64x64xf32>
    %134 = arith.mulf %114, %132 : vector<1x64x64xf32>
    %135 = vector.extract_strided_slice %99 {offsets = [0, 0, 0], sizes = [1, 64, 8], strides = [1, 1, 1]} : vector<1x64x16xf32> to vector<1x64x8xf32>
    %136 = vector.extract_strided_slice %99 {offsets = [0, 0, 8], sizes = [1, 64, 8], strides = [1, 1, 1]} : vector<1x64x16xf32> to vector<1x64x8xf32>
    %cst_37 = arith.constant 0.000000e+00 : f32
    %137 = vector.broadcast %cst_37 : f32 to vector<1x64x8xf32>
    %138 = arith.subf %137, %136 : vector<1x64x8xf32>
    %139 = tpu.concatenate %138, %135 in 2 : vector<1x64x8xf32>, vector<1x64x8xf32> -> vector<1x64x16xf32>
    %140 = tpu.concatenate %99, %139 in 1 : vector<1x64x16xf32>, vector<1x64x16xf32> -> vector<1x128x16xf32>
    %141 = tpu.concatenate %133, %134 in 2 : vector<1x64x64xf32>, vector<1x64x64xf32> -> vector<1x64x128xf32>
    %cst_38 = arith.constant dense<0.000000e+00> : vector<1x64x16xf32>
    %142 = tpu.matmul %141, %140, %cst_38 {dimension_numbers = #tpu.dot_dimension_numbers<[2], [1], [1], [2], [0, 0, 0, 1, 1, 2], [0], [0]>} : vector<1x64x128xf32>, vector<1x128x16xf32>, vector<1x64x16xf32> -> vector<1x64x16xf32>
    %143 = vector.extract_strided_slice %4 {offsets = [0, 0, 144], sizes = [1, 64, 16], strides = [1, 1, 1]} : vector<1x64x192xf32> to vector<1x64x16xf32>
    %144 = vector.extract_strided_slice %4 {offsets = [0, 0, 160], sizes = [1, 64, 16], strides = [1, 1, 1]} : vector<1x64x192xf32> to vector<1x64x16xf32>
    %145 = vector.extract_strided_slice %4 {offsets = [0, 0, 176], sizes = [1, 64, 16], strides = [1, 1, 1]} : vector<1x64x192xf32> to vector<1x64x16xf32>
    %146 = vector.extract_strided_slice %143 {offsets = [0, 0, 0], sizes = [1, 64, 8], strides = [1, 1, 1]} : vector<1x64x16xf32> to vector<1x64x8xf32>
    %147 = vector.extract_strided_slice %143 {offsets = [0, 0, 8], sizes = [1, 64, 8], strides = [1, 1, 1]} : vector<1x64x16xf32> to vector<1x64x8xf32>
    %cst_39 = arith.constant 0.000000e+00 : f32
    %148 = vector.broadcast %cst_39 : f32 to vector<1x64x8xf32>
    %149 = arith.subf %148, %146 : vector<1x64x8xf32>
    %150 = tpu.concatenate %147, %149 in 2 : vector<1x64x8xf32>, vector<1x64x8xf32> -> vector<1x64x16xf32>
    %cst_40 = arith.constant dense<0.000000e+00> : vector<1x64x64xf32>
    %151 = tpu.matmul %143, %144, %cst_40 {dimension_numbers = #tpu.dot_dimension_numbers<[2], [2], [1], [1], [0, 0, 0, 1, 1, 1], [0], [0]>} : vector<1x64x16xf32>, vector<1x64x16xf32>, vector<1x64x64xf32> -> vector<1x64x64xf32>
    %cst_41 = arith.constant dense<0.000000e+00> : vector<1x64x64xf32>
    %152 = tpu.matmul %150, %144, %cst_41 {dimension_numbers = #tpu.dot_dimension_numbers<[2], [2], [1], [1], [0, 0, 0, 1, 1, 1], [0], [0]>} : vector<1x64x16xf32>, vector<1x64x16xf32>, vector<1x64x64xf32> -> vector<1x64x64xf32>
    %cst_42 = arith.constant 0.353553385 : f32
    %153 = vector.broadcast %cst_42 : f32 to vector<1x64x64xf32>
    %154 = arith.mulf %151, %153 : vector<1x64x64xf32>
    %155 = vector.extract_strided_slice %3 {offsets = [3, 0, 0], sizes = [1, 64, 64], strides = [1, 1, 1]} : vector<4x64x64xf32> to vector<1x64x64xf32>
    %156 = vector.shape_cast %155 : vector<1x64x64xf32> to vector<64x64xf32>
    %157 = vector.shape_cast %156 : vector<64x64xf32> to vector<1x64x64xf32>
    %158 = arith.addf %154, %157 : vector<1x64x64xf32>
    %cst_43 = arith.constant 0.353553385 : f32
    %159 = vector.broadcast %cst_43 : f32 to vector<1x64x64xf32>
    %160 = arith.mulf %152, %159 : vector<1x64x64xf32>
    %161 = arith.mulf %158, %158 : vector<1x64x64xf32>
    %162 = arith.mulf %160, %160 : vector<1x64x64xf32>
    %163 = arith.addf %161, %162 : vector<1x64x64xf32>
    %164 = math.sqrt %163 : vector<1x64x64xf32>
    %cst_44 = arith.constant dense<0xFF800000> : vector<1x64xf32>
    %165 = vector.multi_reduction <maximumf>, %164, %cst_44 [2] : vector<1x64x64xf32> to vector<1x64xf32>
    %166 = vector.shape_cast %165 : vector<1x64xf32> to vector<1x64x1xf32>
    %167 = vector.broadcast %166 : vector<1x64x1xf32> to vector<1x64x64xf32>
    %168 = arith.subf %164, %167 : vector<1x64x64xf32>
    %169 = math.exp %168 : vector<1x64x64xf32>
    %cst_45 = arith.constant dense<0.000000e+00> : vector<1x64xf32>
    %170 = vector.multi_reduction <add>, %169, %cst_45 [2] : vector<1x64x64xf32> to vector<1x64xf32>
    %171 = vector.shape_cast %170 : vector<1x64xf32> to vector<1x64x1xf32>
    %172 = tpu.reciprocal %171 : vector<1x64x1xf32> -> vector<1x64x1xf32>
    %173 = vector.broadcast %172 : vector<1x64x1xf32> to vector<1x64x64xf32>
    %174 = arith.mulf %169, %173 : vector<1x64x64xf32>
    %cst_46 = arith.constant 9.99999993E-9 : f32
    %175 = vector.broadcast %cst_46 : f32 to vector<1x64x64xf32>
    %176 = arith.addf %164, %175 : vector<1x64x64xf32>
    %177 = tpu.reciprocal %176 : vector<1x64x64xf32> -> vector<1x64x64xf32>
    %178 = arith.mulf %174, %177 : vector<1x64x64xf32>
    %179 = arith.mulf %158, %178 : vector<1x64x64xf32>
    %180 = arith.mulf %160, %178 : vector<1x64x64xf32>
    %181 = vector.extract_strided_slice %145 {offsets = [0, 0, 0], sizes = [1, 64, 8], strides = [1, 1, 1]} : vector<1x64x16xf32> to vector<1x64x8xf32>
    %182 = vector.extract_strided_slice %145 {offsets = [0, 0, 8], sizes = [1, 64, 8], strides = [1, 1, 1]} : vector<1x64x16xf32> to vector<1x64x8xf32>
    %cst_47 = arith.constant 0.000000e+00 : f32
    %183 = vector.broadcast %cst_47 : f32 to vector<1x64x8xf32>
    %184 = arith.subf %183, %182 : vector<1x64x8xf32>
    %185 = tpu.concatenate %184, %181 in 2 : vector<1x64x8xf32>, vector<1x64x8xf32> -> vector<1x64x16xf32>
    %186 = tpu.concatenate %145, %185 in 1 : vector<1x64x16xf32>, vector<1x64x16xf32> -> vector<1x128x16xf32>
    %187 = tpu.concatenate %179, %180 in 2 : vector<1x64x64xf32>, vector<1x64x64xf32> -> vector<1x64x128xf32>
    %cst_48 = arith.constant dense<0.000000e+00> : vector<1x64x16xf32>
    %188 = tpu.matmul %187, %186, %cst_48 {dimension_numbers = #tpu.dot_dimension_numbers<[2], [1], [1], [2], [0, 0, 0, 1, 1, 2], [0], [0]>} : vector<1x64x128xf32>, vector<1x128x16xf32>, vector<1x64x16xf32> -> vector<1x64x16xf32>
    %189 = tpu.concatenate %50, %96, %142, %188 in 2 : vector<1x64x16xf32>, vector<1x64x16xf32>, vector<1x64x16xf32>, vector<1x64x16xf32> -> vector<1x64x64xf32>
    %cst_49 = arith.constant dense<0.000000e+00> : vector<1x64x64xf32>
    %190 = tpu.matmul %189, %2, %cst_49 {dimension_numbers = #tpu.dot_dimension_numbers<[2], [0], [0, 1], [1], [0, 0, 0, 1, 1, 1], [], []>} : vector<1x64x64xf32>, vector<64x64xf32>, vector<1x64x64xf32> -> vector<1x64x64xf32>
    %c0_50 = arith.constant 0 : index
    %c0_51 = arith.constant 0 : index
    %c0_52 = arith.constant 0 : index
    %191 = vector.load %arg5[%c0_50, %c0_51, %c0_52] : memref<1x64x64xf32, #tpu.memory_space<vmem>>, vector<1x64x64xf32>
    tpu.vector_store %arg5[%c0_50, %c0_51, %c0_52], %190 {strides = array<i32>} : memref<1x64x64xf32, #tpu.memory_space<vmem>>, vector<1x64x64xf32>,
    return
  }
  func.func @transform_0(%arg0: i32) -> (i32, i32, i32) {
    %c0_i32 = arith.constant 0 : i32
    %c0_i32_0 = arith.constant 0 : i32
    %c0_i32_1 = arith.constant 0 : i32
    return %arg0, %c0_i32, %c0_i32_0 : i32, i32, i32
  }
  func.func @transform_1(%arg0: i32) -> (i32, i32) {
    %c0_i32 = arith.constant 0 : i32
    %c0_i32_0 = arith.constant 0 : i32
    %c0_i32_1 = arith.constant 0 : i32
    return %c0_i32, %c0_i32_0 : i32, i32
  }
  func.func @transform_2(%arg0: i32) -> (i32, i32) {
    %c0_i32 = arith.constant 0 : i32
    %c0_i32_0 = arith.constant 0 : i32
    %c0_i32_1 = arith.constant 0 : i32
    return %c0_i32, %c0_i32_0 : i32, i32
  }
  func.func @transform_3(%arg0: i32) -> (i32, i32, i32) {
    %c0_i32 = arith.constant 0 : i32
    %c0_i32_0 = arith.constant 0 : i32
    %c0_i32_1 = arith.constant 0 : i32
    %c0_i32_2 = arith.constant 0 : i32
    return %c0_i32, %c0_i32_0, %c0_i32_1 : i32, i32, i32
  }
  func.func @transform_4(%arg0: i32) -> (i32, i32, i32) {
    %c0_i32 = arith.constant 0 : i32
    %c0_i32_0 = arith.constant 0 : i32
    %c0_i32_1 = arith.constant 0 : i32
    return %arg0, %c0_i32, %c0_i32_0 : i32, i32, i32
  }
}

</mosaic_0001>

<llo_original>
// kernel: tpu_custom_call.1
$region0: #{tpu_custom_call.1}
  #allocation0 [shape = 'u32[]', space=smem, size = 0x4, offset = 0x4, fixed_abs, tag = 'smem constant byte address 0x4 - core index']
  #allocation1 [shape = 'u32[72,128]{1,0:T(1,128)}', space=vmem, size = 0x9000, scoped, tag = 'internal scratch']
  %s0 = inlined_call_operand.hbm [shape: f32[2,64,64], index: 0, kind: input, shape index: {}]
  %s1 = inlined_call_operand.hbm [shape: f32[64,192], index: 1, kind: input, shape index: {}]
  %s2 = inlined_call_operand.hbm [shape: f32[64,64], index: 2, kind: input, shape index: {}]
  %s3 = inlined_call_operand.hbm [shape: f32[4,64,64], index: 3, kind: input, shape index: {}]
  %s4 = inlined_call_operand.hbm [shape: f32[2,64,64], index: 4, kind: output, shape index: {}]
  %s5 = sld [smem:[#allocation0]]
  $region65: #{tpu_custom_call.1} parent=0
    _
  %s7 = ssub.s32 1, %s5
  %s8 = scalar_select 0, %s7, %s5
  $region1: #{tpu_custom_call.1} parent=0
    #allocation2 [shape = 'u8[65536]{0}', space=vmem, size = 0x10000, scoped, tag = 'input window, operand 0']
    #allocation3 [shape = 's32[2]{0}', space=sflag, size = 0x8, scoped, tag = 'scoped memory for tpu_custom_call.1']
    #allocation4 [shape = 's32[2]{0}', space=sflag, size = 0x8, scoped, tag = 'scoped memory for tpu_custom_call.1']
    #allocation5 [shape = 'u8[65536]{0}', space=vmem, size = 0x10000, scoped, tag = 'input window, operand 1, single buffered']
    #allocation6 [shape = 's32[1]{0}', space=sflag, size = 0x4, scoped, tag = 'scoped memory for tpu_custom_call.1']
    #allocation7 [shape = 'u8[32768]{0}', space=vmem, size = 0x8000, scoped, tag = 'input window, operand 2, single buffered']
    #allocation8 [shape = 'u8[131072]{0}', space=vmem, size = 0x20000, scoped, tag = 'input window, operand 3, single buffered']
    #allocation9 [shape = 's32[1]{0}', space=sflag, size = 0x4, scoped, tag = 'scoped memory for tpu_custom_call.1']
    #allocation10 [shape = 'u8[65536]{0}', space=vmem, size = 0x10000, scoped, tag = 'output window, operand 0']
    %9 = vsyncpa [#allocation3], 0
    %s10 = scalar_lea.sflag [#allocation3], 1
    %11 = vsyncpa %s10, 0
    %12 = vsyncpa [#allocation6], 0
    %13 = vsyncpa [#allocation9], 0
    %14 = vsyncpa [#allocation4], 0
    %s15 = scalar_lea.sflag [#allocation4], 1
    %16 = vsyncpa %s15, 0
    loop: start=0, step=1, limit=4
    $region2: #{tpu_custom_call.1} parent=1 // loop_pre_header
      _
    $region3: #{tpu_custom_call.1} parent=1 // loop_header
      %s18 = sphi 0, %s22
      %p19 = scmp.ge.s32.totalorder %s18, 4
      %s28 = sphi 0, %s30
      %s31 = sphi 0, %s28
      %s32 = sphi 0, %s31
      %s48 = sphi 0, %s32
      %s52 = sphi 0, %s52
      %s54 = sphi 0, %s52
      %s55 = sphi 0, %s54
      %s69 = sphi 0, %s55
      %s73 = sphi 0, %s73
      %s75 = sphi 0, %s73
      %s76 = sphi 0, %s75
      %s90 = sphi 0, %s76
      %s94 = sphi 0, %s94
      %s96 = sphi 0, %s94
      %s97 = sphi 0, %s96
      %s111 = sphi 0, %s97
      %s117 = sphi 0, %s119
      %s120 = sphi 0, %s117
      %s121 = sphi 0, %s120
      %s137 = sphi 0, %s121
    $region4: #{tpu_custom_call.1} parent=1 // loop_header_branch
      %21 = sbr.rel (%p19) target = $region8
    $region5: #{tpu_custom_call.1} parent=1 // loop_body
      %s23 = ssub.s32 %s18, 1
      %s24 = ssub.s32 %s18, 2
      %s25 = sadd.s32 %s18, 1
      %s26 = ssub.s32 %s18, %s25
      %p27 = scmp.eq.s32.totalorder %s26, 0
      %s29 = sadd.s32 %s28, 1
      %s30 = scalar_select %p27, %s28, %s29
      %p33 = pneg %p27
      %p34 = scmp.eq.s32.totalorder %s18, 1
      %p35 = por %p33, %p34
      %p36 = scmp.ne.s32.totalorder %s28, %s31
      %p37 = scmp.eq.s32.totalorder %s18, 0
      %p38 = por %p36, %p37
      %p39 = scmp.ne.s32.totalorder %s28, %s31
      %p40 = scmp.eq.s32.totalorder %s23, 1
      %p41 = por %p39, %p40
      %p42 = scmp.ne.s32.totalorder %s31, %s32
      %p43 = scmp.eq.s32.totalorder %s23, 0
      %p44 = por %p42, %p43
      %p45 = scmp.ne.s32.totalorder %s31, %s32
      %p46 = scmp.eq.s32.totalorder %s24, 1
      %p47 = por %p45, %p46
      %p49 = scmp.ne.s32.totalorder %s32, %s48
      %p50 = scmp.eq.s32.totalorder %s24, 0
      %p51 = por %p49, %p50
      %s53 = sadd.s32 %s52, 1
      %p56 = scmp.eq.s32.totalorder %s18, 1
      %p57 = scmp.ne.s32.totalorder %s52, %s54
      %p58 = scmp.eq.s32.totalorder %s18, 0
      %p59 = por %p57, %p58
      %p60 = scmp.ne.s32.totalorder %s52, %s54
      %p61 = scmp.eq.s32.totalorder %s23, 1
      %p62 = por %p60, %p61
      %p63 = scmp.ne.s32.totalorder %s54, %s55
      %p64 = scmp.eq.s32.totalorder %s23, 0
      %p65 = por %p63, %p64
      %p66 = scmp.ne.s32.totalorder %s54, %s55
      %p67 = scmp.eq.s32.totalorder %s24, 1
      %p68 = por %p66, %p67
      %p70 = scmp.ne.s32.totalorder %s55, %s69
      %p71 = scmp.eq.s32.totalorder %s24, 0
      %p72 = por %p70, %p71
      %s74 = sadd.s32 %s73, 1
      %p77 = scmp.eq.s32.totalorder %s18, 1
      %p78 = scmp.ne.s32.totalorder %s73, %s75
      %p79 = scmp.eq.s32.totalorder %s18, 0
      %p80 = por %p78, %p79
      %p81 = scmp.ne.s32.totalorder %s73, %s75
      %p82 = scmp.eq.s32.totalorder %s23, 1
      %p83 = por %p81, %p82
      %p84 = scmp.ne.s32.totalorder %s75, %s76
      %p85 = scmp.eq.s32.totalorder %s23, 0
      %p86 = por %p84, %p85
      %p87 = scmp.ne.s32.totalorder %s75, %s76
      %p88 = scmp.eq.s32.totalorder %s24, 1
      %p89 = por %p87, %p88
      %p91 = scmp.ne.s32.totalorder %s76, %s90
      %p92 = scmp.eq.s32.totalorder %s24, 0
      %p93 = por %p91, %p92
      %s95 = sadd.s32 %s94, 1
      %p98 = scmp.eq.s32.totalorder %s18, 1
      %p99 = scmp.ne.s32.totalorder %s94, %s96
      %p100 = scmp.eq.s32.totalorder %s18, 0
      %p101 = por %p99, %p100
      %p102 = scmp.ne.s32.totalorder %s94, %s96
      %p103 = scmp.eq.s32.totalorder %s23, 1
      %p104 = por %p102, %p103
      %p105 = scmp.ne.s32.totalorder %s96, %s97
      %p106 = scmp.eq.s32.totalorder %s23, 0
      %p107 = por %p105, %p106
      %p108 = scmp.ne.s32.totalorder %s96, %s97
      %p109 = scmp.eq.s32.totalorder %s24, 1
      %p110 = por %p108, %p109
      %p112 = scmp.ne.s32.totalorder %s97, %s111
      %p113 = scmp.eq.s32.totalorder %s24, 0
      %p114 = por %p112, %p113
      %s115 = ssub.s32 %s18, %s25
      %p116 = scmp.eq.s32.totalorder %s115, 0
      %s118 = sadd.s32 %s117, 1
      %s119 = scalar_select %p116, %s117, %s118
      %p122 = pneg %p116
      %p123 = scmp.eq.s32.totalorder %s18, 1
      %p124 = por %p122, %p123
      %p125 = scmp.ne.s32.totalorder %s117, %s120
      %p126 = scmp.eq.s32.totalorder %s18, 0
      %p127 = por %p125, %p126
      %p128 = scmp.ne.s32.totalorder %s117, %s120
      %p129 = scmp.eq.s32.totalorder %s23, 1
      %p130 = por %p128, %p129
      %p131 = scmp.ne.s32.totalorder %s120, %s121
      %p132 = scmp.eq.s32.totalorder %s23, 0
      %p133 = por %p131, %p132
      %p134 = scmp.ne.s32.totalorder %s120, %s121
      %p135 = scmp.eq.s32.totalorder %s24, 1
      %p136 = por %p134, %p135
      %p138 = scmp.ne.s32.totalorder %s121, %s137
      %p139 = scmp.eq.s32.totalorder %s24, 0
      %p140 = por %p138, %p139
      %p141 = scmp.le.s32.totalorder 1, %s18
      %p142 = scmp.lt.s32.totalorder %s18, 3
      %p143 = pnand %p141, %p142
      %p144 = pneg %p143
      // Predicated region
      $region9: #{tpu_custom_call.1} parent=5 // pred_check
        _
      $region10: #{tpu_custom_call.1} parent=5 // pred_check_branch
        %146 = sbr.rel (%p143) target = $region12
      $region11: #{tpu_custom_call.1} parent=5 // pred_region
        %s147 = ssub.s32 %s18, 1
        // Predicated region
        $region13: #{tpu_custom_call.1} parent=11 // pred_check
          %p148 = pneg %p65
        $region14: #{tpu_custom_call.1} parent=11 // pred_check_branch
          %150 = sbr.rel (%p148) target = $region16
        $region15: #{tpu_custom_call.1} parent=11 // pred_region
          %152 = vsyncadd [#allocation6], 0
          %s153 = sshll.u32 %s1, 4
          %s154 = int_to_ptr.hbm [resolvable:$true] %s153
          %s155 = sshll.u32 [#allocation5], 4
          %s156 = int_to_ptr.vmem [resolvable:$true] %s155
          %161 = dma.hbm_to_vmem [thread:$0]  %s154, 2048, %s156, [#allocation6], 256, 256, 16
        $region16: #{tpu_custom_call.1} parent=11 // pred_fallthru
          _
        // Predicated region
        $region17: #{tpu_custom_call.1} parent=11 // pred_check
          %p162 = pneg %p86
        $region18: #{tpu_custom_call.1} parent=11 // pred_check_branch
          %164 = sbr.rel (%p162) target = $region20
        $region19: #{tpu_custom_call.1} parent=11 // pred_region
          %166 = vsyncadd [#allocation6], 0
          %s167 = sshll.u32 %s2, 4
          %s168 = int_to_ptr.hbm [resolvable:$true] %s167
          %s169 = sshll.u32 [#allocation7], 4
          %s170 = int_to_ptr.vmem [resolvable:$true] %s169
          %175 = dma.hbm_to_vmem [thread:$0]  %s168, 1024, %s170, [#allocation6], 128, 128, 8
        $region20: #{tpu_custom_call.1} parent=11 // pred_fallthru
          _
        // Predicated region
        $region21: #{tpu_custom_call.1} parent=11 // pred_check
          %p176 = pneg %p107
        $region22: #{tpu_custom_call.1} parent=11 // pred_check_branch
          %178 = sbr.rel (%p176) target = $region24
        $region23: #{tpu_custom_call.1} parent=11 // pred_region
          %180 = vsyncadd [#allocation9], 0
          %s181 = sshll.u32 %s3, 4
          %s182 = int_to_ptr.hbm [resolvable:$true] %s181
          %s183 = sshll.u32 [#allocation8], 4
          %s184 = int_to_ptr.vmem [resolvable:$true] %s183
          %189 = dma.hbm_to_vmem [thread:$0]  %s182, 4096, %s184, [#allocation9], 128, 128, 8
        $region24: #{tpu_custom_call.1} parent=11 // pred_fallthru
          _
      $region12: #{tpu_custom_call.1} parent=5 // pred_fallthru
        _
      %p190 = scmp.lt.s32.totalorder %s18, 2
      // Predicated region
      $region25: #{tpu_custom_call.1} parent=5 // pred_check
        %p191 = pneg %p190
      $region26: #{tpu_custom_call.1} parent=5 // pred_check_branch
        %193 = sbr.rel (%p191) target = $region28
      $region27: #{tpu_custom_call.1} parent=5 // pred_region
        // Predicated region
        $region29: #{tpu_custom_call.1} parent=27 // pred_check
          %p194 = pneg %p38
        $region30: #{tpu_custom_call.1} parent=27 // pred_check_branch
          %196 = sbr.rel (%p194) target = $region32
        $region31: #{tpu_custom_call.1} parent=27 // pred_region
          %s197 = sand.u32 %s28, 1
          %s198 = scalar_lea.sflag [#allocation3], %s197
          %s199 = sand.u32 %s28, 1
          %s200 = smul.addr %s199, 64
          %s201 = scalar_lea.vmem [#allocation2], %s200
          %203 = vsyncadd %s198, 0
          %s204 = smul.addr %s18, 8
          %s205 = smul.addr %s204, 8
          %s206 = scalar_lea.hbm %s0, %s205
          %s207 = sshll.u32 %s206, 4
          %s208 = int_to_ptr.hbm [resolvable:$true] %s207
          %s209 = sshll.u32 %s201, 4
          %s210 = int_to_ptr.vmem [resolvable:$true] %s209
          %215 = dma.hbm_to_vmem [thread:$0]  %s208, 1024, %s210, %s198, 128, 128, 8
        $region32: #{tpu_custom_call.1} parent=27 // pred_fallthru
          _
      $region28: #{tpu_custom_call.1} parent=5 // pred_fallthru
        _
      %p216 = scmp.le.s32.totalorder 1, %s18
      %p217 = scmp.lt.s32.totalorder %s18, 3
      %p218 = pnand %p216, %p217
      %p219 = pneg %p218
      // Predicated region
      $region33: #{tpu_custom_call.1} parent=5 // pred_check
        _
      $region34: #{tpu_custom_call.1} parent=5 // pred_check_branch
        %221 = sbr.rel (%p218) target = $region36
      $region35: #{tpu_custom_call.1} parent=5 // pred_region
        %s222 = ssub.s32 %s18, 1
        %s223 = sand.u32 %s31, 1
        %s224 = scalar_lea.sflag [#allocation3], %s223
        %s225 = sand.u32 %s31, 1
        %s226 = smul.addr %s225, 64
        %s227 = scalar_lea.vmem [#allocation2], %s226
        // Predicated region
        $region37: #{tpu_custom_call.1} parent=35 // pred_check
          %p228 = pneg %p44
        $region38: #{tpu_custom_call.1} parent=35 // pred_check_branch
          %230 = sbr.rel (%p228) target = $region40
        $region39: #{tpu_custom_call.1} parent=35 // pred_region
          %232 = dma.done %s224, 1024
        $region40: #{tpu_custom_call.1} parent=35 // pred_fallthru
          _
        // Predicated region
        $region41: #{tpu_custom_call.1} parent=35 // pred_check
          %p233 = pneg %p65
        $region42: #{tpu_custom_call.1} parent=35 // pred_check_branch
          %235 = sbr.rel (%p233) target = $region44
        $region43: #{tpu_custom_call.1} parent=35 // pred_region
          %237 = dma.done [#allocation6], 2048
        $region44: #{tpu_custom_call.1} parent=35 // pred_fallthru
          _
        // Predicated region
        $region45: #{tpu_custom_call.1} parent=35 // pred_check
          %p238 = pneg %p86
        $region46: #{tpu_custom_call.1} parent=35 // pred_check_branch
          %240 = sbr.rel (%p238) target = $region48
        $region47: #{tpu_custom_call.1} parent=35 // pred_region
          %242 = dma.done [#allocation6], 1024
        $region48: #{tpu_custom_call.1} parent=35 // pred_fallthru
          _
        // Predicated region
        $region49: #{tpu_custom_call.1} parent=35 // pred_check
          %p243 = pneg %p107
        $region50: #{tpu_custom_call.1} parent=35 // pred_check_branch
          %245 = sbr.rel (%p243) target = $region52
        $region51: #{tpu_custom_call.1} parent=35 // pred_region
          %247 = dma.done [#allocation9], 4096
        $region52: #{tpu_custom_call.1} parent=35 // pred_fallthru
          _
        %s248 = sand.u32 %s31, 1
        %s249 = scalar_lea.sflag [#allocation3], %s248
        %s250 = sand.u32 %s31, 1
        %s251 = smul.addr %s250, 64
        %s252 = scalar_lea.vmem [#allocation2], %s251
        %p253 = pneg %p44
        %p254 = pneg %p41
        %p255 = pneg %p65
        %p256 = pneg %p62
        %p257 = pneg %p86
        %p258 = pneg %p83
        %p259 = pneg %p107
        %p260 = pneg %p104
        %p261 = pneg %p133
        %p262 = pneg %p130
        %s263 = sand.u32 %s120, 1
        %s264 = scalar_lea.sflag [#allocation4], %s263
        %s265 = sand.u32 %s120, 1
        %s266 = smul.addr %s265, 64
        %s267 = scalar_lea.vmem [#allocation10], %s266
        %v268 = vld [vmem:[%s227] sm:$0xff]
        %v269 = vld [vmem:[%s227 + $0x8] sm:$0xff]
        %v270 = vld [vmem:[%s227 + $0x10] sm:$0xff]
        %v271 = vld [vmem:[%s227 + $0x18] sm:$0xff]
        %v272 = vld [vmem:[%s227 + $0x20] sm:$0xff]
        %v273 = vld [vmem:[%s227 + $0x28] sm:$0xff]
        %v274 = vld [vmem:[%s227 + $0x30] sm:$0xff]
        %v275 = vld [vmem:[%s227 + $0x38] sm:$0xff]
        %v276 = vld [vmem:[#allocation5] sm:$0xff]
        %v277 = vld [vmem:[#allocation5 + $0x8] sm:$0xff]
        %v278 = vld [vmem:[#allocation5 + $0x10] sm:$0xff]
        %v279 = vld [vmem:[#allocation5 + $0x18] sm:$0xff]
        %v280 = vld [vmem:[#allocation5 + $0x20] sm:$0xff]
        %v281 = vld [vmem:[#allocation5 + $0x28] sm:$0xff]
        %v282 = vld [vmem:[#allocation5 + $0x30] sm:$0xff]
        %v283 = vld [vmem:[#allocation5 + $0x38] sm:$0xff]
        %v284 = vld [vmem:[#allocation5 + $0x40] sm:$0xff]
        %v285 = vld [vmem:[#allocation5 + $0x48] sm:$0xff]
        %v286 = vld [vmem:[#allocation5 + $0x50] sm:$0xff]
        %v287 = vld [vmem:[#allocation5 + $0x58] sm:$0xff]
        %v288 = vld [vmem:[#allocation5 + $0x60] sm:$0xff]
        %v289 = vld [vmem:[#allocation5 + $0x68] sm:$0xff]
        %v290 = vld [vmem:[#allocation5 + $0x70] sm:$0xff]
        %v291 = vld [vmem:[#allocation5 + $0x78] sm:$0xff]
        %v292 = vld [vmem:[#allocation7] sm:$0xff]
        %v293 = vld [vmem:[#allocation7 + $0x8] sm:$0xff]
        %v294 = vld [vmem:[#allocation7 + $0x10] sm:$0xff]
        %v295 = vld [vmem:[#allocation7 + $0x18] sm:$0xff]
        %v296 = vld [vmem:[#allocation7 + $0x20] sm:$0xff]
        %v297 = vld [vmem:[#allocation7 + $0x28] sm:$0xff]
        %v298 = vld [vmem:[#allocation7 + $0x30] sm:$0xff]
        %v299 = vld [vmem:[#allocation7 + $0x38] sm:$0xff]
        %v300 = vld [vmem:[#allocation8] sm:$0xff]
        %v301 = vld [vmem:[#allocation8 + $0x8] sm:$0xff]
        %v302 = vld [vmem:[#allocation8 + $0x10] sm:$0xff]
        %v303 = vld [vmem:[#allocation8 + $0x18] sm:$0xff]
        %v304 = vld [vmem:[#allocation8 + $0x20] sm:$0xff]
        %v305 = vld [vmem:[#allocation8 + $0x28] sm:$0xff]
        %v306 = vld [vmem:[#allocation8 + $0x30] sm:$0xff]
        %v307 = vld [vmem:[#allocation8 + $0x38] sm:$0xff]
        %v308 = vld [vmem:[#allocation8 + $0x40] sm:$0xff]
        %v309 = vld [vmem:[#allocation8 + $0x48] sm:$0xff]
        %v310 = vld [vmem:[#allocation8 + $0x50] sm:$0xff]
        %v311 = vld [vmem:[#allocation8 + $0x58] sm:$0xff]
        %v312 = vld [vmem:[#allocation8 + $0x60] sm:$0xff]
        %v313 = vld [vmem:[#allocation8 + $0x68] sm:$0xff]
        %v314 = vld [vmem:[#allocation8 + $0x70] sm:$0xff]
        %v315 = vld [vmem:[#allocation8 + $0x78] sm:$0xff]
        %v316 = vld [vmem:[#allocation8 + $0x80] sm:$0xff]
        %v317 = vld [vmem:[#allocation8 + $0x88] sm:$0xff]
        %v318 = vld [vmem:[#allocation8 + $0x90] sm:$0xff]
        %v319 = vld [vmem:[#allocation8 + $0x98] sm:$0xff]
        %v320 = vld [vmem:[#allocation8 + $0xa0] sm:$0xff]
        %v321 = vld [vmem:[#allocation8 + $0xa8] sm:$0xff]
        %v322 = vld [vmem:[#allocation8 + $0xb0] sm:$0xff]
        %v323 = vld [vmem:[#allocation8 + $0xb8] sm:$0xff]
        %v324 = vld [vmem:[#allocation8 + $0xc0] sm:$0xff]
        %v325 = vld [vmem:[#allocation8 + $0xc8] sm:$0xff]
        %v326 = vld [vmem:[#allocation8 + $0xd0] sm:$0xff]
        %v327 = vld [vmem:[#allocation8 + $0xd8] sm:$0xff]
        %v328 = vld [vmem:[#allocation8 + $0xe0] sm:$0xff]
        %v329 = vld [vmem:[#allocation8 + $0xe8] sm:$0xff]
        %v330 = vld [vmem:[#allocation8 + $0xf0] sm:$0xff]
        %v331 = vld [vmem:[#allocation8 + $0xf8] sm:$0xff]
        %vm332 = vcmask 523264
        %v334 = vsel %vm332, %v268, 0
        %v337 = vsel %vm332, %v269, 0
        %v340 = vsel %vm332, %v270, 0
        %v343 = vsel %vm332, %v271, 0
        %v346 = vsel %vm332, %v272, 0
        %v349 = vsel %vm332, %v273, 0
        %v352 = vsel %vm332, %v274, 0
        %v355 = vsel %vm332, %v275, 0
        %357 = vmatpush.msra.mxu0 0.0
        %358 = vmatpush.msra.mxu0 0.0
        %359 = vmatpush.msra.mxu0 0.0
        %360 = vmatpush.msra.mxu0 0.0
        %361 = vmatpush.msra.mxu0 0.0
        %362 = vmatpush.msra.mxu0 0.0
        %363 = vmatpush.msra.mxu0 0.0
        %364 = vmatpush.msra.mxu0 0.0
        %365 = vmatpush.msra.mxu0 %v290
        %366 = vmatpush.msra.mxu0 %v288
        %367 = vmatpush.msra.mxu0 %v286
        %368 = vmatpush.msra.mxu0 %v284
        %369 = vmatpush.msra.mxu0 %v282
        %370 = vmatpush.msra.mxu0 %v280
        %371 = vmatpush.msra.mxu0 %v278
        %372 = vmatpush.msra.mxu0 %v276
        %373 = vmatmul.f32.gmra.mxu0 %v334
        %v374 = vpop.f32.mrf.mxu0
        %v375 = vadd.f32 0.0, %v374
        %376 = vmatmul.f32.gmra.mxu0 %v337
        %v377 = vpop.f32.mrf.mxu0
        %v378 = vadd.f32 0.0, %v377
        %379 = vmatmul.f32.gmra.mxu0 %v340
        %v380 = vpop.f32.mrf.mxu0
        %v381 = vadd.f32 0.0, %v380
        %382 = vmatmul.f32.gmra.mxu0 %v343
        %v383 = vpop.f32.mrf.mxu0
        %v384 = vadd.f32 0.0, %v383
        %385 = vmatmul.f32.gmra.mxu0 %v346
        %v386 = vpop.f32.mrf.mxu0
        %v387 = vadd.f32 0.0, %v386
        %388 = vmatmul.f32.gmra.mxu0 %v349
        %v389 = vpop.f32.mrf.mxu0
        %v390 = vadd.f32 0.0, %v389
        %391 = vmatmul.f32.gmra.mxu0 %v352
        %v392 = vpop.f32.mrf.mxu0
        %v393 = vadd.f32 0.0, %v392
        %394 = vmatmul.f32.gmra.mxu0 %v355
        %v395 = vpop.f32.mrf.mxu0
        %v396 = vadd.f32 0.0, %v395
        %397 = vdwg.mxu0
        %398 = vmatpush.msra.mxu0 0.0
        %399 = vmatpush.msra.mxu0 0.0
        %400 = vmatpush.msra.mxu0 0.0
        %401 = vmatpush.msra.mxu0 0.0
        %402 = vmatpush.msra.mxu0 0.0
        %403 = vmatpush.msra.mxu0 0.0
        %404 = vmatpush.msra.mxu0 0.0
        %405 = vmatpush.msra.mxu0 0.0
        %406 = vmatpush.msra.mxu0 %v291
        %407 = vmatpush.msra.mxu0 %v289
        %408 = vmatpush.msra.mxu0 %v287
        %409 = vmatpush.msra.mxu0 %v285
        %410 = vmatpush.msra.mxu0 %v283
        %411 = vmatpush.msra.mxu0 %v281
        %412 = vmatpush.msra.mxu0 %v279
        %413 = vmatpush.msra.mxu0 %v277
        %414 = vmatmul.f32.gmra.mxu0 %v334
        %v415 = vpop.f32.mrf.mxu0
        %v416 = vadd.f32 0.0, %v415
        %417 = vmatmul.f32.gmra.mxu0 %v337
        %v418 = vpop.f32.mrf.mxu0
        %v419 = vadd.f32 0.0, %v418
        %420 = vmatmul.f32.gmra.mxu0 %v340
        %v421 = vpop.f32.mrf.mxu0
        %v422 = vadd.f32 0.0, %v421
        %423 = vmatmul.f32.gmra.mxu0 %v343
        %v424 = vpop.f32.mrf.mxu0
        %v425 = vadd.f32 0.0, %v424
        %426 = vmatmul.f32.gmra.mxu0 %v346
        %v427 = vpop.f32.mrf.mxu0
        %v428 = vadd.f32 0.0, %v427
        %429 = vmatmul.f32.gmra.mxu0 %v349
        %v430 = vpop.f32.mrf.mxu0
        %v431 = vadd.f32 0.0, %v430
        %432 = vmatmul.f32.gmra.mxu0 %v352
        %v433 = vpop.f32.mrf.mxu0
        %v434 = vadd.f32 0.0, %v433
        %435 = vmatmul.f32.gmra.mxu0 %v355
        %v436 = vpop.f32.mrf.mxu0
        %v437 = vadd.f32 0.0, %v436
        %438 = vdwg.mxu0
        %v439 = vsub.f32 0.0, %v375
        %v440 = vsub.f32 0.0, %v378
        %v441 = vsub.f32 0.0, %v381
        %v442 = vsub.f32 0.0, %v384
        %v443 = vsub.f32 0.0, %v387
        %v444 = vsub.f32 0.0, %v390
        %v445 = vsub.f32 0.0, %v393
        %v446 = vsub.f32 0.0, %v396
        %455 = vrot.lane.b32.xlu0 %v375, 120
        %v456 = vpop.permute.xlu0 %455
        %457 = vrot.lane.b32.xlu0 %v378, 120
        %v458 = vpop.permute.xlu0 %457
        %459 = vrot.lane.b32.xlu0 %v381, 120
        %v460 = vpop.permute.xlu0 %459
        %461 = vrot.lane.b32.xlu0 %v384, 120
        %v462 = vpop.permute.xlu0 %461
        %463 = vrot.lane.b32.xlu0 %v387, 120
        %v464 = vpop.permute.xlu0 %463
        %465 = vrot.lane.b32.xlu0 %v390, 120
        %v466 = vpop.permute.xlu0 %465
        %467 = vrot.lane.b32.xlu0 %v393, 120
        %v468 = vpop.permute.xlu0 %467
        %469 = vrot.lane.b32.xlu0 %v396, 120
        %v470 = vpop.permute.xlu0 %469
        %487 = vrot.lane.b32.xlu0 %v439, 8
        %v488 = vpop.permute.xlu0 %487
        %489 = vrot.lane.b32.xlu0 %v440, 8
        %v490 = vpop.permute.xlu0 %489
        %491 = vrot.lane.b32.xlu0 %v441, 8
        %v492 = vpop.permute.xlu0 %491
        %493 = vrot.lane.b32.xlu0 %v442, 8
        %v494 = vpop.permute.xlu0 %493
        %495 = vrot.lane.b32.xlu0 %v443, 8
        %v496 = vpop.permute.xlu0 %495
        %497 = vrot.lane.b32.xlu0 %v444, 8
        %v498 = vpop.permute.xlu0 %497
        %499 = vrot.lane.b32.xlu0 %v445, 8
        %v500 = vpop.permute.xlu0 %499
        %501 = vrot.lane.b32.xlu0 %v446, 8
        %v502 = vpop.permute.xlu0 %501
        %vm511 = vcmask 64512
        %v512 = vsel %vm511, %v456, %v488
        %v513 = vsel %vm511, %v458, %v490
        %v514 = vsel %vm511, %v460, %v492
        %v515 = vsel %vm511, %v462, %v494
        %v516 = vsel %vm511, %v464, %v496
        %v517 = vsel %vm511, %v466, %v498
        %v518 = vsel %vm511, %v468, %v500
        %v519 = vsel %vm511, %v470, %v502
        %520 = vrot.lane.b32.xlu0 %v375, 112
        %v521 = vpop.permute.xlu0 %520
        %522 = vrot.lane.b32.xlu0 %v378, 112
        %v523 = vpop.permute.xlu0 %522
        %524 = vrot.lane.b32.xlu0 %v381, 112
        %v525 = vpop.permute.xlu0 %524
        %526 = vrot.lane.b32.xlu0 %v384, 112
        %v527 = vpop.permute.xlu0 %526
        %528 = vrot.lane.b32.xlu0 %v387, 112
        %v529 = vpop.permute.xlu0 %528
        %530 = vrot.lane.b32.xlu0 %v390, 112
        %v531 = vpop.permute.xlu0 %530
        %532 = vrot.lane.b32.xlu0 %v393, 112
        %v533 = vpop.permute.xlu0 %532
        %534 = vrot.lane.b32.xlu0 %v396, 112
        %v535 = vpop.permute.xlu0 %534
        %vm536 = vcmask 130048
        %v537 = vsel %vm536, %v375, 0
        %v539 = vsel %vm536, %v378, 0
        %v541 = vsel %vm536, %v381, 0
        %v543 = vsel %vm536, %v384, 0
        %v545 = vsel %vm536, %v387, 0
        %v547 = vsel %vm536, %v390, 0
        %v549 = vsel %vm536, %v393, 0
        %v551 = vsel %vm536, %v396, 0
        %v553 = vsel %vm536, %v521, 0
        %v555 = vsel %vm536, %v523, 0
        %v557 = vsel %vm536, %v525, 0
        %v559 = vsel %vm536, %v527, 0
        %v561 = vsel %vm536, %v529, 0
        %v563 = vsel %vm536, %v531, 0
        %v565 = vsel %vm536, %v533, 0
        %v567 = vsel %vm536, %v535, 0
        %569 = vmatpush.xpose.msra.mxu0 0.0
        %570 = vmatpush.xpose.msra.mxu0 0.0
        %571 = vmatpush.xpose.msra.mxu0 0.0
        %572 = vmatpush.xpose.msra.mxu0 0.0
        %573 = vmatpush.xpose.msra.mxu0 0.0
        %574 = vmatpush.xpose.msra.mxu0 0.0
        %575 = vmatpush.xpose.msra.mxu0 0.0
        %576 = vmatpush.xpose.msra.mxu0 0.0
        %577 = vmatpush.xpose.msra.mxu0 %v567
        %578 = vmatpush.xpose.msra.mxu0 %v565
        %579 = vmatpush.xpose.msra.mxu0 %v563
        %580 = vmatpush.xpose.msra.mxu0 %v561
        %581 = vmatpush.xpose.msra.mxu0 %v559
        %582 = vmatpush.xpose.msra.mxu0 %v557
        %583 = vmatpush.xpose.msra.mxu0 %v555
        %584 = vmatpush.xpose.msra.mxu0 %v553
        %585 = vmatmul.f32.gmra.mxu0 %v537
        %v586 = vpop.f32.mrf.mxu0
        %v587 = vadd.f32 0.0, %v586
        %588 = vmatmul.f32.gmra.mxu0 %v539
        %v589 = vpop.f32.mrf.mxu0
        %v590 = vadd.f32 0.0, %v589
        %591 = vmatmul.f32.gmra.mxu0 %v541
        %v592 = vpop.f32.mrf.mxu0
        %v593 = vadd.f32 0.0, %v592
        %594 = vmatmul.f32.gmra.mxu0 %v543
        %v595 = vpop.f32.mrf.mxu0
        %v596 = vadd.f32 0.0, %v595
        %597 = vmatmul.f32.gmra.mxu0 %v545
        %v598 = vpop.f32.mrf.mxu0
        %v599 = vadd.f32 0.0, %v598
        %600 = vmatmul.f32.gmra.mxu0 %v547
        %v601 = vpop.f32.mrf.mxu0
        %v602 = vadd.f32 0.0, %v601
        %603 = vmatmul.f32.gmra.mxu0 %v549
        %v604 = vpop.f32.mrf.mxu0
        %v605 = vadd.f32 0.0, %v604
        %606 = vmatmul.f32.gmra.mxu0 %v551
        %v607 = vpop.f32.mrf.mxu0
        %v608 = vadd.f32 0.0, %v607
        %609 = vdwg.mxu0
        %v611 = vsel %vm536, %v512, 0
        %v614 = vsel %vm536, %v513, 0
        %v617 = vsel %vm536, %v514, 0
        %v620 = vsel %vm536, %v515, 0
        %v623 = vsel %vm536, %v516, 0
        %v626 = vsel %vm536, %v517, 0
        %v629 = vsel %vm536, %v518, 0
        %v632 = vsel %vm536, %v519, 0
        %634 = vmatpush.xpose.msra.mxu0 0.0
        %635 = vmatpush.xpose.msra.mxu0 0.0
        %636 = vmatpush.xpose.msra.mxu0 0.0
        %637 = vmatpush.xpose.msra.mxu0 0.0
        %638 = vmatpush.xpose.msra.mxu0 0.0
        %639 = vmatpush.xpose.msra.mxu0 0.0
        %640 = vmatpush.xpose.msra.mxu0 0.0
        %641 = vmatpush.xpose.msra.mxu0 0.0
        %642 = vmatpush.xpose.msra.mxu0 %v567
        %643 = vmatpush.xpose.msra.mxu0 %v565
        %644 = vmatpush.xpose.msra.mxu0 %v563
        %645 = vmatpush.xpose.msra.mxu0 %v561
        %646 = vmatpush.xpose.msra.mxu0 %v559
        %647 = vmatpush.xpose.msra.mxu0 %v557
        %648 = vmatpush.xpose.msra.mxu0 %v555
        %649 = vmatpush.xpose.msra.mxu0 %v553
        %650 = vmatmul.f32.gmra.mxu0 %v611
        %v651 = vpop.f32.mrf.mxu0
        %v652 = vadd.f32 0.0, %v651
        %653 = vmatmul.f32.gmra.mxu0 %v614
        %v654 = vpop.f32.mrf.mxu0
        %v655 = vadd.f32 0.0, %v654
        %656 = vmatmul.f32.gmra.mxu0 %v617
        %v657 = vpop.f32.mrf.mxu0
        %v658 = vadd.f32 0.0, %v657
        %659 = vmatmul.f32.gmra.mxu0 %v620
        %v660 = vpop.f32.mrf.mxu0
        %v661 = vadd.f32 0.0, %v660
        %662 = vmatmul.f32.gmra.mxu0 %v623
        %v663 = vpop.f32.mrf.mxu0
        %v664 = vadd.f32 0.0, %v663
        %665 = vmatmul.f32.gmra.mxu0 %v626
        %v666 = vpop.f32.mrf.mxu0
        %v667 = vadd.f32 0.0, %v666
        %668 = vmatmul.f32.gmra.mxu0 %v629
        %v669 = vpop.f32.mrf.mxu0
        %v670 = vadd.f32 0.0, %v669
        %671 = vmatmul.f32.gmra.mxu0 %v632
        %v672 = vpop.f32.mrf.mxu0
        %v673 = vadd.f32 0.0, %v672
        %674 = vdwg.mxu0
        %v675 = vmul.f32 %v587, 0.35355338
        %v676 = vmul.f32 %v590, 0.35355338
        %v677 = vmul.f32 %v593, 0.35355338
        %v678 = vmul.f32 %v596, 0.35355338
        %v679 = vmul.f32 %v599, 0.35355338
        %v680 = vmul.f32 %v602, 0.35355338
        %v681 = vmul.f32 %v605, 0.35355338
        %v682 = vmul.f32 %v608, 0.35355338
        %v683 = vadd.f32 %v675, %v300
        %v684 = vadd.f32 %v676, %v301
        %v685 = vadd.f32 %v677, %v302
        %v686 = vadd.f32 %v678, %v303
        %v687 = vadd.f32 %v679, %v304
        %v688 = vadd.f32 %v680, %v305
        %v689 = vadd.f32 %v681, %v306
        %v690 = vadd.f32 %v682, %v307
        %v691 = vmul.f32 %v652, 0.35355338
        %v692 = vmul.f32 %v655, 0.35355338
        %v693 = vmul.f32 %v658, 0.35355338
        %v694 = vmul.f32 %v661, 0.35355338
        %v695 = vmul.f32 %v664, 0.35355338
        %v696 = vmul.f32 %v667, 0.35355338
        %v697 = vmul.f32 %v670, 0.35355338
        %v698 = vmul.f32 %v673, 0.35355338
        %v699 = vmul.f32 %v683, %v683
        %v700 = vmul.f32 %v684, %v684
        %v701 = vmul.f32 %v685, %v685
        %v702 = vmul.f32 %v686, %v686
        %v703 = vmul.f32 %v687, %v687
        %v704 = vmul.f32 %v688, %v688
        %v705 = vmul.f32 %v689, %v689
        %v706 = vmul.f32 %v690, %v690
        %v707 = vmul.f32 %v691, %v691
        %v708 = vmul.f32 %v692, %v692
        %v709 = vmul.f32 %v693, %v693
        %v710 = vmul.f32 %v694, %v694
        %v711 = vmul.f32 %v695, %v695
        %v712 = vmul.f32 %v696, %v696
        %v713 = vmul.f32 %v697, %v697
        %v714 = vmul.f32 %v698, %v698
        %v715 = vadd.f32 %v699, %v707
        %v716 = vadd.f32 %v700, %v708
        %v717 = vadd.f32 %v701, %v709
        %v718 = vadd.f32 %v702, %v710
        %v719 = vadd.f32 %v703, %v711
        %v720 = vadd.f32 %v704, %v712
        %v721 = vadd.f32 %v705, %v713
        %v722 = vadd.f32 %v706, %v714
        %v723 = vrsqrt.pop %v715
        %v724 = vmul.f32 %v723, %v715
        %v725 = vmul.f32 %v724, %v723
        %v726 = vmul.f32 0.5, %v725
        %v727 = vsub.f32 1.5, %v726
        %v728 = vmul.f32 %v723, %v727
        %v729 = vmul.f32 %v715, %v728
        %vm730 = vcmp.eq.f32.partialorder %v715, inf
        %v731 = vsel %vm730, %v715, %v729
        %vm732 = vcmp.eq.f32.partialorder %v715, 0.0
        %v733 = vand.u32 %v715, 2147483648
        %v734 = vsel %vm732, %v733, %v731
        %v735 = vrsqrt.pop %v716
        %v736 = vmul.f32 %v735, %v716
        %v737 = vmul.f32 %v736, %v735
        %v738 = vmul.f32 0.5, %v737
        %v739 = vsub.f32 1.5, %v738
        %v740 = vmul.f32 %v735, %v739
        %v741 = vmul.f32 %v716, %v740
        %vm742 = vcmp.eq.f32.partialorder %v716, inf
        %v743 = vsel %vm742, %v716, %v741
        %vm744 = vcmp.eq.f32.partialorder %v716, 0.0
        %v745 = vand.u32 %v716, 2147483648
        %v746 = vsel %vm744, %v745, %v743
        %v747 = vrsqrt.pop %v717
        %v748 = vmul.f32 %v747, %v717
        %v749 = vmul.f32 %v748, %v747
        %v750 = vmul.f32 0.5, %v749
        %v751 = vsub.f32 1.5, %v750
        %v752 = vmul.f32 %v747, %v751
        %v753 = vmul.f32 %v717, %v752
        %vm754 = vcmp.eq.f32.partialorder %v717, inf
        %v755 = vsel %vm754, %v717, %v753
        %vm756 = vcmp.eq.f32.partialorder %v717, 0.0
        %v757 = vand.u32 %v717, 2147483648
        %v758 = vsel %vm756, %v757, %v755
        %v759 = vrsqrt.pop %v718
        %v760 = vmul.f32 %v759, %v718
        %v761 = vmul.f32 %v760, %v759
        %v762 = vmul.f32 0.5, %v761
        %v763 = vsub.f32 1.5, %v762
        %v764 = vmul.f32 %v759, %v763
        %v765 = vmul.f32 %v718, %v764
        %vm766 = vcmp.eq.f32.partialorder %v718, inf
        %v767 = vsel %vm766, %v718, %v765
        %vm768 = vcmp.eq.f32.partialorder %v718, 0.0
        %v769 = vand.u32 %v718, 2147483648
        %v770 = vsel %vm768, %v769, %v767
        %v771 = vrsqrt.pop %v719
        %v772 = vmul.f32 %v771, %v719
        %v773 = vmul.f32 %v772, %v771
        %v774 = vmul.f32 0.5, %v773
        %v775 = vsub.f32 1.5, %v774
        %v776 = vmul.f32 %v771, %v775
        %v777 = vmul.f32 %v719, %v776
        %vm778 = vcmp.eq.f32.partialorder %v719, inf
        %v779 = vsel %vm778, %v719, %v777
        %vm780 = vcmp.eq.f32.partialorder %v719, 0.0
        %v781 = vand.u32 %v719, 2147483648
        %v782 = vsel %vm780, %v781, %v779
        %v783 = vrsqrt.pop %v720
        %v784 = vmul.f32 %v783, %v720
        %v785 = vmul.f32 %v784, %v783
        %v786 = vmul.f32 0.5, %v785
        %v787 = vsub.f32 1.5, %v786
        %v788 = vmul.f32 %v783, %v787
        %v789 = vmul.f32 %v720, %v788
        %vm790 = vcmp.eq.f32.partialorder %v720, inf
        %v791 = vsel %vm790, %v720, %v789
        %vm792 = vcmp.eq.f32.partialorder %v720, 0.0
        %v793 = vand.u32 %v720, 2147483648
        %v794 = vsel %vm792, %v793, %v791
        %v795 = vrsqrt.pop %v721
        %v796 = vmul.f32 %v795, %v721
        %v797 = vmul.f32 %v796, %v795
        %v798 = vmul.f32 0.5, %v797
        %v799 = vsub.f32 1.5, %v798
        %v800 = vmul.f32 %v795, %v799
        %v801 = vmul.f32 %v721, %v800
        %vm802 = vcmp.eq.f32.partialorder %v721, inf
        %v803 = vsel %vm802, %v721, %v801
        %vm804 = vcmp.eq.f32.partialorder %v721, 0.0
        %v805 = vand.u32 %v721, 2147483648
        %v806 = vsel %vm804, %v805, %v803
        %v807 = vrsqrt.pop %v722
        %v808 = vmul.f32 %v807, %v722
        %v809 = vmul.f32 %v808, %v807
        %v810 = vmul.f32 0.5, %v809
        %v811 = vsub.f32 1.5, %v810
        %v812 = vmul.f32 %v807, %v811
        %v813 = vmul.f32 %v722, %v812
        %vm814 = vcmp.eq.f32.partialorder %v722, inf
        %v815 = vsel %vm814, %v722, %v813
        %vm816 = vcmp.eq.f32.partialorder %v722, 0.0
        %v817 = vand.u32 %v722, 2147483648
        %v818 = vsel %vm816, %v817, %v815
        %v819 = vsel %vm332, %v734, -inf
        %820 = vmax.xlane.f32.xlu0 %v819
        %v821 = vpop.xlane.xlu0 %820
        %v822 = vsel %vm332, %v746, -inf
        %823 = vmax.xlane.f32.xlu0 %v822
        %v824 = vpop.xlane.xlu0 %823
        %v825 = vsel %vm332, %v758, -inf
        %826 = vmax.xlane.f32.xlu0 %v825
        %v827 = vpop.xlane.xlu0 %826
        %v828 = vsel %vm332, %v770, -inf
        %829 = vmax.xlane.f32.xlu0 %v828
        %v830 = vpop.xlane.xlu0 %829
        %v831 = vsel %vm332, %v782, -inf
        %832 = vmax.xlane.f32.xlu0 %v831
        %v833 = vpop.xlane.xlu0 %832
        %v834 = vsel %vm332, %v794, -inf
        %835 = vmax.xlane.f32.xlu0 %v834
        %v836 = vpop.xlane.xlu0 %835
        %v837 = vsel %vm332, %v806, -inf
        %838 = vmax.xlane.f32.xlu0 %v837
        %v839 = vpop.xlane.xlu0 %838
        %v840 = vsel %vm332, %v818, -inf
        %841 = vmax.xlane.f32.xlu0 %v840
        %v842 = vpop.xlane.xlu0 %841
        %v843 = vsub.f32 %v734, %v821
        %v844 = vsub.f32 %v746, %v824
        %v845 = vsub.f32 %v758, %v827
        %v846 = vsub.f32 %v770, %v830
        %v847 = vsub.f32 %v782, %v833
        %v848 = vsub.f32 %v794, %v836
        %v849 = vsub.f32 %v806, %v839
        %v850 = vsub.f32 %v818, %v842
        %v851 = vmul.f32 %v843, 1.442695
        %v852 = vpow.pop %v851
        %v853 = vmul.f32 %v844, 1.442695
        %v854 = vpow.pop %v853
        %v855 = vmul.f32 %v845, 1.442695
        %v856 = vpow.pop %v855
        %v857 = vmul.f32 %v846, 1.442695
        %v858 = vpow.pop %v857
        %v859 = vmul.f32 %v847, 1.442695
        %v860 = vpow.pop %v859
        %v861 = vmul.f32 %v848, 1.442695
        %v862 = vpow.pop %v861
        %v863 = vmul.f32 %v849, 1.442695
        %v864 = vpow.pop %v863
        %v865 = vmul.f32 %v850, 1.442695
        %v866 = vpow.pop %v865
        %v867 = vsel %vm332, %v852, 0.0
        %868 = vadd.xlane.f32.xlu0 %v867
        %v869 = vpop.xlane.xlu0 %868
        %v870 = vsel %vm332, %v854, 0.0
        %871 = vadd.xlane.f32.xlu0 %v870
        %v872 = vpop.xlane.xlu0 %871
        %v873 = vsel %vm332, %v856, 0.0
        %874 = vadd.xlane.f32.xlu0 %v873
        %v875 = vpop.xlane.xlu0 %874
        %v876 = vsel %vm332, %v858, 0.0
        %877 = vadd.xlane.f32.xlu0 %v876
        %v878 = vpop.xlane.xlu0 %877
        %v879 = vsel %vm332, %v860, 0.0
        %880 = vadd.xlane.f32.xlu0 %v879
        %v881 = vpop.xlane.xlu0 %880
        %v882 = vsel %vm332, %v862, 0.0
        %883 = vadd.xlane.f32.xlu0 %v882
        %v884 = vpop.xlane.xlu0 %883
        %v885 = vsel %vm332, %v864, 0.0
        %886 = vadd.xlane.f32.xlu0 %v885
        %v887 = vpop.xlane.xlu0 %886
        %v888 = vsel %vm332, %v866, 0.0
        %889 = vadd.xlane.f32.xlu0 %v888
        %v890 = vpop.xlane.xlu0 %889
        %v891 = vrcp.pop %v869
        %v892 = vmul.f32 %v869, %v891
        %v893 = vsub.f32 1.0, %v892
        %v894 = vmul.f32 %v891, %v893
        %v895 = vadd.f32 %v891, %v894
        %vm896 = vweird.f32 %v869
        %vm897 = vweird.f32 %v891
        %vm898 = vmor %vm896, %vm897
        %v899 = vsel %vm898, %v891, %v895
        %v900 = vand.u32 2147483647, %v869
        %vm901 = vcmp.eq.f32.partialorder %v900, 8.507059e+37
        %v902 = vand.u32 %v869, 2147483648
        %v903 = vor.u32 1.1754944e-38, %v902
        %v904 = vsel %vm901, %v903, %v899
        %v905 = vrcp.pop %v872
        %v906 = vmul.f32 %v872, %v905
        %v907 = vsub.f32 1.0, %v906
        %v908 = vmul.f32 %v905, %v907
        %v909 = vadd.f32 %v905, %v908
        %vm910 = vweird.f32 %v872
        %vm911 = vweird.f32 %v905
        %vm912 = vmor %vm910, %vm911
        %v913 = vsel %vm912, %v905, %v909
        %v914 = vand.u32 2147483647, %v872
        %vm915 = vcmp.eq.f32.partialorder %v914, 8.507059e+37
        %v916 = vand.u32 %v872, 2147483648
        %v917 = vor.u32 1.1754944e-38, %v916
        %v918 = vsel %vm915, %v917, %v913
        %v919 = vrcp.pop %v875
        %v920 = vmul.f32 %v875, %v919
        %v921 = vsub.f32 1.0, %v920
        %v922 = vmul.f32 %v919, %v921
        %v923 = vadd.f32 %v919, %v922
        %vm924 = vweird.f32 %v875
        %vm925 = vweird.f32 %v919
        %vm926 = vmor %vm924, %vm925
        %v927 = vsel %vm926, %v919, %v923
        %v928 = vand.u32 2147483647, %v875
        %vm929 = vcmp.eq.f32.partialorder %v928, 8.507059e+37
        %v930 = vand.u32 %v875, 2147483648
        %v931 = vor.u32 1.1754944e-38, %v930
        %v932 = vsel %vm929, %v931, %v927
        %v933 = vrcp.pop %v878
        %v934 = vmul.f32 %v878, %v933
        %v935 = vsub.f32 1.0, %v934
        %v936 = vmul.f32 %v933, %v935
        %v937 = vadd.f32 %v933, %v936
        %vm938 = vweird.f32 %v878
        %vm939 = vweird.f32 %v933
        %vm940 = vmor %vm938, %vm939
        %v941 = vsel %vm940, %v933, %v937
        %v942 = vand.u32 2147483647, %v878
        %vm943 = vcmp.eq.f32.partialorder %v942, 8.507059e+37
        %v944 = vand.u32 %v878, 2147483648
        %v945 = vor.u32 1.1754944e-38, %v944
        %v946 = vsel %vm943, %v945, %v941
        %v947 = vrcp.pop %v881
        %v948 = vmul.f32 %v881, %v947
        %v949 = vsub.f32 1.0, %v948
        %v950 = vmul.f32 %v947, %v949
        %v951 = vadd.f32 %v947, %v950
        %vm952 = vweird.f32 %v881
        %vm953 = vweird.f32 %v947
        %vm954 = vmor %vm952, %vm953
        %v955 = vsel %vm954, %v947, %v951
        %v956 = vand.u32 2147483647, %v881
        %vm957 = vcmp.eq.f32.partialorder %v956, 8.507059e+37
        %v958 = vand.u32 %v881, 2147483648
        %v959 = vor.u32 1.1754944e-38, %v958
        %v960 = vsel %vm957, %v959, %v955
        %v961 = vrcp.pop %v884
        %v962 = vmul.f32 %v884, %v961
        %v963 = vsub.f32 1.0, %v962
        %v964 = vmul.f32 %v961, %v963
        %v965 = vadd.f32 %v961, %v964
        %vm966 = vweird.f32 %v884
        %vm967 = vweird.f32 %v961
        %vm968 = vmor %vm966, %vm967
        %v969 = vsel %vm968, %v961, %v965
        %v970 = vand.u32 2147483647, %v884
        %vm971 = vcmp.eq.f32.partialorder %v970, 8.507059e+37
        %v972 = vand.u32 %v884, 2147483648
        %v973 = vor.u32 1.1754944e-38, %v972
        %v974 = vsel %vm971, %v973, %v969
        %v975 = vrcp.pop %v887
        %v976 = vmul.f32 %v887, %v975
        %v977 = vsub.f32 1.0, %v976
        %v978 = vmul.f32 %v975, %v977
        %v979 = vadd.f32 %v975, %v978
        %vm980 = vweird.f32 %v887
        %vm981 = vweird.f32 %v975
        %vm982 = vmor %vm980, %vm981
        %v983 = vsel %vm982, %v975, %v979
        %v984 = vand.u32 2147483647, %v887
        %vm985 = vcmp.eq.f32.partialorder %v984, 8.507059e+37
        %v986 = vand.u32 %v887, 2147483648
        %v987 = vor.u32 1.1754944e-38, %v986
        %v988 = vsel %vm985, %v987, %v983
        %v989 = vrcp.pop %v890
        %v990 = vmul.f32 %v890, %v989
        %v991 = vsub.f32 1.0, %v990
        %v992 = vmul.f32 %v989, %v991
        %v993 = vadd.f32 %v989, %v992
        %vm994 = vweird.f32 %v890
        %vm995 = vweird.f32 %v989
        %vm996 = vmor %vm994, %vm995
        %v997 = vsel %vm996, %v989, %v993
        %v998 = vand.u32 2147483647, %v890
        %vm999 = vcmp.eq.f32.partialorder %v998, 8.507059e+37
        %v1000 = vand.u32 %v890, 2147483648
        %v1001 = vor.u32 1.1754944e-38, %v1000
        %v1002 = vsel %vm999, %v1001, %v997
        %v1003 = vmul.f32 %v852, %v904
        %v1004 = vmul.f32 %v854, %v918
        %v1005 = vmul.f32 %v856, %v932
        %v1006 = vmul.f32 %v858, %v946
        %v1007 = vmul.f32 %v860, %v960
        %v1008 = vmul.f32 %v862, %v974
        %v1009 = vmul.f32 %v864, %v988
        %v1010 = vmul.f32 %v866, %v1002
        %v1011 = vadd.f32 %v734, 1e-08
        %v1012 = vadd.f32 %v746, 1e-08
        %v1013 = vadd.f32 %v758, 1e-08
        %v1014 = vadd.f32 %v770, 1e-08
        %v1015 = vadd.f32 %v782, 1e-08
        %v1016 = vadd.f32 %v794, 1e-08
        %v1017 = vadd.f32 %v806, 1e-08
        %v1018 = vadd.f32 %v818, 1e-08
        %v1019 = vrcp.pop %v1011
        %v1020 = vmul.f32 %v1011, %v1019
        %v1021 = vsub.f32 1.0, %v1020
        %v1022 = vmul.f32 %v1019, %v1021
        %v1023 = vadd.f32 %v1019, %v1022
        %vm1024 = vweird.f32 %v1011
        %vm1025 = vweird.f32 %v1019
        %vm1026 = vmor %vm1024, %vm1025
        %v1027 = vsel %vm1026, %v1019, %v1023
        %v1028 = vand.u32 2147483647, %v1011
        %vm1029 = vcmp.eq.f32.partialorder %v1028, 8.507059e+37
        %v1030 = vand.u32 %v1011, 2147483648
        %v1031 = vor.u32 1.1754944e-38, %v1030
        %v1032 = vsel %vm1029, %v1031, %v1027
        %v1033 = vrcp.pop %v1012
        %v1034 = vmul.f32 %v1012, %v1033
        %v1035 = vsub.f32 1.0, %v1034
        %v1036 = vmul.f32 %v1033, %v1035
        %v1037 = vadd.f32 %v1033, %v1036
        %vm1038 = vweird.f32 %v1012
        %vm1039 = vweird.f32 %v1033
        %vm1040 = vmor %vm1038, %vm1039
        %v1041 = vsel %vm1040, %v1033, %v1037
        %v1042 = vand.u32 2147483647, %v1012
        %vm1043 = vcmp.eq.f32.partialorder %v1042, 8.507059e+37
        %v1044 = vand.u32 %v1012, 2147483648
        %v1045 = vor.u32 1.1754944e-38, %v1044
        %v1046 = vsel %vm1043, %v1045, %v1041
        %v1047 = vrcp.pop %v1013
        %v1048 = vmul.f32 %v1013, %v1047
        %v1049 = vsub.f32 1.0, %v1048
        %v1050 = vmul.f32 %v1047, %v1049
        %v1051 = vadd.f32 %v1047, %v1050
        %vm1052 = vweird.f32 %v1013
        %vm1053 = vweird.f32 %v1047
        %vm1054 = vmor %vm1052, %vm1053
        %v1055 = vsel %vm1054, %v1047, %v1051
        %v1056 = vand.u32 2147483647, %v1013
        %vm1057 = vcmp.eq.f32.partialorder %v1056, 8.507059e+37
        %v1058 = vand.u32 %v1013, 2147483648
        %v1059 = vor.u32 1.1754944e-38, %v1058
        %v1060 = vsel %vm1057, %v1059, %v1055
        %v1061 = vrcp.pop %v1014
        %v1062 = vmul.f32 %v1014, %v1061
        %v1063 = vsub.f32 1.0, %v1062
        %v1064 = vmul.f32 %v1061, %v1063
        %v1065 = vadd.f32 %v1061, %v1064
        %vm1066 = vweird.f32 %v1014
        %vm1067 = vweird.f32 %v1061
        %vm1068 = vmor %vm1066, %vm1067
        %v1069 = vsel %vm1068, %v1061, %v1065
        %v1070 = vand.u32 2147483647, %v1014
        %vm1071 = vcmp.eq.f32.partialorder %v1070, 8.507059e+37
        %v1072 = vand.u32 %v1014, 2147483648
        %v1073 = vor.u32 1.1754944e-38, %v1072
        %v1074 = vsel %vm1071, %v1073, %v1069
        %v1075 = vrcp.pop %v1015
        %v1076 = vmul.f32 %v1015, %v1075
        %v1077 = vsub.f32 1.0, %v1076
        %v1078 = vmul.f32 %v1075, %v1077
        %v1079 = vadd.f32 %v1075, %v1078
        %vm1080 = vweird.f32 %v1015
        %vm1081 = vweird.f32 %v1075
        %vm1082 = vmor %vm1080, %vm1081
        %v1083 = vsel %vm1082, %v1075, %v1079
        %v1084 = vand.u32 2147483647, %v1015
        %vm1085 = vcmp.eq.f32.partialorder %v1084, 8.507059e+37
        %v1086 = vand.u32 %v1015, 2147483648
        %v1087 = vor.u32 1.1754944e-38, %v1086
        %v1088 = vsel %vm1085, %v1087, %v1083
        %v1089 = vrcp.pop %v1016
        %v1090 = vmul.f32 %v1016, %v1089
        %v1091 = vsub.f32 1.0, %v1090
        %v1092 = vmul.f32 %v1089, %v1091
        %v1093 = vadd.f32 %v1089, %v1092
        %vm1094 = vweird.f32 %v1016
        %vm1095 = vweird.f32 %v1089
        %vm1096 = vmor %vm1094, %vm1095
        %v1097 = vsel %vm1096, %v1089, %v1093
        %v1098 = vand.u32 2147483647, %v1016
        %vm1099 = vcmp.eq.f32.partialorder %v1098, 8.507059e+37
        %v1100 = vand.u32 %v1016, 2147483648
        %v1101 = vor.u32 1.1754944e-38, %v1100
        %v1102 = vsel %vm1099, %v1101, %v1097
        %v1103 = vrcp.pop %v1017
        %v1104 = vmul.f32 %v1017, %v1103
        %v1105 = vsub.f32 1.0, %v1104
        %v1106 = vmul.f32 %v1103, %v1105
        %v1107 = vadd.f32 %v1103, %v1106
        %vm1108 = vweird.f32 %v1017
        %vm1109 = vweird.f32 %v1103
        %vm1110 = vmor %vm1108, %vm1109
        %v1111 = vsel %vm1110, %v1103, %v1107
        %v1112 = vand.u32 2147483647, %v1017
        %vm1113 = vcmp.eq.f32.partialorder %v1112, 8.507059e+37
        %v1114 = vand.u32 %v1017, 2147483648
        %v1115 = vor.u32 1.1754944e-38, %v1114
        %v1116 = vsel %vm1113, %v1115, %v1111
        %v1117 = vrcp.pop %v1018
        %v1118 = vmul.f32 %v1018, %v1117
        %v1119 = vsub.f32 1.0, %v1118
        %v1120 = vmul.f32 %v1117, %v1119
        %v1121 = vadd.f32 %v1117, %v1120
        %vm1122 = vweird.f32 %v1018
        %vm1123 = vweird.f32 %v1117
        %vm1124 = vmor %vm1122, %vm1123
        %v1125 = vsel %vm1124, %v1117, %v1121
        %v1126 = vand.u32 2147483647, %v1018
        %vm1127 = vcmp.eq.f32.partialorder %v1126, 8.507059e+37
        %v1128 = vand.u32 %v1018, 2147483648
        %v1129 = vor.u32 1.1754944e-38, %v1128
        %v1130 = vsel %vm1127, %v1129, %v1125
        %v1131 = vmul.f32 %v1003, %v1032
        %v1132 = vmul.f32 %v1004, %v1046
        %v1133 = vmul.f32 %v1005, %v1060
        %v1134 = vmul.f32 %v1006, %v1074
        %v1135 = vmul.f32 %v1007, %v1088
        %v1136 = vmul.f32 %v1008, %v1102
        %v1137 = vmul.f32 %v1009, %v1116
        %v1138 = vmul.f32 %v1010, %v1130
        %v1139 = vmul.f32 %v683, %v1131
        %v1140 = vmul.f32 %v684, %v1132
        %v1141 = vmul.f32 %v685, %v1133
        %v1142 = vmul.f32 %v686, %v1134
        %v1143 = vmul.f32 %v687, %v1135
        %v1144 = vmul.f32 %v688, %v1136
        %v1145 = vmul.f32 %v689, %v1137
        %v1146 = vmul.f32 %v690, %v1138
        %v1147 = vmul.f32 %v691, %v1131
        %v1148 = vmul.f32 %v692, %v1132
        %v1149 = vmul.f32 %v693, %v1133
        %v1150 = vmul.f32 %v694, %v1134
        %v1151 = vmul.f32 %v695, %v1135
        %v1152 = vmul.f32 %v696, %v1136
        %v1153 = vmul.f32 %v697, %v1137
        %v1154 = vmul.f32 %v698, %v1138
        %1155 = vrot.lane.b32.xlu0 %v439, 88
        %v1156 = vpop.permute.xlu0 %1155
        %1157 = vrot.lane.b32.xlu0 %v440, 88
        %v1158 = vpop.permute.xlu0 %1157
        %1159 = vrot.lane.b32.xlu0 %v441, 88
        %v1160 = vpop.permute.xlu0 %1159
        %1161 = vrot.lane.b32.xlu0 %v442, 88
        %v1162 = vpop.permute.xlu0 %1161
        %1163 = vrot.lane.b32.xlu0 %v443, 88
        %v1164 = vpop.permute.xlu0 %1163
        %1165 = vrot.lane.b32.xlu0 %v444, 88
        %v1166 = vpop.permute.xlu0 %1165
        %1167 = vrot.lane.b32.xlu0 %v445, 88
        %v1168 = vpop.permute.xlu0 %1167
        %1169 = vrot.lane.b32.xlu0 %v446, 88
        %v1170 = vpop.permute.xlu0 %1169
        %1179 = vrot.lane.b32.xlu0 %v375, 104
        %v1180 = vpop.permute.xlu0 %1179
        %1181 = vrot.lane.b32.xlu0 %v378, 104
        %v1182 = vpop.permute.xlu0 %1181
        %1183 = vrot.lane.b32.xlu0 %v381, 104
        %v1184 = vpop.permute.xlu0 %1183
        %1185 = vrot.lane.b32.xlu0 %v384, 104
        %v1186 = vpop.permute.xlu0 %1185
        %1187 = vrot.lane.b32.xlu0 %v387, 104
        %v1188 = vpop.permute.xlu0 %1187
        %1189 = vrot.lane.b32.xlu0 %v390, 104
        %v1190 = vpop.permute.xlu0 %1189
        %1191 = vrot.lane.b32.xlu0 %v393, 104
        %v1192 = vpop.permute.xlu0 %1191
        %1193 = vrot.lane.b32.xlu0 %v396, 104
        %v1194 = vpop.permute.xlu0 %1193
        %v1203 = vsel %vm511, %v1156, %v1180
        %v1204 = vsel %vm511, %v1158, %v1182
        %v1205 = vsel %vm511, %v1160, %v1184
        %v1206 = vsel %vm511, %v1162, %v1186
        %v1207 = vsel %vm511, %v1164, %v1188
        %v1208 = vsel %vm511, %v1166, %v1190
        %v1209 = vsel %vm511, %v1168, %v1192
        %v1210 = vsel %vm511, %v1170, %v1194
        %1219 = vrot.lane.b32.xlu0 %v1203, 32
        %v1220 = vpop.permute.xlu0 %1219
        %1221 = vrot.lane.b32.xlu0 %v1204, 32
        %v1222 = vpop.permute.xlu0 %1221
        %1223 = vrot.lane.b32.xlu0 %v1205, 32
        %v1224 = vpop.permute.xlu0 %1223
        %1225 = vrot.lane.b32.xlu0 %v1206, 32
        %v1226 = vpop.permute.xlu0 %1225
        %1227 = vrot.lane.b32.xlu0 %v1207, 32
        %v1228 = vpop.permute.xlu0 %1227
        %1229 = vrot.lane.b32.xlu0 %v1208, 32
        %v1230 = vpop.permute.xlu0 %1229
        %1231 = vrot.lane.b32.xlu0 %v1209, 32
        %v1232 = vpop.permute.xlu0 %1231
        %1233 = vrot.lane.b32.xlu0 %v1210, 32
        %v1234 = vpop.permute.xlu0 %1233
        %1243 = vrot.lane.b32.xlu0 %v1147, 64
        %v1244 = vpop.permute.xlu0 %1243
        %1245 = vrot.lane.b32.xlu0 %v1148, 64
        %v1246 = vpop.permute.xlu0 %1245
        %1247 = vrot.lane.b32.xlu0 %v1149, 64
        %v1248 = vpop.permute.xlu0 %1247
        %1249 = vrot.lane.b32.xlu0 %v1150, 64
        %v1250 = vpop.permute.xlu0 %1249
        %1251 = vrot.lane.b32.xlu0 %v1151, 64
        %v1252 = vpop.permute.xlu0 %1251
        %1253 = vrot.lane.b32.xlu0 %v1152, 64
        %v1254 = vpop.permute.xlu0 %1253
        %1255 = vrot.lane.b32.xlu0 %v1153, 64
        %v1256 = vpop.permute.xlu0 %1255
        %1257 = vrot.lane.b32.xlu0 %v1154, 64
        %v1258 = vpop.permute.xlu0 %1257
        %v1267 = vsel %vm332, %v1139, %v1244
        %v1268 = vsel %vm332, %v1140, %v1246
        %v1269 = vsel %vm332, %v1141, %v1248
        %v1270 = vsel %vm332, %v1142, %v1250
        %v1271 = vsel %vm332, %v1143, %v1252
        %v1272 = vsel %vm332, %v1144, %v1254
        %v1273 = vsel %vm332, %v1145, %v1256
        %v1274 = vsel %vm332, %v1146, %v1258
        %1275 = vrot.lane.b32.xlu0 %v375, 96
        %v1276 = vpop.permute.xlu0 %1275
        %1277 = vrot.lane.b32.xlu0 %v378, 96
        %v1278 = vpop.permute.xlu0 %1277
        %1279 = vrot.lane.b32.xlu0 %v381, 96
        %v1280 = vpop.permute.xlu0 %1279
        %1281 = vrot.lane.b32.xlu0 %v384, 96
        %v1282 = vpop.permute.xlu0 %1281
        %1283 = vrot.lane.b32.xlu0 %v387, 96
        %v1284 = vpop.permute.xlu0 %1283
        %1285 = vrot.lane.b32.xlu0 %v390, 96
        %v1286 = vpop.permute.xlu0 %1285
        %1287 = vrot.lane.b32.xlu0 %v393, 96
        %v1288 = vpop.permute.xlu0 %1287
        %1289 = vrot.lane.b32.xlu0 %v396, 96
        %v1290 = vpop.permute.xlu0 %1289
        %1291 = vrot.lane.b32.xlu0 %v1220, 96
        %v1292 = vpop.permute.xlu0 %1291
        %1293 = vrot.lane.b32.xlu0 %v1222, 96
        %v1294 = vpop.permute.xlu0 %1293
        %1295 = vrot.lane.b32.xlu0 %v1224, 96
        %v1296 = vpop.permute.xlu0 %1295
        %1297 = vrot.lane.b32.xlu0 %v1226, 96
        %v1298 = vpop.permute.xlu0 %1297
        %1299 = vrot.lane.b32.xlu0 %v1228, 96
        %v1300 = vpop.permute.xlu0 %1299
        %1301 = vrot.lane.b32.xlu0 %v1230, 96
        %v1302 = vpop.permute.xlu0 %1301
        %1303 = vrot.lane.b32.xlu0 %v1232, 96
        %v1304 = vpop.permute.xlu0 %1303
        %1305 = vrot.lane.b32.xlu0 %v1234, 96
        %v1306 = vpop.permute.xlu0 %1305
        %1323 = vmatpush.msra.mxu0 %v1306
        %1324 = vmatpush.msra.mxu0 %v1304
        %1325 = vmatpush.msra.mxu0 %v1302
        %1326 = vmatpush.msra.mxu0 %v1300
        %1327 = vmatpush.msra.mxu0 %v1298
        %1328 = vmatpush.msra.mxu0 %v1296
        %1329 = vmatpush.msra.mxu0 %v1294
        %1330 = vmatpush.msra.mxu0 %v1292
        %1331 = vmatpush.msra.mxu0 %v1290
        %1332 = vmatpush.msra.mxu0 %v1288
        %1333 = vmatpush.msra.mxu0 %v1286
        %1334 = vmatpush.msra.mxu0 %v1284
        %1335 = vmatpush.msra.mxu0 %v1282
        %1336 = vmatpush.msra.mxu0 %v1280
        %1337 = vmatpush.msra.mxu0 %v1278
        %1338 = vmatpush.msra.mxu0 %v1276
        %1339 = vmatmul.f32.gmra.mxu0 %v1267
        %v1340 = vpop.f32.mrf.mxu0
        %v1341 = vadd.f32 0.0, %v1340
        %1342 = vmatmul.f32.gmra.mxu0 %v1268
        %v1343 = vpop.f32.mrf.mxu0
        %v1344 = vadd.f32 0.0, %v1343
        %1345 = vmatmul.f32.gmra.mxu0 %v1269
        %v1346 = vpop.f32.mrf.mxu0
        %v1347 = vadd.f32 0.0, %v1346
        %1348 = vmatmul.f32.gmra.mxu0 %v1270
        %v1349 = vpop.f32.mrf.mxu0
        %v1350 = vadd.f32 0.0, %v1349
        %1351 = vmatmul.f32.gmra.mxu0 %v1271
        %v1352 = vpop.f32.mrf.mxu0
        %v1353 = vadd.f32 0.0, %v1352
        %1354 = vmatmul.f32.gmra.mxu0 %v1272
        %v1355 = vpop.f32.mrf.mxu0
        %v1356 = vadd.f32 0.0, %v1355
        %1357 = vmatmul.f32.gmra.mxu0 %v1273
        %v1358 = vpop.f32.mrf.mxu0
        %v1359 = vadd.f32 0.0, %v1358
        %1360 = vmatmul.f32.gmra.mxu0 %v1274
        %v1361 = vpop.f32.mrf.mxu0
        %v1362 = vadd.f32 0.0, %v1361
        %1363 = vdwg.mxu0
        %1364 = vrot.lane.b32.xlu0 %v375, 72
        %v1365 = vpop.permute.xlu0 %1364
        %1366 = vrot.lane.b32.xlu0 %v378, 72
        %v1367 = vpop.permute.xlu0 %1366
        %1368 = vrot.lane.b32.xlu0 %v381, 72
        %v1369 = vpop.permute.xlu0 %1368
        %1370 = vrot.lane.b32.xlu0 %v384, 72
        %v1371 = vpop.permute.xlu0 %1370
        %1372 = vrot.lane.b32.xlu0 %v387, 72
        %v1373 = vpop.permute.xlu0 %1372
        %1374 = vrot.lane.b32.xlu0 %v390, 72
        %v1375 = vpop.permute.xlu0 %1374
        %1376 = vrot.lane.b32.xlu0 %v393, 72
        %v1377 = vpop.permute.xlu0 %1376
        %1378 = vrot.lane.b32.xlu0 %v396, 72
        %v1379 = vpop.permute.xlu0 %1378
        %v1388 = vsel %vm511, %v1365, %v1156
        %v1389 = vsel %vm511, %v1367, %v1158
        %v1390 = vsel %vm511, %v1369, %v1160
        %v1391 = vsel %vm511, %v1371, %v1162
        %v1392 = vsel %vm511, %v1373, %v1164
        %v1393 = vsel %vm511, %v1375, %v1166
        %v1394 = vsel %vm511, %v1377, %v1168
        %v1395 = vsel %vm511, %v1379, %v1170
        %1396 = vrot.lane.b32.xlu0 %v375, 80
        %v1397 = vpop.permute.xlu0 %1396
        %1398 = vrot.lane.b32.xlu0 %v378, 80
        %v1399 = vpop.permute.xlu0 %1398
        %1400 = vrot.lane.b32.xlu0 %v381, 80
        %v1401 = vpop.permute.xlu0 %1400
        %1402 = vrot.lane.b32.xlu0 %v384, 80
        %v1403 = vpop.permute.xlu0 %1402
        %1404 = vrot.lane.b32.xlu0 %v387, 80
        %v1405 = vpop.permute.xlu0 %1404
        %1406 = vrot.lane.b32.xlu0 %v390, 80
        %v1407 = vpop.permute.xlu0 %1406
        %1408 = vrot.lane.b32.xlu0 %v393, 80
        %v1409 = vpop.permute.xlu0 %1408
        %1410 = vrot.lane.b32.xlu0 %v396, 80
        %v1411 = vpop.permute.xlu0 %1410
        %1412 = vrot.lane.b32.xlu0 %v375, 64
        %v1413 = vpop.permute.xlu0 %1412
        %1414 = vrot.lane.b32.xlu0 %v378, 64
        %v1415 = vpop.permute.xlu0 %1414
        %1416 = vrot.lane.b32.xlu0 %v381, 64
        %v1417 = vpop.permute.xlu0 %1416
        %1418 = vrot.lane.b32.xlu0 %v384, 64
        %v1419 = vpop.permute.xlu0 %1418
        %1420 = vrot.lane.b32.xlu0 %v387, 64
        %v1421 = vpop.permute.xlu0 %1420
        %1422 = vrot.lane.b32.xlu0 %v390, 64
        %v1423 = vpop.permute.xlu0 %1422
        %1424 = vrot.lane.b32.xlu0 %v393, 64
        %v1425 = vpop.permute.xlu0 %1424
        %1426 = vrot.lane.b32.xlu0 %v396, 64
        %v1427 = vpop.permute.xlu0 %1426
        %v1428 = vsel %vm536, %v1397, 0
        %v1430 = vsel %vm536, %v1399, 0
        %v1432 = vsel %vm536, %v1401, 0
        %v1434 = vsel %vm536, %v1403, 0
        %v1436 = vsel %vm536, %v1405, 0
        %v1438 = vsel %vm536, %v1407, 0
        %v1440 = vsel %vm536, %v1409, 0
        %v1442 = vsel %vm536, %v1411, 0
        %v1444 = vsel %vm536, %v1413, 0
        %v1446 = vsel %vm536, %v1415, 0
        %v1448 = vsel %vm536, %v1417, 0
        %v1450 = vsel %vm536, %v1419, 0
        %v1452 = vsel %vm536, %v1421, 0
        %v1454 = vsel %vm536, %v1423, 0
        %v1456 = vsel %vm536, %v1425, 0
        %v1458 = vsel %vm536, %v1427, 0
        %1460 = vmatpush.xpose.msra.mxu0 0.0
        %1461 = vmatpush.xpose.msra.mxu0 0.0
        %1462 = vmatpush.xpose.msra.mxu0 0.0
        %1463 = vmatpush.xpose.msra.mxu0 0.0
        %1464 = vmatpush.xpose.msra.mxu0 0.0
        %1465 = vmatpush.xpose.msra.mxu0 0.0
        %1466 = vmatpush.xpose.msra.mxu0 0.0
        %1467 = vmatpush.xpose.msra.mxu0 0.0
        %1468 = vmatpush.xpose.msra.mxu0 %v1458
        %1469 = vmatpush.xpose.msra.mxu0 %v1456
        %1470 = vmatpush.xpose.msra.mxu0 %v1454
        %1471 = vmatpush.xpose.msra.mxu0 %v1452
        %1472 = vmatpush.xpose.msra.mxu0 %v1450
        %1473 = vmatpush.xpose.msra.mxu0 %v1448
        %1474 = vmatpush.xpose.msra.mxu0 %v1446
        %1475 = vmatpush.xpose.msra.mxu0 %v1444
        %1476 = vmatmul.f32.gmra.mxu0 %v1428
        %v1477 = vpop.f32.mrf.mxu0
        %v1478 = vadd.f32 0.0, %v1477
        %1479 = vmatmul.f32.gmra.mxu0 %v1430
        %v1480 = vpop.f32.mrf.mxu0
        %v1481 = vadd.f32 0.0, %v1480
        %1482 = vmatmul.f32.gmra.mxu0 %v1432
        %v1483 = vpop.f32.mrf.mxu0
        %v1484 = vadd.f32 0.0, %v1483
        %1485 = vmatmul.f32.gmra.mxu0 %v1434
        %v1486 = vpop.f32.mrf.mxu0
        %v1487 = vadd.f32 0.0, %v1486
        %1488 = vmatmul.f32.gmra.mxu0 %v1436
        %v1489 = vpop.f32.mrf.mxu0
        %v1490 = vadd.f32 0.0, %v1489
        %1491 = vmatmul.f32.gmra.mxu0 %v1438
        %v1492 = vpop.f32.mrf.mxu0
        %v1493 = vadd.f32 0.0, %v1492
        %1494 = vmatmul.f32.gmra.mxu0 %v1440
        %v1495 = vpop.f32.mrf.mxu0
        %v1496 = vadd.f32 0.0, %v1495
        %1497 = vmatmul.f32.gmra.mxu0 %v1442
        %v1498 = vpop.f32.mrf.mxu0
        %v1499 = vadd.f32 0.0, %v1498
        %1500 = vdwg.mxu0
        %v1502 = vsel %vm536, %v1388, 0
        %v1505 = vsel %vm536, %v1389, 0
        %v1508 = vsel %vm536, %v1390, 0
        %v1511 = vsel %vm536, %v1391, 0
        %v1514 = vsel %vm536, %v1392, 0
        %v1517 = vsel %vm536, %v1393, 0
        %v1520 = vsel %vm536, %v1394, 0
        %v1523 = vsel %vm536, %v1395, 0
        %1525 = vmatpush.xpose.msra.mxu0 0.0
        %1526 = vmatpush.xpose.msra.mxu0 0.0
        %1527 = vmatpush.xpose.msra.mxu0 0.0
        %1528 = vmatpush.xpose.msra.mxu0 0.0
        %1529 = vmatpush.xpose.msra.mxu0 0.0
        %1530 = vmatpush.xpose.msra.mxu0 0.0
        %1531 = vmatpush.xpose.msra.mxu0 0.0
        %1532 = vmatpush.xpose.msra.mxu0 0.0
        %1533 = vmatpush.xpose.msra.mxu0 %v1458
        %1534 = vmatpush.xpose.msra.mxu0 %v1456
        %1535 = vmatpush.xpose.msra.mxu0 %v1454
        %1536 = vmatpush.xpose.msra.mxu0 %v1452
        %1537 = vmatpush.xpose.msra.mxu0 %v1450
        %1538 = vmatpush.xpose.msra.mxu0 %v1448
        %1539 = vmatpush.xpose.msra.mxu0 %v1446
        %1540 = vmatpush.xpose.msra.mxu0 %v1444
        %1541 = vmatmul.f32.gmra.mxu0 %v1502
        %v1542 = vpop.f32.mrf.mxu0
        %v1543 = vadd.f32 0.0, %v1542
        %1544 = vmatmul.f32.gmra.mxu0 %v1505
        %v1545 = vpop.f32.mrf.mxu0
        %v1546 = vadd.f32 0.0, %v1545
        %1547 = vmatmul.f32.gmra.mxu0 %v1508
        %v1548 = vpop.f32.mrf.mxu0
        %v1549 = vadd.f32 0.0, %v1548
        %1550 = vmatmul.f32.gmra.mxu0 %v1511
        %v1551 = vpop.f32.mrf.mxu0
        %v1552 = vadd.f32 0.0, %v1551
        %1553 = vmatmul.f32.gmra.mxu0 %v1514
        %v1554 = vpop.f32.mrf.mxu0
        %v1555 = vadd.f32 0.0, %v1554
        %1556 = vmatmul.f32.gmra.mxu0 %v1517
        %v1557 = vpop.f32.mrf.mxu0
        %v1558 = vadd.f32 0.0, %v1557
        %1559 = vmatmul.f32.gmra.mxu0 %v1520
        %v1560 = vpop.f32.mrf.mxu0
        %v1561 = vadd.f32 0.0, %v1560
        %1562 = vmatmul.f32.gmra.mxu0 %v1523
        %v1563 = vpop.f32.mrf.mxu0
        %v1564 = vadd.f32 0.0, %v1563
        %1565 = vdwg.mxu0
        %v1566 = vmul.f32 %v1478, 0.35355338
        %v1567 = vmul.f32 %v1481, 0.35355338
        %v1568 = vmul.f32 %v1484, 0.35355338
        %v1569 = vmul.f32 %v1487, 0.35355338
        %v1570 = vmul.f32 %v1490, 0.35355338
        %v1571 = vmul.f32 %v1493, 0.35355338
        %v1572 = vmul.f32 %v1496, 0.35355338
        %v1573 = vmul.f32 %v1499, 0.35355338
        %v1574 = vadd.f32 %v1566, %v308
        %v1575 = vadd.f32 %v1567, %v309
        %v1576 = vadd.f32 %v1568, %v310
        %v1577 = vadd.f32 %v1569, %v311
        %v1578 = vadd.f32 %v1570, %v312
        %v1579 = vadd.f32 %v1571, %v313
        %v1580 = vadd.f32 %v1572, %v314
        %v1581 = vadd.f32 %v1573, %v315
        %v1582 = vmul.f32 %v1543, 0.35355338
        %v1583 = vmul.f32 %v1546, 0.35355338
        %v1584 = vmul.f32 %v1549, 0.35355338
        %v1585 = vmul.f32 %v1552, 0.35355338
        %v1586 = vmul.f32 %v1555, 0.35355338
        %v1587 = vmul.f32 %v1558, 0.35355338
        %v1588 = vmul.f32 %v1561, 0.35355338
        %v1589 = vmul.f32 %v1564, 0.35355338
        %v1590 = vmul.f32 %v1574, %v1574
        %v1591 = vmul.f32 %v1575, %v1575
        %v1592 = vmul.f32 %v1576, %v1576
        %v1593 = vmul.f32 %v1577, %v1577
        %v1594 = vmul.f32 %v1578, %v1578
        %v1595 = vmul.f32 %v1579, %v1579
        %v1596 = vmul.f32 %v1580, %v1580
        %v1597 = vmul.f32 %v1581, %v1581
        %v1598 = vmul.f32 %v1582, %v1582
        %v1599 = vmul.f32 %v1583, %v1583
        %v1600 = vmul.f32 %v1584, %v1584
        %v1601 = vmul.f32 %v1585, %v1585
        %v1602 = vmul.f32 %v1586, %v1586
        %v1603 = vmul.f32 %v1587, %v1587
        %v1604 = vmul.f32 %v1588, %v1588
        %v1605 = vmul.f32 %v1589, %v1589
        %v1606 = vadd.f32 %v1590, %v1598
        %v1607 = vadd.f32 %v1591, %v1599
        %v1608 = vadd.f32 %v1592, %v1600
        %v1609 = vadd.f32 %v1593, %v1601
        %v1610 = vadd.f32 %v1594, %v1602
        %v1611 = vadd.f32 %v1595, %v1603
        %v1612 = vadd.f32 %v1596, %v1604
        %v1613 = vadd.f32 %v1597, %v1605
        %v1614 = vrsqrt.pop %v1606
        %v1615 = vmul.f32 %v1614, %v1606
        %v1616 = vmul.f32 %v1615, %v1614
        %v1617 = vmul.f32 0.5, %v1616
        %v1618 = vsub.f32 1.5, %v1617
        %v1619 = vmul.f32 %v1614, %v1618
        %v1620 = vmul.f32 %v1606, %v1619
        %vm1621 = vcmp.eq.f32.partialorder %v1606, inf
        %v1622 = vsel %vm1621, %v1606, %v1620
        %vm1623 = vcmp.eq.f32.partialorder %v1606, 0.0
        %v1624 = vand.u32 %v1606, 2147483648
        %v1625 = vsel %vm1623, %v1624, %v1622
        %v1626 = vrsqrt.pop %v1607
        %v1627 = vmul.f32 %v1626, %v1607
        %v1628 = vmul.f32 %v1627, %v1626
        %v1629 = vmul.f32 0.5, %v1628
        %v1630 = vsub.f32 1.5, %v1629
        %v1631 = vmul.f32 %v1626, %v1630
        %v1632 = vmul.f32 %v1607, %v1631
        %vm1633 = vcmp.eq.f32.partialorder %v1607, inf
        %v1634 = vsel %vm1633, %v1607, %v1632
        %vm1635 = vcmp.eq.f32.partialorder %v1607, 0.0
        %v1636 = vand.u32 %v1607, 2147483648
        %v1637 = vsel %vm1635, %v1636, %v1634
        %v1638 = vrsqrt.pop %v1608
        %v1639 = vmul.f32 %v1638, %v1608
        %v1640 = vmul.f32 %v1639, %v1638
        %v1641 = vmul.f32 0.5, %v1640
        %v1642 = vsub.f32 1.5, %v1641
        %v1643 = vmul.f32 %v1638, %v1642
        %v1644 = vmul.f32 %v1608, %v1643
        %vm1645 = vcmp.eq.f32.partialorder %v1608, inf
        %v1646 = vsel %vm1645, %v1608, %v1644
        %vm1647 = vcmp.eq.f32.partialorder %v1608, 0.0
        %v1648 = vand.u32 %v1608, 2147483648
        %v1649 = vsel %vm1647, %v1648, %v1646
        %v1650 = vrsqrt.pop %v1609
        %v1651 = vmul.f32 %v1650, %v1609
        %v1652 = vmul.f32 %v1651, %v1650
        %v1653 = vmul.f32 0.5, %v1652
        %v1654 = vsub.f32 1.5, %v1653
        %v1655 = vmul.f32 %v1650, %v1654
        %v1656 = vmul.f32 %v1609, %v1655
        %vm1657 = vcmp.eq.f32.partialorder %v1609, inf
        %v1658 = vsel %vm1657, %v1609, %v1656
        %vm1659 = vcmp.eq.f32.partialorder %v1609, 0.0
        %v1660 = vand.u32 %v1609, 2147483648
        %v1661 = vsel %vm1659, %v1660, %v1658
        %v1662 = vrsqrt.pop %v1610
        %v1663 = vmul.f32 %v1662, %v1610
        %v1664 = vmul.f32 %v1663, %v1662
        %v1665 = vmul.f32 0.5, %v1664
        %v1666 = vsub.f32 1.5, %v1665
        %v1667 = vmul.f32 %v1662, %v1666
        %v1668 = vmul.f32 %v1610, %v1667
        %vm1669 = vcmp.eq.f32.partialorder %v1610, inf
        %v1670 = vsel %vm1669, %v1610, %v1668
        %vm1671 = vcmp.eq.f32.partialorder %v1610, 0.0
        %v1672 = vand.u32 %v1610, 2147483648
        %v1673 = vsel %vm1671, %v1672, %v1670
        %v1674 = vrsqrt.pop %v1611
        %v1675 = vmul.f32 %v1674, %v1611
        %v1676 = vmul.f32 %v1675, %v1674
        %v1677 = vmul.f32 0.5, %v1676
        %v1678 = vsub.f32 1.5, %v1677
        %v1679 = vmul.f32 %v1674, %v1678
        %v1680 = vmul.f32 %v1611, %v1679
        %vm1681 = vcmp.eq.f32.partialorder %v1611, inf
        %v1682 = vsel %vm1681, %v1611, %v1680
        %vm1683 = vcmp.eq.f32.partialorder %v1611, 0.0
        %v1684 = vand.u32 %v1611, 2147483648
        %v1685 = vsel %vm1683, %v1684, %v1682
        %v1686 = vrsqrt.pop %v1612
        %v1687 = vmul.f32 %v1686, %v1612
        %v1688 = vmul.f32 %v1687, %v1686
        %v1689 = vmul.f32 0.5, %v1688
        %v1690 = vsub.f32 1.5, %v1689
        %v1691 = vmul.f32 %v1686, %v1690
        %v1692 = vmul.f32 %v1612, %v1691
        %vm1693 = vcmp.eq.f32.partialorder %v1612, inf
        %v1694 = vsel %vm1693, %v1612, %v1692
        %vm1695 = vcmp.eq.f32.partialorder %v1612, 0.0
        %v1696 = vand.u32 %v1612, 2147483648
        %v1697 = vsel %vm1695, %v1696, %v1694
        %v1698 = vrsqrt.pop %v1613
        %v1699 = vmul.f32 %v1698, %v1613
        %v1700 = vmul.f32 %v1699, %v1698
        %v1701 = vmul.f32 0.5, %v1700
        %v1702 = vsub.f32 1.5, %v1701
        %v1703 = vmul.f32 %v1698, %v1702
        %v1704 = vmul.f32 %v1613, %v1703
        %vm1705 = vcmp.eq.f32.partialorder %v1613, inf
        %v1706 = vsel %vm1705, %v1613, %v1704
        %vm1707 = vcmp.eq.f32.partialorder %v1613, 0.0
        %v1708 = vand.u32 %v1613, 2147483648
        %v1709 = vsel %vm1707, %v1708, %v1706
        %v1710 = vsel %vm332, %v1625, -inf
        %1711 = vmax.xlane.f32.xlu0 %v1710
        %v1712 = vpop.xlane.xlu0 %1711
        %v1713 = vsel %vm332, %v1637, -inf
        %1714 = vmax.xlane.f32.xlu0 %v1713
        %v1715 = vpop.xlane.xlu0 %1714
        %v1716 = vsel %vm332, %v1649, -inf
        %1717 = vmax.xlane.f32.xlu0 %v1716
        %v1718 = vpop.xlane.xlu0 %1717
        %v1719 = vsel %vm332, %v1661, -inf
        %1720 = vmax.xlane.f32.xlu0 %v1719
        %v1721 = vpop.xlane.xlu0 %1720
        %v1722 = vsel %vm332, %v1673, -inf
        %1723 = vmax.xlane.f32.xlu0 %v1722
        %v1724 = vpop.xlane.xlu0 %1723
        %v1725 = vsel %vm332, %v1685, -inf
        %1726 = vmax.xlane.f32.xlu0 %v1725
        %v1727 = vpop.xlane.xlu0 %1726
        %v1728 = vsel %vm332, %v1697, -inf
        %1729 = vmax.xlane.f32.xlu0 %v1728
        %v1730 = vpop.xlane.xlu0 %1729
        %v1731 = vsel %vm332, %v1709, -inf
        %1732 = vmax.xlane.f32.xlu0 %v1731
        %v1733 = vpop.xlane.xlu0 %1732
        %v1734 = vsub.f32 %v1625, %v1712
        %v1735 = vsub.f32 %v1637, %v1715
        %v1736 = vsub.f32 %v1649, %v1718
        %v1737 = vsub.f32 %v1661, %v1721
        %v1738 = vsub.f32 %v1673, %v1724
        %v1739 = vsub.f32 %v1685, %v1727
        %v1740 = vsub.f32 %v1697, %v1730
        %v1741 = vsub.f32 %v1709, %v1733
        %v1742 = vmul.f32 %v1734, 1.442695
        %v1743 = vpow.pop %v1742
        %v1744 = vmul.f32 %v1735, 1.442695
        %v1745 = vpow.pop %v1744
        %v1746 = vmul.f32 %v1736, 1.442695
        %v1747 = vpow.pop %v1746
        %v1748 = vmul.f32 %v1737, 1.442695
        %v1749 = vpow.pop %v1748
        %v1750 = vmul.f32 %v1738, 1.442695
        %v1751 = vpow.pop %v1750
        %v1752 = vmul.f32 %v1739, 1.442695
        %v1753 = vpow.pop %v1752
        %v1754 = vmul.f32 %v1740, 1.442695
        %v1755 = vpow.pop %v1754
        %v1756 = vmul.f32 %v1741, 1.442695
        %v1757 = vpow.pop %v1756
        %v1758 = vsel %vm332, %v1743, 0.0
        %1759 = vadd.xlane.f32.xlu0 %v1758
        %v1760 = vpop.xlane.xlu0 %1759
        %v1761 = vsel %vm332, %v1745, 0.0
        %1762 = vadd.xlane.f32.xlu0 %v1761
        %v1763 = vpop.xlane.xlu0 %1762
        %v1764 = vsel %vm332, %v1747, 0.0
        %1765 = vadd.xlane.f32.xlu0 %v1764
        %v1766 = vpop.xlane.xlu0 %1765
        %v1767 = vsel %vm332, %v1749, 0.0
        %1768 = vadd.xlane.f32.xlu0 %v1767
        %v1769 = vpop.xlane.xlu0 %1768
        %v1770 = vsel %vm332, %v1751, 0.0
        %1771 = vadd.xlane.f32.xlu0 %v1770
        %v1772 = vpop.xlane.xlu0 %1771
        %v1773 = vsel %vm332, %v1753, 0.0
        %1774 = vadd.xlane.f32.xlu0 %v1773
        %v1775 = vpop.xlane.xlu0 %1774
        %v1776 = vsel %vm332, %v1755, 0.0
        %1777 = vadd.xlane.f32.xlu0 %v1776
        %v1778 = vpop.xlane.xlu0 %1777
        %v1779 = vsel %vm332, %v1757, 0.0
        %1780 = vadd.xlane.f32.xlu0 %v1779
        %v1781 = vpop.xlane.xlu0 %1780
        %v1782 = vrcp.pop %v1760
        %v1783 = vmul.f32 %v1760, %v1782
        %v1784 = vsub.f32 1.0, %v1783
        %v1785 = vmul.f32 %v1782, %v1784
        %v1786 = vadd.f32 %v1782, %v1785
        %vm1787 = vweird.f32 %v1760
        %vm1788 = vweird.f32 %v1782
        %vm1789 = vmor %vm1787, %vm1788
        %v1790 = vsel %vm1789, %v1782, %v1786
        %v1791 = vand.u32 2147483647, %v1760
        %vm1792 = vcmp.eq.f32.partialorder %v1791, 8.507059e+37
        %v1793 = vand.u32 %v1760, 2147483648
        %v1794 = vor.u32 1.1754944e-38, %v1793
        %v1795 = vsel %vm1792, %v1794, %v1790
        %v1796 = vrcp.pop %v1763
        %v1797 = vmul.f32 %v1763, %v1796
        %v1798 = vsub.f32 1.0, %v1797
        %v1799 = vmul.f32 %v1796, %v1798
        %v1800 = vadd.f32 %v1796, %v1799
        %vm1801 = vweird.f32 %v1763
        %vm1802 = vweird.f32 %v1796
        %vm1803 = vmor %vm1801, %vm1802
        %v1804 = vsel %vm1803, %v1796, %v1800
        %v1805 = vand.u32 2147483647, %v1763
        %vm1806 = vcmp.eq.f32.partialorder %v1805, 8.507059e+37
        %v1807 = vand.u32 %v1763, 2147483648
        %v1808 = vor.u32 1.1754944e-38, %v1807
        %v1809 = vsel %vm1806, %v1808, %v1804
        %v1810 = vrcp.pop %v1766
        %v1811 = vmul.f32 %v1766, %v1810
        %v1812 = vsub.f32 1.0, %v1811
        %v1813 = vmul.f32 %v1810, %v1812
        %v1814 = vadd.f32 %v1810, %v1813
        %vm1815 = vweird.f32 %v1766
        %vm1816 = vweird.f32 %v1810
        %vm1817 = vmor %vm1815, %vm1816
        %v1818 = vsel %vm1817, %v1810, %v1814
        %v1819 = vand.u32 2147483647, %v1766
        %vm1820 = vcmp.eq.f32.partialorder %v1819, 8.507059e+37
        %v1821 = vand.u32 %v1766, 2147483648
        %v1822 = vor.u32 1.1754944e-38, %v1821
        %v1823 = vsel %vm1820, %v1822, %v1818
        %v1824 = vrcp.pop %v1769
        %v1825 = vmul.f32 %v1769, %v1824
        %v1826 = vsub.f32 1.0, %v1825
        %v1827 = vmul.f32 %v1824, %v1826
        %v1828 = vadd.f32 %v1824, %v1827
        %vm1829 = vweird.f32 %v1769
        %vm1830 = vweird.f32 %v1824
        %vm1831 = vmor %vm1829, %vm1830
        %v1832 = vsel %vm1831, %v1824, %v1828
        %v1833 = vand.u32 2147483647, %v1769
        %vm1834 = vcmp.eq.f32.partialorder %v1833, 8.507059e+37
        %v1835 = vand.u32 %v1769, 2147483648
        %v1836 = vor.u32 1.1754944e-38, %v1835
        %v1837 = vsel %vm1834, %v1836, %v1832
        %v1838 = vrcp.pop %v1772
        %v1839 = vmul.f32 %v1772, %v1838
        %v1840 = vsub.f32 1.0, %v1839
        %v1841 = vmul.f32 %v1838, %v1840
        %v1842 = vadd.f32 %v1838, %v1841
        %vm1843 = vweird.f32 %v1772
        %vm1844 = vweird.f32 %v1838
        %vm1845 = vmor %vm1843, %vm1844
        %v1846 = vsel %vm1845, %v1838, %v1842
        %v1847 = vand.u32 2147483647, %v1772
        %vm1848 = vcmp.eq.f32.partialorder %v1847, 8.507059e+37
        %v1849 = vand.u32 %v1772, 2147483648
        %v1850 = vor.u32 1.1754944e-38, %v1849
        %v1851 = vsel %vm1848, %v1850, %v1846
        %v1852 = vrcp.pop %v1775
        %v1853 = vmul.f32 %v1775, %v1852
        %v1854 = vsub.f32 1.0, %v1853
        %v1855 = vmul.f32 %v1852, %v1854
        %v1856 = vadd.f32 %v1852, %v1855
        %vm1857 = vweird.f32 %v1775
        %vm1858 = vweird.f32 %v1852
        %vm1859 = vmor %vm1857, %vm1858
        %v1860 = vsel %vm1859, %v1852, %v1856
        %v1861 = vand.u32 2147483647, %v1775
        %vm1862 = vcmp.eq.f32.partialorder %v1861, 8.507059e+37
        %v1863 = vand.u32 %v1775, 2147483648
        %v1864 = vor.u32 1.1754944e-38, %v1863
        %v1865 = vsel %vm1862, %v1864, %v1860
        %v1866 = vrcp.pop %v1778
        %v1867 = vmul.f32 %v1778, %v1866
        %v1868 = vsub.f32 1.0, %v1867
        %v1869 = vmul.f32 %v1866, %v1868
        %v1870 = vadd.f32 %v1866, %v1869
        %vm1871 = vweird.f32 %v1778
        %vm1872 = vweird.f32 %v1866
        %vm1873 = vmor %vm1871, %vm1872
        %v1874 = vsel %vm1873, %v1866, %v1870
        %v1875 = vand.u32 2147483647, %v1778
        %vm1876 = vcmp.eq.f32.partialorder %v1875, 8.507059e+37
        %v1877 = vand.u32 %v1778, 2147483648
        %v1878 = vor.u32 1.1754944e-38, %v1877
        %v1879 = vsel %vm1876, %v1878, %v1874
        %v1880 = vrcp.pop %v1781
        %v1881 = vmul.f32 %v1781, %v1880
        %v1882 = vsub.f32 1.0, %v1881
        %v1883 = vmul.f32 %v1880, %v1882
        %v1884 = vadd.f32 %v1880, %v1883
        %vm1885 = vweird.f32 %v1781
        %vm1886 = vweird.f32 %v1880
        %vm1887 = vmor %vm1885, %vm1886
        %v1888 = vsel %vm1887, %v1880, %v1884
        %v1889 = vand.u32 2147483647, %v1781
        %vm1890 = vcmp.eq.f32.partialorder %v1889, 8.507059e+37
        %v1891 = vand.u32 %v1781, 2147483648
        %v1892 = vor.u32 1.1754944e-38, %v1891
        %v1893 = vsel %vm1890, %v1892, %v1888
        %v1894 = vmul.f32 %v1743, %v1795
        %v1895 = vmul.f32 %v1745, %v1809
        %v1896 = vmul.f32 %v1747, %v1823
        %v1897 = vmul.f32 %v1749, %v1837
        %v1898 = vmul.f32 %v1751, %v1851
        %v1899 = vmul.f32 %v1753, %v1865
        %v1900 = vmul.f32 %v1755, %v1879
        %v1901 = vmul.f32 %v1757, %v1893
        %v1902 = vadd.f32 %v1625, 1e-08
        %v1903 = vadd.f32 %v1637, 1e-08
        %v1904 = vadd.f32 %v1649, 1e-08
        %v1905 = vadd.f32 %v1661, 1e-08
        %v1906 = vadd.f32 %v1673, 1e-08
        %v1907 = vadd.f32 %v1685, 1e-08
        %v1908 = vadd.f32 %v1697, 1e-08
        %v1909 = vadd.f32 %v1709, 1e-08
        %v1910 = vrcp.pop %v1902
        %v1911 = vmul.f32 %v1902, %v1910
        %v1912 = vsub.f32 1.0, %v1911
        %v1913 = vmul.f32 %v1910, %v1912
        %v1914 = vadd.f32 %v1910, %v1913
        %vm1915 = vweird.f32 %v1902
        %vm1916 = vweird.f32 %v1910
        %vm1917 = vmor %vm1915, %vm1916
        %v1918 = vsel %vm1917, %v1910, %v1914
        %v1919 = vand.u32 2147483647, %v1902
        %vm1920 = vcmp.eq.f32.partialorder %v1919, 8.507059e+37
        %v1921 = vand.u32 %v1902, 2147483648
        %v1922 = vor.u32 1.1754944e-38, %v1921
        %v1923 = vsel %vm1920, %v1922, %v1918
        %v1924 = vrcp.pop %v1903
        %v1925 = vmul.f32 %v1903, %v1924
        %v1926 = vsub.f32 1.0, %v1925
        %v1927 = vmul.f32 %v1924, %v1926
        %v1928 = vadd.f32 %v1924, %v1927
        %vm1929 = vweird.f32 %v1903
        %vm1930 = vweird.f32 %v1924
        %vm1931 = vmor %vm1929, %vm1930
        %v1932 = vsel %vm1931, %v1924, %v1928
        %v1933 = vand.u32 2147483647, %v1903
        %vm1934 = vcmp.eq.f32.partialorder %v1933, 8.507059e+37
        %v1935 = vand.u32 %v1903, 2147483648
        %v1936 = vor.u32 1.1754944e-38, %v1935
        %v1937 = vsel %vm1934, %v1936, %v1932
        %v1938 = vrcp.pop %v1904
        %v1939 = vmul.f32 %v1904, %v1938
        %v1940 = vsub.f32 1.0, %v1939
        %v1941 = vmul.f32 %v1938, %v1940
        %v1942 = vadd.f32 %v1938, %v1941
        %vm1943 = vweird.f32 %v1904
        %vm1944 = vweird.f32 %v1938
        %vm1945 = vmor %vm1943, %vm1944
        %v1946 = vsel %vm1945, %v1938, %v1942
        %v1947 = vand.u32 2147483647, %v1904
        %vm1948 = vcmp.eq.f32.partialorder %v1947, 8.507059e+37
        %v1949 = vand.u32 %v1904, 2147483648
        %v1950 = vor.u32 1.1754944e-38, %v1949
        %v1951 = vsel %vm1948, %v1950, %v1946
        %v1952 = vrcp.pop %v1905
        %v1953 = vmul.f32 %v1905, %v1952
        %v1954 = vsub.f32 1.0, %v1953
        %v1955 = vmul.f32 %v1952, %v1954
        %v1956 = vadd.f32 %v1952, %v1955
        %vm1957 = vweird.f32 %v1905
        %vm1958 = vweird.f32 %v1952
        %vm1959 = vmor %vm1957, %vm1958
        %v1960 = vsel %vm1959, %v1952, %v1956
        %v1961 = vand.u32 2147483647, %v1905
        %vm1962 = vcmp.eq.f32.partialorder %v1961, 8.507059e+37
        %v1963 = vand.u32 %v1905, 2147483648
        %v1964 = vor.u32 1.1754944e-38, %v1963
        %v1965 = vsel %vm1962, %v1964, %v1960
        %v1966 = vrcp.pop %v1906
        %v1967 = vmul.f32 %v1906, %v1966
        %v1968 = vsub.f32 1.0, %v1967
        %v1969 = vmul.f32 %v1966, %v1968
        %v1970 = vadd.f32 %v1966, %v1969
        %vm1971 = vweird.f32 %v1906
        %vm1972 = vweird.f32 %v1966
        %vm1973 = vmor %vm1971, %vm1972
        %v1974 = vsel %vm1973, %v1966, %v1970
        %v1975 = vand.u32 2147483647, %v1906
        %vm1976 = vcmp.eq.f32.partialorder %v1975, 8.507059e+37
        %v1977 = vand.u32 %v1906, 2147483648
        %v1978 = vor.u32 1.1754944e-38, %v1977
        %v1979 = vsel %vm1976, %v1978, %v1974
        %v1980 = vrcp.pop %v1907
        %v1981 = vmul.f32 %v1907, %v1980
        %v1982 = vsub.f32 1.0, %v1981
        %v1983 = vmul.f32 %v1980, %v1982
        %v1984 = vadd.f32 %v1980, %v1983
        %vm1985 = vweird.f32 %v1907
        %vm1986 = vweird.f32 %v1980
        %vm1987 = vmor %vm1985, %vm1986
        %v1988 = vsel %vm1987, %v1980, %v1984
        %v1989 = vand.u32 2147483647, %v1907
        %vm1990 = vcmp.eq.f32.partialorder %v1989, 8.507059e+37
        %v1991 = vand.u32 %v1907, 2147483648
        %v1992 = vor.u32 1.1754944e-38, %v1991
        %v1993 = vsel %vm1990, %v1992, %v1988
        %v1994 = vrcp.pop %v1908
        %v1995 = vmul.f32 %v1908, %v1994
        %v1996 = vsub.f32 1.0, %v1995
        %v1997 = vmul.f32 %v1994, %v1996
        %v1998 = vadd.f32 %v1994, %v1997
        %vm1999 = vweird.f32 %v1908
        %vm2000 = vweird.f32 %v1994
        %vm2001 = vmor %vm1999, %vm2000
        %v2002 = vsel %vm2001, %v1994, %v1998
        %v2003 = vand.u32 2147483647, %v1908
        %vm2004 = vcmp.eq.f32.partialorder %v2003, 8.507059e+37
        %v2005 = vand.u32 %v1908, 2147483648
        %v2006 = vor.u32 1.1754944e-38, %v2005
        %v2007 = vsel %vm2004, %v2006, %v2002
        %v2008 = vrcp.pop %v1909
        %v2009 = vmul.f32 %v1909, %v2008
        %v2010 = vsub.f32 1.0, %v2009
        %v2011 = vmul.f32 %v2008, %v2010
        %v2012 = vadd.f32 %v2008, %v2011
        %vm2013 = vweird.f32 %v1909
        %vm2014 = vweird.f32 %v2008
        %vm2015 = vmor %vm2013, %vm2014
        %v2016 = vsel %vm2015, %v2008, %v2012
        %v2017 = vand.u32 2147483647, %v1909
        %vm2018 = vcmp.eq.f32.partialorder %v2017, 8.507059e+37
        %v2019 = vand.u32 %v1909, 2147483648
        %v2020 = vor.u32 1.1754944e-38, %v2019
        %v2021 = vsel %vm2018, %v2020, %v2016
        %v2022 = vmul.f32 %v1894, %v1923
        %v2023 = vmul.f32 %v1895, %v1937
        %v2024 = vmul.f32 %v1896, %v1951
        %v2025 = vmul.f32 %v1897, %v1965
        %v2026 = vmul.f32 %v1898, %v1979
        %v2027 = vmul.f32 %v1899, %v1993
        %v2028 = vmul.f32 %v1900, %v2007
        %v2029 = vmul.f32 %v1901, %v2021
        %v2030 = vmul.f32 %v1574, %v2022
        %v2031 = vmul.f32 %v1575, %v2023
        %v2032 = vmul.f32 %v1576, %v2024
        %v2033 = vmul.f32 %v1577, %v2025
        %v2034 = vmul.f32 %v1578, %v2026
        %v2035 = vmul.f32 %v1579, %v2027
        %v2036 = vmul.f32 %v1580, %v2028
        %v2037 = vmul.f32 %v1581, %v2029
        %v2038 = vmul.f32 %v1582, %v2022
        %v2039 = vmul.f32 %v1583, %v2023
        %v2040 = vmul.f32 %v1584, %v2024
        %v2041 = vmul.f32 %v1585, %v2025
        %v2042 = vmul.f32 %v1586, %v2026
        %v2043 = vmul.f32 %v1587, %v2027
        %v2044 = vmul.f32 %v1588, %v2028
        %v2045 = vmul.f32 %v1589, %v2029
        %2046 = vrot.lane.b32.xlu0 %v439, 40
        %v2047 = vpop.permute.xlu0 %2046
        %2048 = vrot.lane.b32.xlu0 %v440, 40
        %v2049 = vpop.permute.xlu0 %2048
        %2050 = vrot.lane.b32.xlu0 %v441, 40
        %v2051 = vpop.permute.xlu0 %2050
        %2052 = vrot.lane.b32.xlu0 %v442, 40
        %v2053 = vpop.permute.xlu0 %2052
        %2054 = vrot.lane.b32.xlu0 %v443, 40
        %v2055 = vpop.permute.xlu0 %2054
        %2056 = vrot.lane.b32.xlu0 %v444, 40
        %v2057 = vpop.permute.xlu0 %2056
        %2058 = vrot.lane.b32.xlu0 %v445, 40
        %v2059 = vpop.permute.xlu0 %2058
        %2060 = vrot.lane.b32.xlu0 %v446, 40
        %v2061 = vpop.permute.xlu0 %2060
        %2070 = vrot.lane.b32.xlu0 %v375, 56
        %v2071 = vpop.permute.xlu0 %2070
        %2072 = vrot.lane.b32.xlu0 %v378, 56
        %v2073 = vpop.permute.xlu0 %2072
        %2074 = vrot.lane.b32.xlu0 %v381, 56
        %v2075 = vpop.permute.xlu0 %2074
        %2076 = vrot.lane.b32.xlu0 %v384, 56
        %v2077 = vpop.permute.xlu0 %2076
        %2078 = vrot.lane.b32.xlu0 %v387, 56
        %v2079 = vpop.permute.xlu0 %2078
        %2080 = vrot.lane.b32.xlu0 %v390, 56
        %v2081 = vpop.permute.xlu0 %2080
        %2082 = vrot.lane.b32.xlu0 %v393, 56
        %v2083 = vpop.permute.xlu0 %2082
        %2084 = vrot.lane.b32.xlu0 %v396, 56
        %v2085 = vpop.permute.xlu0 %2084
        %v2094 = vsel %vm511, %v2047, %v2071
        %v2095 = vsel %vm511, %v2049, %v2073
        %v2096 = vsel %vm511, %v2051, %v2075
        %v2097 = vsel %vm511, %v2053, %v2077
        %v2098 = vsel %vm511, %v2055, %v2079
        %v2099 = vsel %vm511, %v2057, %v2081
        %v2100 = vsel %vm511, %v2059, %v2083
        %v2101 = vsel %vm511, %v2061, %v2085
        %2110 = vrot.lane.b32.xlu0 %v2094, 80
        %v2111 = vpop.permute.xlu0 %2110
        %2112 = vrot.lane.b32.xlu0 %v2095, 80
        %v2113 = vpop.permute.xlu0 %2112
        %2114 = vrot.lane.b32.xlu0 %v2096, 80
        %v2115 = vpop.permute.xlu0 %2114
        %2116 = vrot.lane.b32.xlu0 %v2097, 80
        %v2117 = vpop.permute.xlu0 %2116
        %2118 = vrot.lane.b32.xlu0 %v2098, 80
        %v2119 = vpop.permute.xlu0 %2118
        %2120 = vrot.lane.b32.xlu0 %v2099, 80
        %v2121 = vpop.permute.xlu0 %2120
        %2122 = vrot.lane.b32.xlu0 %v2100, 80
        %v2123 = vpop.permute.xlu0 %2122
        %2124 = vrot.lane.b32.xlu0 %v2101, 80
        %v2125 = vpop.permute.xlu0 %2124
        %2134 = vrot.lane.b32.xlu0 %v2038, 64
        %v2135 = vpop.permute.xlu0 %2134
        %2136 = vrot.lane.b32.xlu0 %v2039, 64
        %v2137 = vpop.permute.xlu0 %2136
        %2138 = vrot.lane.b32.xlu0 %v2040, 64
        %v2139 = vpop.permute.xlu0 %2138
        %2140 = vrot.lane.b32.xlu0 %v2041, 64
        %v2141 = vpop.permute.xlu0 %2140
        %2142 = vrot.lane.b32.xlu0 %v2042, 64
        %v2143 = vpop.permute.xlu0 %2142
        %2144 = vrot.lane.b32.xlu0 %v2043, 64
        %v2145 = vpop.permute.xlu0 %2144
        %2146 = vrot.lane.b32.xlu0 %v2044, 64
        %v2147 = vpop.permute.xlu0 %2146
        %2148 = vrot.lane.b32.xlu0 %v2045, 64
        %v2149 = vpop.permute.xlu0 %2148
        %v2158 = vsel %vm332, %v2030, %v2135
        %v2159 = vsel %vm332, %v2031, %v2137
        %v2160 = vsel %vm332, %v2032, %v2139
        %v2161 = vsel %vm332, %v2033, %v2141
        %v2162 = vsel %vm332, %v2034, %v2143
        %v2163 = vsel %vm332, %v2035, %v2145
        %v2164 = vsel %vm332, %v2036, %v2147
        %v2165 = vsel %vm332, %v2037, %v2149
        %2166 = vrot.lane.b32.xlu0 %v375, 48
        %v2167 = vpop.permute.xlu0 %2166
        %2168 = vrot.lane.b32.xlu0 %v378, 48
        %v2169 = vpop.permute.xlu0 %2168
        %2170 = vrot.lane.b32.xlu0 %v381, 48
        %v2171 = vpop.permute.xlu0 %2170
        %2172 = vrot.lane.b32.xlu0 %v384, 48
        %v2173 = vpop.permute.xlu0 %2172
        %2174 = vrot.lane.b32.xlu0 %v387, 48
        %v2175 = vpop.permute.xlu0 %2174
        %2176 = vrot.lane.b32.xlu0 %v390, 48
        %v2177 = vpop.permute.xlu0 %2176
        %2178 = vrot.lane.b32.xlu0 %v393, 48
        %v2179 = vpop.permute.xlu0 %2178
        %2180 = vrot.lane.b32.xlu0 %v396, 48
        %v2181 = vpop.permute.xlu0 %2180
        %2182 = vrot.lane.b32.xlu0 %v2111, 48
        %v2183 = vpop.permute.xlu0 %2182
        %2184 = vrot.lane.b32.xlu0 %v2113, 48
        %v2185 = vpop.permute.xlu0 %2184
        %2186 = vrot.lane.b32.xlu0 %v2115, 48
        %v2187 = vpop.permute.xlu0 %2186
        %2188 = vrot.lane.b32.xlu0 %v2117, 48
        %v2189 = vpop.permute.xlu0 %2188
        %2190 = vrot.lane.b32.xlu0 %v2119, 48
        %v2191 = vpop.permute.xlu0 %2190
        %2192 = vrot.lane.b32.xlu0 %v2121, 48
        %v2193 = vpop.permute.xlu0 %2192
        %2194 = vrot.lane.b32.xlu0 %v2123, 48
        %v2195 = vpop.permute.xlu0 %2194
        %2196 = vrot.lane.b32.xlu0 %v2125, 48
        %v2197 = vpop.permute.xlu0 %2196
        %2214 = vmatpush.msra.mxu0 %v2197
        %2215 = vmatpush.msra.mxu0 %v2195
        %2216 = vmatpush.msra.mxu0 %v2193
        %2217 = vmatpush.msra.mxu0 %v2191
        %2218 = vmatpush.msra.mxu0 %v2189
        %2219 = vmatpush.msra.mxu0 %v2187
        %2220 = vmatpush.msra.mxu0 %v2185
        %2221 = vmatpush.msra.mxu0 %v2183
        %2222 = vmatpush.msra.mxu0 %v2181
        %2223 = vmatpush.msra.mxu0 %v2179
        %2224 = vmatpush.msra.mxu0 %v2177
        %2225 = vmatpush.msra.mxu0 %v2175
        %2226 = vmatpush.msra.mxu0 %v2173
        %2227 = vmatpush.msra.mxu0 %v2171
        %2228 = vmatpush.msra.mxu0 %v2169
        %2229 = vmatpush.msra.mxu0 %v2167
        %2230 = vmatmul.f32.gmra.mxu0 %v2158
        %v2231 = vpop.f32.mrf.mxu0
        %v2232 = vadd.f32 0.0, %v2231
        %2233 = vmatmul.f32.gmra.mxu0 %v2159
        %v2234 = vpop.f32.mrf.mxu0
        %v2235 = vadd.f32 0.0, %v2234
        %2236 = vmatmul.f32.gmra.mxu0 %v2160
        %v2237 = vpop.f32.mrf.mxu0
        %v2238 = vadd.f32 0.0, %v2237
        %2239 = vmatmul.f32.gmra.mxu0 %v2161
        %v2240 = vpop.f32.mrf.mxu0
        %v2241 = vadd.f32 0.0, %v2240
        %2242 = vmatmul.f32.gmra.mxu0 %v2162
        %v2243 = vpop.f32.mrf.mxu0
        %v2244 = vadd.f32 0.0, %v2243
        %2245 = vmatmul.f32.gmra.mxu0 %v2163
        %v2246 = vpop.f32.mrf.mxu0
        %v2247 = vadd.f32 0.0, %v2246
        %2248 = vmatmul.f32.gmra.mxu0 %v2164
        %v2249 = vpop.f32.mrf.mxu0
        %v2250 = vadd.f32 0.0, %v2249
        %2251 = vmatmul.f32.gmra.mxu0 %v2165
        %v2252 = vpop.f32.mrf.mxu0
        %v2253 = vadd.f32 0.0, %v2252
        %2254 = vdwg.mxu0
        %2255 = vrot.lane.b32.xlu0 %v375, 24
        %v2256 = vpop.permute.xlu0 %2255
        %2257 = vrot.lane.b32.xlu0 %v378, 24
        %v2258 = vpop.permute.xlu0 %2257
        %2259 = vrot.lane.b32.xlu0 %v381, 24
        %v2260 = vpop.permute.xlu0 %2259
        %2261 = vrot.lane.b32.xlu0 %v384, 24
        %v2262 = vpop.permute.xlu0 %2261
        %2263 = vrot.lane.b32.xlu0 %v387, 24
        %v2264 = vpop.permute.xlu0 %2263
        %2265 = vrot.lane.b32.xlu0 %v390, 24
        %v2266 = vpop.permute.xlu0 %2265
        %2267 = vrot.lane.b32.xlu0 %v393, 24
        %v2268 = vpop.permute.xlu0 %2267
        %2269 = vrot.lane.b32.xlu0 %v396, 24
        %v2270 = vpop.permute.xlu0 %2269
        %v2279 = vsel %vm511, %v2256, %v2047
        %v2280 = vsel %vm511, %v2258, %v2049
        %v2281 = vsel %vm511, %v2260, %v2051
        %v2282 = vsel %vm511, %v2262, %v2053
        %v2283 = vsel %vm511, %v2264, %v2055
        %v2284 = vsel %vm511, %v2266, %v2057
        %v2285 = vsel %vm511, %v2268, %v2059
        %v2286 = vsel %vm511, %v2270, %v2061
        %2287 = vrot.lane.b32.xlu0 %v375, 32
        %v2288 = vpop.permute.xlu0 %2287
        %2289 = vrot.lane.b32.xlu0 %v378, 32
        %v2290 = vpop.permute.xlu0 %2289
        %2291 = vrot.lane.b32.xlu0 %v381, 32
        %v2292 = vpop.permute.xlu0 %2291
        %2293 = vrot.lane.b32.xlu0 %v384, 32
        %v2294 = vpop.permute.xlu0 %2293
        %2295 = vrot.lane.b32.xlu0 %v387, 32
        %v2296 = vpop.permute.xlu0 %2295
        %2297 = vrot.lane.b32.xlu0 %v390, 32
        %v2298 = vpop.permute.xlu0 %2297
        %2299 = vrot.lane.b32.xlu0 %v393, 32
        %v2300 = vpop.permute.xlu0 %2299
        %2301 = vrot.lane.b32.xlu0 %v396, 32
        %v2302 = vpop.permute.xlu0 %2301
        %2303 = vrot.lane.b32.xlu0 %v375, 16
        %v2304 = vpop.permute.xlu0 %2303
        %2305 = vrot.lane.b32.xlu0 %v378, 16
        %v2306 = vpop.permute.xlu0 %2305
        %2307 = vrot.lane.b32.xlu0 %v381, 16
        %v2308 = vpop.permute.xlu0 %2307
        %2309 = vrot.lane.b32.xlu0 %v384, 16
        %v2310 = vpop.permute.xlu0 %2309
        %2311 = vrot.lane.b32.xlu0 %v387, 16
        %v2312 = vpop.permute.xlu0 %2311
        %2313 = vrot.lane.b32.xlu0 %v390, 16
        %v2314 = vpop.permute.xlu0 %2313
        %2315 = vrot.lane.b32.xlu0 %v393, 16
        %v2316 = vpop.permute.xlu0 %2315
        %2317 = vrot.lane.b32.xlu0 %v396, 16
        %v2318 = vpop.permute.xlu0 %2317
        %v2319 = vsel %vm536, %v2288, 0
        %v2321 = vsel %vm536, %v2290, 0
        %v2323 = vsel %vm536, %v2292, 0
        %v2325 = vsel %vm536, %v2294, 0
        %v2327 = vsel %vm536, %v2296, 0
        %v2329 = vsel %vm536, %v2298, 0
        %v2331 = vsel %vm536, %v2300, 0
        %v2333 = vsel %vm536, %v2302, 0
        %v2335 = vsel %vm536, %v2304, 0
        %v2337 = vsel %vm536, %v2306, 0
        %v2339 = vsel %vm536, %v2308, 0
        %v2341 = vsel %vm536, %v2310, 0
        %v2343 = vsel %vm536, %v2312, 0
        %v2345 = vsel %vm536, %v2314, 0
        %v2347 = vsel %vm536, %v2316, 0
        %v2349 = vsel %vm536, %v2318, 0
        %2351 = vmatpush.xpose.msra.mxu0 0.0
        %2352 = vmatpush.xpose.msra.mxu0 0.0
        %2353 = vmatpush.xpose.msra.mxu0 0.0
        %2354 = vmatpush.xpose.msra.mxu0 0.0
        %2355 = vmatpush.xpose.msra.mxu0 0.0
        %2356 = vmatpush.xpose.msra.mxu0 0.0
        %2357 = vmatpush.xpose.msra.mxu0 0.0
        %2358 = vmatpush.xpose.msra.mxu0 0.0
        %2359 = vmatpush.xpose.msra.mxu0 %v2349
        %2360 = vmatpush.xpose.msra.mxu0 %v2347
        %2361 = vmatpush.xpose.msra.mxu0 %v2345
        %2362 = vmatpush.xpose.msra.mxu0 %v2343
        %2363 = vmatpush.xpose.msra.mxu0 %v2341
        %2364 = vmatpush.xpose.msra.mxu0 %v2339
        %2365 = vmatpush.xpose.msra.mxu0 %v2337
        %2366 = vmatpush.xpose.msra.mxu0 %v2335
        %2367 = vmatmul.f32.gmra.mxu0 %v2319
        %v2368 = vpop.f32.mrf.mxu0
        %v2369 = vadd.f32 0.0, %v2368
        %2370 = vmatmul.f32.gmra.mxu0 %v2321
        %v2371 = vpop.f32.mrf.mxu0
        %v2372 = vadd.f32 0.0, %v2371
        %2373 = vmatmul.f32.gmra.mxu0 %v2323
        %v2374 = vpop.f32.mrf.mxu0
        %v2375 = vadd.f32 0.0, %v2374
        %2376 = vmatmul.f32.gmra.mxu0 %v2325
        %v2377 = vpop.f32.mrf.mxu0
        %v2378 = vadd.f32 0.0, %v2377
        %2379 = vmatmul.f32.gmra.mxu0 %v2327
        %v2380 = vpop.f32.mrf.mxu0
        %v2381 = vadd.f32 0.0, %v2380
        %2382 = vmatmul.f32.gmra.mxu0 %v2329
        %v2383 = vpop.f32.mrf.mxu0
        %v2384 = vadd.f32 0.0, %v2383
        %2385 = vmatmul.f32.gmra.mxu0 %v2331
        %v2386 = vpop.f32.mrf.mxu0
        %v2387 = vadd.f32 0.0, %v2386
        %2388 = vmatmul.f32.gmra.mxu0 %v2333
        %v2389 = vpop.f32.mrf.mxu0
        %v2390 = vadd.f32 0.0, %v2389
        %2391 = vdwg.mxu0
        %v2393 = vsel %vm536, %v2279, 0
        %v2396 = vsel %vm536, %v2280, 0
        %v2399 = vsel %vm536, %v2281, 0
        %v2402 = vsel %vm536, %v2282, 0
        %v2405 = vsel %vm536, %v2283, 0
        %v2408 = vsel %vm536, %v2284, 0
        %v2411 = vsel %vm536, %v2285, 0
        %v2414 = vsel %vm536, %v2286, 0
        %2416 = vmatpush.xpose.msra.mxu0 0.0
        %2417 = vmatpush.xpose.msra.mxu0 0.0
        %2418 = vmatpush.xpose.msra.mxu0 0.0
        %2419 = vmatpush.xpose.msra.mxu0 0.0
        %2420 = vmatpush.xpose.msra.mxu0 0.0
        %2421 = vmatpush.xpose.msra.mxu0 0.0
        %2422 = vmatpush.xpose.msra.mxu0 0.0
        %2423 = vmatpush.xpose.msra.mxu0 0.0
        %2424 = vmatpush.xpose.msra.mxu0 %v2349
        %2425 = vmatpush.xpose.msra.mxu0 %v2347
        %2426 = vmatpush.xpose.msra.mxu0 %v2345
        %2427 = vmatpush.xpose.msra.mxu0 %v2343
        %2428 = vmatpush.xpose.msra.mxu0 %v2341
        %2429 = vmatpush.xpose.msra.mxu0 %v2339
        %2430 = vmatpush.xpose.msra.mxu0 %v2337
        %2431 = vmatpush.xpose.msra.mxu0 %v2335
        %2432 = vmatmul.f32.gmra.mxu0 %v2393
        %v2433 = vpop.f32.mrf.mxu0
        %v2434 = vadd.f32 0.0, %v2433
        %2435 = vmatmul.f32.gmra.mxu0 %v2396
        %v2436 = vpop.f32.mrf.mxu0
        %v2437 = vadd.f32 0.0, %v2436
        %2438 = vmatmul.f32.gmra.mxu0 %v2399
        %v2439 = vpop.f32.mrf.mxu0
        %v2440 = vadd.f32 0.0, %v2439
        %2441 = vmatmul.f32.gmra.mxu0 %v2402
        %v2442 = vpop.f32.mrf.mxu0
        %v2443 = vadd.f32 0.0, %v2442
        %2444 = vmatmul.f32.gmra.mxu0 %v2405
        %v2445 = vpop.f32.mrf.mxu0
        %v2446 = vadd.f32 0.0, %v2445
        %2447 = vmatmul.f32.gmra.mxu0 %v2408
        %v2448 = vpop.f32.mrf.mxu0
        %v2449 = vadd.f32 0.0, %v2448
        %2450 = vmatmul.f32.gmra.mxu0 %v2411
        %v2451 = vpop.f32.mrf.mxu0
        %v2452 = vadd.f32 0.0, %v2451
        %2453 = vmatmul.f32.gmra.mxu0 %v2414
        %v2454 = vpop.f32.mrf.mxu0
        %v2455 = vadd.f32 0.0, %v2454
        %2456 = vdwg.mxu0
        %v2457 = vmul.f32 %v2369, 0.35355338
        %v2458 = vmul.f32 %v2372, 0.35355338
        %v2459 = vmul.f32 %v2375, 0.35355338
        %v2460 = vmul.f32 %v2378, 0.35355338
        %v2461 = vmul.f32 %v2381, 0.35355338
        %v2462 = vmul.f32 %v2384, 0.35355338
        %v2463 = vmul.f32 %v2387, 0.35355338
        %v2464 = vmul.f32 %v2390, 0.35355338
        %v2465 = vadd.f32 %v2457, %v316
        %v2466 = vadd.f32 %v2458, %v317
        %v2467 = vadd.f32 %v2459, %v318
        %v2468 = vadd.f32 %v2460, %v319
        %v2469 = vadd.f32 %v2461, %v320
        %v2470 = vadd.f32 %v2462, %v321
        %v2471 = vadd.f32 %v2463, %v322
        %v2472 = vadd.f32 %v2464, %v323
        %v2473 = vmul.f32 %v2434, 0.35355338
        %v2474 = vmul.f32 %v2437, 0.35355338
        %v2475 = vmul.f32 %v2440, 0.35355338
        %v2476 = vmul.f32 %v2443, 0.35355338
        %v2477 = vmul.f32 %v2446, 0.35355338
        %v2478 = vmul.f32 %v2449, 0.35355338
        %v2479 = vmul.f32 %v2452, 0.35355338
        %v2480 = vmul.f32 %v2455, 0.35355338
        %v2481 = vmul.f32 %v2465, %v2465
        %v2482 = vmul.f32 %v2466, %v2466
        %v2483 = vmul.f32 %v2467, %v2467
        %v2484 = vmul.f32 %v2468, %v2468
        %v2485 = vmul.f32 %v2469, %v2469
        %v2486 = vmul.f32 %v2470, %v2470
        %v2487 = vmul.f32 %v2471, %v2471
        %v2488 = vmul.f32 %v2472, %v2472
        %v2489 = vmul.f32 %v2473, %v2473
        %v2490 = vmul.f32 %v2474, %v2474
        %v2491 = vmul.f32 %v2475, %v2475
        %v2492 = vmul.f32 %v2476, %v2476
        %v2493 = vmul.f32 %v2477, %v2477
        %v2494 = vmul.f32 %v2478, %v2478
        %v2495 = vmul.f32 %v2479, %v2479
        %v2496 = vmul.f32 %v2480, %v2480
        %v2497 = vadd.f32 %v2481, %v2489
        %v2498 = vadd.f32 %v2482, %v2490
        %v2499 = vadd.f32 %v2483, %v2491
        %v2500 = vadd.f32 %v2484, %v2492
        %v2501 = vadd.f32 %v2485, %v2493
        %v2502 = vadd.f32 %v2486, %v2494
        %v2503 = vadd.f32 %v2487, %v2495
        %v2504 = vadd.f32 %v2488, %v2496
        %v2505 = vrsqrt.pop %v2497
        %v2506 = vmul.f32 %v2505, %v2497
        %v2507 = vmul.f32 %v2506, %v2505
        %v2508 = vmul.f32 0.5, %v2507
        %v2509 = vsub.f32 1.5, %v2508
        %v2510 = vmul.f32 %v2505, %v2509
        %v2511 = vmul.f32 %v2497, %v2510
        %vm2512 = vcmp.eq.f32.partialorder %v2497, inf
        %v2513 = vsel %vm2512, %v2497, %v2511
        %vm2514 = vcmp.eq.f32.partialorder %v2497, 0.0
        %v2515 = vand.u32 %v2497, 2147483648
        %v2516 = vsel %vm2514, %v2515, %v2513
        %v2517 = vrsqrt.pop %v2498
        %v2518 = vmul.f32 %v2517, %v2498
        %v2519 = vmul.f32 %v2518, %v2517
        %v2520 = vmul.f32 0.5, %v2519
        %v2521 = vsub.f32 1.5, %v2520
        %v2522 = vmul.f32 %v2517, %v2521
        %v2523 = vmul.f32 %v2498, %v2522
        %vm2524 = vcmp.eq.f32.partialorder %v2498, inf
        %v2525 = vsel %vm2524, %v2498, %v2523
        %vm2526 = vcmp.eq.f32.partialorder %v2498, 0.0
        %v2527 = vand.u32 %v2498, 2147483648
        %v2528 = vsel %vm2526, %v2527, %v2525
        %v2529 = vrsqrt.pop %v2499
        %v2530 = vmul.f32 %v2529, %v2499
        %v2531 = vmul.f32 %v2530, %v2529
        %v2532 = vmul.f32 0.5, %v2531
        %v2533 = vsub.f32 1.5, %v2532
        %v2534 = vmul.f32 %v2529, %v2533
        %v2535 = vmul.f32 %v2499, %v2534
        %vm2536 = vcmp.eq.f32.partialorder %v2499, inf
        %v2537 = vsel %vm2536, %v2499, %v2535
        %vm2538 = vcmp.eq.f32.partialorder %v2499, 0.0
        %v2539 = vand.u32 %v2499, 2147483648
        %v2540 = vsel %vm2538, %v2539, %v2537
        %v2541 = vrsqrt.pop %v2500
        %v2542 = vmul.f32 %v2541, %v2500
        %v2543 = vmul.f32 %v2542, %v2541
        %v2544 = vmul.f32 0.5, %v2543
        %v2545 = vsub.f32 1.5, %v2544
        %v2546 = vmul.f32 %v2541, %v2545
        %v2547 = vmul.f32 %v2500, %v2546
        %vm2548 = vcmp.eq.f32.partialorder %v2500, inf
        %v2549 = vsel %vm2548, %v2500, %v2547
        %vm2550 = vcmp.eq.f32.partialorder %v2500, 0.0
        %v2551 = vand.u32 %v2500, 2147483648
        %v2552 = vsel %vm2550, %v2551, %v2549
        %v2553 = vrsqrt.pop %v2501
        %v2554 = vmul.f32 %v2553, %v2501
        %v2555 = vmul.f32 %v2554, %v2553
        %v2556 = vmul.f32 0.5, %v2555
        %v2557 = vsub.f32 1.5, %v2556
        %v2558 = vmul.f32 %v2553, %v2557
        %v2559 = vmul.f32 %v2501, %v2558
        %vm2560 = vcmp.eq.f32.partialorder %v2501, inf
        %v2561 = vsel %vm2560, %v2501, %v2559
        %vm2562 = vcmp.eq.f32.partialorder %v2501, 0.0
        %v2563 = vand.u32 %v2501, 2147483648
        %v2564 = vsel %vm2562, %v2563, %v2561
        %v2565 = vrsqrt.pop %v2502
        %v2566 = vmul.f32 %v2565, %v2502
        %v2567 = vmul.f32 %v2566, %v2565
        %v2568 = vmul.f32 0.5, %v2567
        %v2569 = vsub.f32 1.5, %v2568
        %v2570 = vmul.f32 %v2565, %v2569
        %v2571 = vmul.f32 %v2502, %v2570
        %vm2572 = vcmp.eq.f32.partialorder %v2502, inf
        %v2573 = vsel %vm2572, %v2502, %v2571
        %vm2574 = vcmp.eq.f32.partialorder %v2502, 0.0
        %v2575 = vand.u32 %v2502, 2147483648
        %v2576 = vsel %vm2574, %v2575, %v2573
        %v2577 = vrsqrt.pop %v2503
        %v2578 = vmul.f32 %v2577, %v2503
        %v2579 = vmul.f32 %v2578, %v2577
        %v2580 = vmul.f32 0.5, %v2579
        %v2581 = vsub.f32 1.5, %v2580
        %v2582 = vmul.f32 %v2577, %v2581
        %v2583 = vmul.f32 %v2503, %v2582
        %vm2584 = vcmp.eq.f32.partialorder %v2503, inf
        %v2585 = vsel %vm2584, %v2503, %v2583
        %vm2586 = vcmp.eq.f32.partialorder %v2503, 0.0
        %v2587 = vand.u32 %v2503, 2147483648
        %v2588 = vsel %vm2586, %v2587, %v2585
        %v2589 = vrsqrt.pop %v2504
        %v2590 = vmul.f32 %v2589, %v2504
        %v2591 = vmul.f32 %v2590, %v2589
        %v2592 = vmul.f32 0.5, %v2591
        %v2593 = vsub.f32 1.5, %v2592
        %v2594 = vmul.f32 %v2589, %v2593
        %v2595 = vmul.f32 %v2504, %v2594
        %vm2596 = vcmp.eq.f32.partialorder %v2504, inf
        %v2597 = vsel %vm2596, %v2504, %v2595
        %vm2598 = vcmp.eq.f32.partialorder %v2504, 0.0
        %v2599 = vand.u32 %v2504, 2147483648
        %v2600 = vsel %vm2598, %v2599, %v2597
        %v2601 = vsel %vm332, %v2516, -inf
        %2602 = vmax.xlane.f32.xlu0 %v2601
        %v2603 = vpop.xlane.xlu0 %2602
        %v2604 = vsel %vm332, %v2528, -inf
        %2605 = vmax.xlane.f32.xlu0 %v2604
        %v2606 = vpop.xlane.xlu0 %2605
        %v2607 = vsel %vm332, %v2540, -inf
        %2608 = vmax.xlane.f32.xlu0 %v2607
        %v2609 = vpop.xlane.xlu0 %2608
        %v2610 = vsel %vm332, %v2552, -inf
        %2611 = vmax.xlane.f32.xlu0 %v2610
        %v2612 = vpop.xlane.xlu0 %2611
        %v2613 = vsel %vm332, %v2564, -inf
        %2614 = vmax.xlane.f32.xlu0 %v2613
        %v2615 = vpop.xlane.xlu0 %2614
        %v2616 = vsel %vm332, %v2576, -inf
        %2617 = vmax.xlane.f32.xlu0 %v2616
        %v2618 = vpop.xlane.xlu0 %2617
        %v2619 = vsel %vm332, %v2588, -inf
        %2620 = vmax.xlane.f32.xlu0 %v2619
        %v2621 = vpop.xlane.xlu0 %2620
        %v2622 = vsel %vm332, %v2600, -inf
        %2623 = vmax.xlane.f32.xlu0 %v2622
        %v2624 = vpop.xlane.xlu0 %2623
        %v2625 = vsub.f32 %v2516, %v2603
        %v2626 = vsub.f32 %v2528, %v2606
        %v2627 = vsub.f32 %v2540, %v2609
        %v2628 = vsub.f32 %v2552, %v2612
        %v2629 = vsub.f32 %v2564, %v2615
        %v2630 = vsub.f32 %v2576, %v2618
        %v2631 = vsub.f32 %v2588, %v2621
        %v2632 = vsub.f32 %v2600, %v2624
        %v2633 = vmul.f32 %v2625, 1.442695
        %v2634 = vpow.pop %v2633
        %v2635 = vmul.f32 %v2626, 1.442695
        %v2636 = vpow.pop %v2635
        %v2637 = vmul.f32 %v2627, 1.442695
        %v2638 = vpow.pop %v2637
        %v2639 = vmul.f32 %v2628, 1.442695
        %v2640 = vpow.pop %v2639
        %v2641 = vmul.f32 %v2629, 1.442695
        %v2642 = vpow.pop %v2641
        %v2643 = vmul.f32 %v2630, 1.442695
        %v2644 = vpow.pop %v2643
        %v2645 = vmul.f32 %v2631, 1.442695
        %v2646 = vpow.pop %v2645
        %v2647 = vmul.f32 %v2632, 1.442695
        %v2648 = vpow.pop %v2647
        %v2649 = vsel %vm332, %v2634, 0.0
        %2650 = vadd.xlane.f32.xlu0 %v2649
        %v2651 = vpop.xlane.xlu0 %2650
        %v2652 = vsel %vm332, %v2636, 0.0
        %2653 = vadd.xlane.f32.xlu0 %v2652
        %v2654 = vpop.xlane.xlu0 %2653
        %v2655 = vsel %vm332, %v2638, 0.0
        %2656 = vadd.xlane.f32.xlu0 %v2655
        %v2657 = vpop.xlane.xlu0 %2656
        %v2658 = vsel %vm332, %v2640, 0.0
        %2659 = vadd.xlane.f32.xlu0 %v2658
        %v2660 = vpop.xlane.xlu0 %2659
        %v2661 = vsel %vm332, %v2642, 0.0
        %2662 = vadd.xlane.f32.xlu0 %v2661
        %v2663 = vpop.xlane.xlu0 %2662
        %v2664 = vsel %vm332, %v2644, 0.0
        %2665 = vadd.xlane.f32.xlu0 %v2664
        %v2666 = vpop.xlane.xlu0 %2665
        %v2667 = vsel %vm332, %v2646, 0.0
        %2668 = vadd.xlane.f32.xlu0 %v2667
        %v2669 = vpop.xlane.xlu0 %2668
        %v2670 = vsel %vm332, %v2648, 0.0
        %2671 = vadd.xlane.f32.xlu0 %v2670
        %v2672 = vpop.xlane.xlu0 %2671
        %v2673 = vrcp.pop %v2651
        %v2674 = vmul.f32 %v2651, %v2673
        %v2675 = vsub.f32 1.0, %v2674
        %v2676 = vmul.f32 %v2673, %v2675
        %v2677 = vadd.f32 %v2673, %v2676
        %vm2678 = vweird.f32 %v2651
        %vm2679 = vweird.f32 %v2673
        %vm2680 = vmor %vm2678, %vm2679
        %v2681 = vsel %vm2680, %v2673, %v2677
        %v2682 = vand.u32 2147483647, %v2651
        %vm2683 = vcmp.eq.f32.partialorder %v2682, 8.507059e+37
        %v2684 = vand.u32 %v2651, 2147483648
        %v2685 = vor.u32 1.1754944e-38, %v2684
        %v2686 = vsel %vm2683, %v2685, %v2681
        %v2687 = vrcp.pop %v2654
        %v2688 = vmul.f32 %v2654, %v2687
        %v2689 = vsub.f32 1.0, %v2688
        %v2690 = vmul.f32 %v2687, %v2689
        %v2691 = vadd.f32 %v2687, %v2690
        %vm2692 = vweird.f32 %v2654
        %vm2693 = vweird.f32 %v2687
        %vm2694 = vmor %vm2692, %vm2693
        %v2695 = vsel %vm2694, %v2687, %v2691
        %v2696 = vand.u32 2147483647, %v2654
        %vm2697 = vcmp.eq.f32.partialorder %v2696, 8.507059e+37
        %v2698 = vand.u32 %v2654, 2147483648
        %v2699 = vor.u32 1.1754944e-38, %v2698
        %v2700 = vsel %vm2697, %v2699, %v2695
        %v2701 = vrcp.pop %v2657
        %v2702 = vmul.f32 %v2657, %v2701
        %v2703 = vsub.f32 1.0, %v2702
        %v2704 = vmul.f32 %v2701, %v2703
        %v2705 = vadd.f32 %v2701, %v2704
        %vm2706 = vweird.f32 %v2657
        %vm2707 = vweird.f32 %v2701
        %vm2708 = vmor %vm2706, %vm2707
        %v2709 = vsel %vm2708, %v2701, %v2705
        %v2710 = vand.u32 2147483647, %v2657
        %vm2711 = vcmp.eq.f32.partialorder %v2710, 8.507059e+37
        %v2712 = vand.u32 %v2657, 2147483648
        %v2713 = vor.u32 1.1754944e-38, %v2712
        %v2714 = vsel %vm2711, %v2713, %v2709
        %v2715 = vrcp.pop %v2660
        %v2716 = vmul.f32 %v2660, %v2715
        %v2717 = vsub.f32 1.0, %v2716
        %v2718 = vmul.f32 %v2715, %v2717
        %v2719 = vadd.f32 %v2715, %v2718
        %vm2720 = vweird.f32 %v2660
        %vm2721 = vweird.f32 %v2715
        %vm2722 = vmor %vm2720, %vm2721
        %v2723 = vsel %vm2722, %v2715, %v2719
        %v2724 = vand.u32 2147483647, %v2660
        %vm2725 = vcmp.eq.f32.partialorder %v2724, 8.507059e+37
        %v2726 = vand.u32 %v2660, 2147483648
        %v2727 = vor.u32 1.1754944e-38, %v2726
        %v2728 = vsel %vm2725, %v2727, %v2723
        %v2729 = vrcp.pop %v2663
        %v2730 = vmul.f32 %v2663, %v2729
        %v2731 = vsub.f32 1.0, %v2730
        %v2732 = vmul.f32 %v2729, %v2731
        %v2733 = vadd.f32 %v2729, %v2732
        %vm2734 = vweird.f32 %v2663
        %vm2735 = vweird.f32 %v2729
        %vm2736 = vmor %vm2734, %vm2735
        %v2737 = vsel %vm2736, %v2729, %v2733
        %v2738 = vand.u32 2147483647, %v2663
        %vm2739 = vcmp.eq.f32.partialorder %v2738, 8.507059e+37
        %v2740 = vand.u32 %v2663, 2147483648
        %v2741 = vor.u32 1.1754944e-38, %v2740
        %v2742 = vsel %vm2739, %v2741, %v2737
        %v2743 = vrcp.pop %v2666
        %v2744 = vmul.f32 %v2666, %v2743
        %v2745 = vsub.f32 1.0, %v2744
        %v2746 = vmul.f32 %v2743, %v2745
        %v2747 = vadd.f32 %v2743, %v2746
        %vm2748 = vweird.f32 %v2666
        %vm2749 = vweird.f32 %v2743
        %vm2750 = vmor %vm2748, %vm2749
        %v2751 = vsel %vm2750, %v2743, %v2747
        %v2752 = vand.u32 2147483647, %v2666
        %vm2753 = vcmp.eq.f32.partialorder %v2752, 8.507059e+37
        %v2754 = vand.u32 %v2666, 2147483648
        %v2755 = vor.u32 1.1754944e-38, %v2754
        %v2756 = vsel %vm2753, %v2755, %v2751
        %v2757 = vrcp.pop %v2669
        %v2758 = vmul.f32 %v2669, %v2757
        %v2759 = vsub.f32 1.0, %v2758
        %v2760 = vmul.f32 %v2757, %v2759
        %v2761 = vadd.f32 %v2757, %v2760
        %vm2762 = vweird.f32 %v2669
        %vm2763 = vweird.f32 %v2757
        %vm2764 = vmor %vm2762, %vm2763
        %v2765 = vsel %vm2764, %v2757, %v2761
        %v2766 = vand.u32 2147483647, %v2669
        %vm2767 = vcmp.eq.f32.partialorder %v2766, 8.507059e+37
        %v2768 = vand.u32 %v2669, 2147483648
        %v2769 = vor.u32 1.1754944e-38, %v2768
        %v2770 = vsel %vm2767, %v2769, %v2765
        %v2771 = vrcp.pop %v2672
        %v2772 = vmul.f32 %v2672, %v2771
        %v2773 = vsub.f32 1.0, %v2772
        %v2774 = vmul.f32 %v2771, %v2773
        %v2775 = vadd.f32 %v2771, %v2774
        %vm2776 = vweird.f32 %v2672
        %vm2777 = vweird.f32 %v2771
        %vm2778 = vmor %vm2776, %vm2777
        %v2779 = vsel %vm2778, %v2771, %v2775
        %v2780 = vand.u32 2147483647, %v2672
        %vm2781 = vcmp.eq.f32.partialorder %v2780, 8.507059e+37
        %v2782 = vand.u32 %v2672, 2147483648
        %v2783 = vor.u32 1.1754944e-38, %v2782
        %v2784 = vsel %vm2781, %v2783, %v2779
        %v2785 = vmul.f32 %v2634, %v2686
        %v2786 = vmul.f32 %v2636, %v2700
        %v2787 = vmul.f32 %v2638, %v2714
        %v2788 = vmul.f32 %v2640, %v2728
        %v2789 = vmul.f32 %v2642, %v2742
        %v2790 = vmul.f32 %v2644, %v2756
        %v2791 = vmul.f32 %v2646, %v2770
        %v2792 = vmul.f32 %v2648, %v2784
        %v2793 = vadd.f32 %v2516, 1e-08
        %v2794 = vadd.f32 %v2528, 1e-08
        %v2795 = vadd.f32 %v2540, 1e-08
        %v2796 = vadd.f32 %v2552, 1e-08
        %v2797 = vadd.f32 %v2564, 1e-08
        %v2798 = vadd.f32 %v2576, 1e-08
        %v2799 = vadd.f32 %v2588, 1e-08
        %v2800 = vadd.f32 %v2600, 1e-08
        %v2801 = vrcp.pop %v2793
        %v2802 = vmul.f32 %v2793, %v2801
        %v2803 = vsub.f32 1.0, %v2802
        %v2804 = vmul.f32 %v2801, %v2803
        %v2805 = vadd.f32 %v2801, %v2804
        %vm2806 = vweird.f32 %v2793
        %vm2807 = vweird.f32 %v2801
        %vm2808 = vmor %vm2806, %vm2807
        %v2809 = vsel %vm2808, %v2801, %v2805
        %v2810 = vand.u32 2147483647, %v2793
        %vm2811 = vcmp.eq.f32.partialorder %v2810, 8.507059e+37
        %v2812 = vand.u32 %v2793, 2147483648
        %v2813 = vor.u32 1.1754944e-38, %v2812
        %v2814 = vsel %vm2811, %v2813, %v2809
        %v2815 = vrcp.pop %v2794
        %v2816 = vmul.f32 %v2794, %v2815
        %v2817 = vsub.f32 1.0, %v2816
        %v2818 = vmul.f32 %v2815, %v2817
        %v2819 = vadd.f32 %v2815, %v2818
        %vm2820 = vweird.f32 %v2794
        %vm2821 = vweird.f32 %v2815
        %vm2822 = vmor %vm2820, %vm2821
        %v2823 = vsel %vm2822, %v2815, %v2819
        %v2824 = vand.u32 2147483647, %v2794
        %vm2825 = vcmp.eq.f32.partialorder %v2824, 8.507059e+37
        %v2826 = vand.u32 %v2794, 2147483648
        %v2827 = vor.u32 1.1754944e-38, %v2826
        %v2828 = vsel %vm2825, %v2827, %v2823
        %v2829 = vrcp.pop %v2795
        %v2830 = vmul.f32 %v2795, %v2829
        %v2831 = vsub.f32 1.0, %v2830
        %v2832 = vmul.f32 %v2829, %v2831
        %v2833 = vadd.f32 %v2829, %v2832
        %vm2834 = vweird.f32 %v2795
        %vm2835 = vweird.f32 %v2829
        %vm2836 = vmor %vm2834, %vm2835
        %v2837 = vsel %vm2836, %v2829, %v2833
        %v2838 = vand.u32 2147483647, %v2795
        %vm2839 = vcmp.eq.f32.partialorder %v2838, 8.507059e+37
        %v2840 = vand.u32 %v2795, 2147483648
        %v2841 = vor.u32 1.1754944e-38, %v2840
        %v2842 = vsel %vm2839, %v2841, %v2837
        %v2843 = vrcp.pop %v2796
        %v2844 = vmul.f32 %v2796, %v2843
        %v2845 = vsub.f32 1.0, %v2844
        %v2846 = vmul.f32 %v2843, %v2845
        %v2847 = vadd.f32 %v2843, %v2846
        %vm2848 = vweird.f32 %v2796
        %vm2849 = vweird.f32 %v2843
        %vm2850 = vmor %vm2848, %vm2849
        %v2851 = vsel %vm2850, %v2843, %v2847
        %v2852 = vand.u32 2147483647, %v2796
        %vm2853 = vcmp.eq.f32.partialorder %v2852, 8.507059e+37
        %v2854 = vand.u32 %v2796, 2147483648
        %v2855 = vor.u32 1.1754944e-38, %v2854
        %v2856 = vsel %vm2853, %v2855, %v2851
        %v2857 = vrcp.pop %v2797
        %v2858 = vmul.f32 %v2797, %v2857
        %v2859 = vsub.f32 1.0, %v2858
        %v2860 = vmul.f32 %v2857, %v2859
        %v2861 = vadd.f32 %v2857, %v2860
        %vm2862 = vweird.f32 %v2797
        %vm2863 = vweird.f32 %v2857
        %vm2864 = vmor %vm2862, %vm2863
        %v2865 = vsel %vm2864, %v2857, %v2861
        %v2866 = vand.u32 2147483647, %v2797
        %vm2867 = vcmp.eq.f32.partialorder %v2866, 8.507059e+37
        %v2868 = vand.u32 %v2797, 2147483648
        %v2869 = vor.u32 1.1754944e-38, %v2868
        %v2870 = vsel %vm2867, %v2869, %v2865
        %v2871 = vrcp.pop %v2798
        %v2872 = vmul.f32 %v2798, %v2871
        %v2873 = vsub.f32 1.0, %v2872
        %v2874 = vmul.f32 %v2871, %v2873
        %v2875 = vadd.f32 %v2871, %v2874
        %vm2876 = vweird.f32 %v2798
        %vm2877 = vweird.f32 %v2871
        %vm2878 = vmor %vm2876, %vm2877
        %v2879 = vsel %vm2878, %v2871, %v2875
        %v2880 = vand.u32 2147483647, %v2798
        %vm2881 = vcmp.eq.f32.partialorder %v2880, 8.507059e+37
        %v2882 = vand.u32 %v2798, 2147483648
        %v2883 = vor.u32 1.1754944e-38, %v2882
        %v2884 = vsel %vm2881, %v2883, %v2879
        %v2885 = vrcp.pop %v2799
        %v2886 = vmul.f32 %v2799, %v2885
        %v2887 = vsub.f32 1.0, %v2886
        %v2888 = vmul.f32 %v2885, %v2887
        %v2889 = vadd.f32 %v2885, %v2888
        %vm2890 = vweird.f32 %v2799
        %vm2891 = vweird.f32 %v2885
        %vm2892 = vmor %vm2890, %vm2891
        %v2893 = vsel %vm2892, %v2885, %v2889
        %v2894 = vand.u32 2147483647, %v2799
        %vm2895 = vcmp.eq.f32.partialorder %v2894, 8.507059e+37
        %v2896 = vand.u32 %v2799, 2147483648
        %v2897 = vor.u32 1.1754944e-38, %v2896
        %v2898 = vsel %vm2895, %v2897, %v2893
        %v2899 = vrcp.pop %v2800
        %v2900 = vmul.f32 %v2800, %v2899
        %v2901 = vsub.f32 1.0, %v2900
        %v2902 = vmul.f32 %v2899, %v2901
        %v2903 = vadd.f32 %v2899, %v2902
        %vm2904 = vweird.f32 %v2800
        %vm2905 = vweird.f32 %v2899
        %vm2906 = vmor %vm2904, %vm2905
        %v2907 = vsel %vm2906, %v2899, %v2903
        %v2908 = vand.u32 2147483647, %v2800
        %vm2909 = vcmp.eq.f32.partialorder %v2908, 8.507059e+37
        %v2910 = vand.u32 %v2800, 2147483648
        %v2911 = vor.u32 1.1754944e-38, %v2910
        %v2912 = vsel %vm2909, %v2911, %v2907
        %v2913 = vmul.f32 %v2785, %v2814
        %v2914 = vmul.f32 %v2786, %v2828
        %v2915 = vmul.f32 %v2787, %v2842
        %v2916 = vmul.f32 %v2788, %v2856
        %v2917 = vmul.f32 %v2789, %v2870
        %v2918 = vmul.f32 %v2790, %v2884
        %v2919 = vmul.f32 %v2791, %v2898
        %v2920 = vmul.f32 %v2792, %v2912
        %v2921 = vmul.f32 %v2465, %v2913
        %v2922 = vmul.f32 %v2466, %v2914
        %v2923 = vmul.f32 %v2467, %v2915
        %v2924 = vmul.f32 %v2468, %v2916
        %v2925 = vmul.f32 %v2469, %v2917
        %v2926 = vmul.f32 %v2470, %v2918
        %v2927 = vmul.f32 %v2471, %v2919
        %v2928 = vmul.f32 %v2472, %v2920
        %v2929 = vmul.f32 %v2473, %v2913
        %v2930 = vmul.f32 %v2474, %v2914
        %v2931 = vmul.f32 %v2475, %v2915
        %v2932 = vmul.f32 %v2476, %v2916
        %v2933 = vmul.f32 %v2477, %v2917
        %v2934 = vmul.f32 %v2478, %v2918
        %v2935 = vmul.f32 %v2479, %v2919
        %v2936 = vmul.f32 %v2480, %v2920
        %v2937 = vsub.f32 0.0, %v416
        %v2938 = vsub.f32 0.0, %v419
        %v2939 = vsub.f32 0.0, %v422
        %v2940 = vsub.f32 0.0, %v425
        %v2941 = vsub.f32 0.0, %v428
        %v2942 = vsub.f32 0.0, %v431
        %v2943 = vsub.f32 0.0, %v434
        %v2944 = vsub.f32 0.0, %v437
        %2953 = vrot.lane.b32.xlu0 %v2937, 120
        %v2954 = vpop.permute.xlu0 %2953
        %2955 = vrot.lane.b32.xlu0 %v2938, 120
        %v2956 = vpop.permute.xlu0 %2955
        %2957 = vrot.lane.b32.xlu0 %v2939, 120
        %v2958 = vpop.permute.xlu0 %2957
        %2959 = vrot.lane.b32.xlu0 %v2940, 120
        %v2960 = vpop.permute.xlu0 %2959
        %2961 = vrot.lane.b32.xlu0 %v2941, 120
        %v2962 = vpop.permute.xlu0 %2961
        %2963 = vrot.lane.b32.xlu0 %v2942, 120
        %v2964 = vpop.permute.xlu0 %2963
        %2965 = vrot.lane.b32.xlu0 %v2943, 120
        %v2966 = vpop.permute.xlu0 %2965
        %2967 = vrot.lane.b32.xlu0 %v2944, 120
        %v2968 = vpop.permute.xlu0 %2967
        %2985 = vrot.lane.b32.xlu0 %v416, 8
        %v2986 = vpop.permute.xlu0 %2985
        %2987 = vrot.lane.b32.xlu0 %v419, 8
        %v2988 = vpop.permute.xlu0 %2987
        %2989 = vrot.lane.b32.xlu0 %v422, 8
        %v2990 = vpop.permute.xlu0 %2989
        %2991 = vrot.lane.b32.xlu0 %v425, 8
        %v2992 = vpop.permute.xlu0 %2991
        %2993 = vrot.lane.b32.xlu0 %v428, 8
        %v2994 = vpop.permute.xlu0 %2993
        %2995 = vrot.lane.b32.xlu0 %v431, 8
        %v2996 = vpop.permute.xlu0 %2995
        %2997 = vrot.lane.b32.xlu0 %v434, 8
        %v2998 = vpop.permute.xlu0 %2997
        %2999 = vrot.lane.b32.xlu0 %v437, 8
        %v3000 = vpop.permute.xlu0 %2999
        %v3009 = vsel %vm511, %v2954, %v2986
        %v3010 = vsel %vm511, %v2956, %v2988
        %v3011 = vsel %vm511, %v2958, %v2990
        %v3012 = vsel %vm511, %v2960, %v2992
        %v3013 = vsel %vm511, %v2962, %v2994
        %v3014 = vsel %vm511, %v2964, %v2996
        %v3015 = vsel %vm511, %v2966, %v2998
        %v3016 = vsel %vm511, %v2968, %v3000
        %3025 = vrot.lane.b32.xlu0 %v2929, 64
        %v3026 = vpop.permute.xlu0 %3025
        %3027 = vrot.lane.b32.xlu0 %v2930, 64
        %v3028 = vpop.permute.xlu0 %3027
        %3029 = vrot.lane.b32.xlu0 %v2931, 64
        %v3030 = vpop.permute.xlu0 %3029
        %3031 = vrot.lane.b32.xlu0 %v2932, 64
        %v3032 = vpop.permute.xlu0 %3031
        %3033 = vrot.lane.b32.xlu0 %v2933, 64
        %v3034 = vpop.permute.xlu0 %3033
        %3035 = vrot.lane.b32.xlu0 %v2934, 64
        %v3036 = vpop.permute.xlu0 %3035
        %3037 = vrot.lane.b32.xlu0 %v2935, 64
        %v3038 = vpop.permute.xlu0 %3037
        %3039 = vrot.lane.b32.xlu0 %v2936, 64
        %v3040 = vpop.permute.xlu0 %3039
        %v3049 = vsel %vm332, %v2921, %v3026
        %v3050 = vsel %vm332, %v2922, %v3028
        %v3051 = vsel %vm332, %v2923, %v3030
        %v3052 = vsel %vm332, %v2924, %v3032
        %v3053 = vsel %vm332, %v2925, %v3034
        %v3054 = vsel %vm332, %v2926, %v3036
        %v3055 = vsel %vm332, %v2927, %v3038
        %v3056 = vsel %vm332, %v2928, %v3040
        %3057 = vmatpush.msra.mxu0 %v3016
        %3058 = vmatpush.msra.mxu0 %v3015
        %3059 = vmatpush.msra.mxu0 %v3014
        %3060 = vmatpush.msra.mxu0 %v3013
        %3061 = vmatpush.msra.mxu0 %v3012
        %3062 = vmatpush.msra.mxu0 %v3011
        %3063 = vmatpush.msra.mxu0 %v3010
        %3064 = vmatpush.msra.mxu0 %v3009
        %3065 = vmatpush.msra.mxu0 %v437
        %3066 = vmatpush.msra.mxu0 %v434
        %3067 = vmatpush.msra.mxu0 %v431
        %3068 = vmatpush.msra.mxu0 %v428
        %3069 = vmatpush.msra.mxu0 %v425
        %3070 = vmatpush.msra.mxu0 %v422
        %3071 = vmatpush.msra.mxu0 %v419
        %3072 = vmatpush.msra.mxu0 %v416
        %3073 = vmatmul.f32.gmra.mxu0 %v3049
        %v3074 = vpop.f32.mrf.mxu0
        %v3075 = vadd.f32 0.0, %v3074
        %3076 = vmatmul.f32.gmra.mxu0 %v3050
        %v3077 = vpop.f32.mrf.mxu0
        %v3078 = vadd.f32 0.0, %v3077
        %3079 = vmatmul.f32.gmra.mxu0 %v3051
        %v3080 = vpop.f32.mrf.mxu0
        %v3081 = vadd.f32 0.0, %v3080
        %3082 = vmatmul.f32.gmra.mxu0 %v3052
        %v3083 = vpop.f32.mrf.mxu0
        %v3084 = vadd.f32 0.0, %v3083
        %3085 = vmatmul.f32.gmra.mxu0 %v3053
        %v3086 = vpop.f32.mrf.mxu0
        %v3087 = vadd.f32 0.0, %v3086
        %3088 = vmatmul.f32.gmra.mxu0 %v3054
        %v3089 = vpop.f32.mrf.mxu0
        %v3090 = vadd.f32 0.0, %v3089
        %3091 = vmatmul.f32.gmra.mxu0 %v3055
        %v3092 = vpop.f32.mrf.mxu0
        %v3093 = vadd.f32 0.0, %v3092
        %3094 = vmatmul.f32.gmra.mxu0 %v3056
        %v3095 = vpop.f32.mrf.mxu0
        %v3096 = vadd.f32 0.0, %v3095
        %3097 = vdwg.mxu0
        %3098 = vrot.lane.b32.xlu0 %v416, 104
        %v3099 = vpop.permute.xlu0 %3098
        %3100 = vrot.lane.b32.xlu0 %v419, 104
        %v3101 = vpop.permute.xlu0 %3100
        %3102 = vrot.lane.b32.xlu0 %v422, 104
        %v3103 = vpop.permute.xlu0 %3102
        %3104 = vrot.lane.b32.xlu0 %v425, 104
        %v3105 = vpop.permute.xlu0 %3104
        %3106 = vrot.lane.b32.xlu0 %v428, 104
        %v3107 = vpop.permute.xlu0 %3106
        %3108 = vrot.lane.b32.xlu0 %v431, 104
        %v3109 = vpop.permute.xlu0 %3108
        %3110 = vrot.lane.b32.xlu0 %v434, 104
        %v3111 = vpop.permute.xlu0 %3110
        %3112 = vrot.lane.b32.xlu0 %v437, 104
        %v3113 = vpop.permute.xlu0 %3112
        %v3122 = vsel %vm511, %v3099, %v2954
        %v3123 = vsel %vm511, %v3101, %v2956
        %v3124 = vsel %vm511, %v3103, %v2958
        %v3125 = vsel %vm511, %v3105, %v2960
        %v3126 = vsel %vm511, %v3107, %v2962
        %v3127 = vsel %vm511, %v3109, %v2964
        %v3128 = vsel %vm511, %v3111, %v2966
        %v3129 = vsel %vm511, %v3113, %v2968
        %3130 = vrot.lane.b32.xlu0 %v416, 112
        %v3131 = vpop.permute.xlu0 %3130
        %3132 = vrot.lane.b32.xlu0 %v419, 112
        %v3133 = vpop.permute.xlu0 %3132
        %3134 = vrot.lane.b32.xlu0 %v422, 112
        %v3135 = vpop.permute.xlu0 %3134
        %3136 = vrot.lane.b32.xlu0 %v425, 112
        %v3137 = vpop.permute.xlu0 %3136
        %3138 = vrot.lane.b32.xlu0 %v428, 112
        %v3139 = vpop.permute.xlu0 %3138
        %3140 = vrot.lane.b32.xlu0 %v431, 112
        %v3141 = vpop.permute.xlu0 %3140
        %3142 = vrot.lane.b32.xlu0 %v434, 112
        %v3143 = vpop.permute.xlu0 %3142
        %3144 = vrot.lane.b32.xlu0 %v437, 112
        %v3145 = vpop.permute.xlu0 %3144
        %3146 = vrot.lane.b32.xlu0 %v416, 96
        %v3147 = vpop.permute.xlu0 %3146
        %3148 = vrot.lane.b32.xlu0 %v419, 96
        %v3149 = vpop.permute.xlu0 %3148
        %3150 = vrot.lane.b32.xlu0 %v422, 96
        %v3151 = vpop.permute.xlu0 %3150
        %3152 = vrot.lane.b32.xlu0 %v425, 96
        %v3153 = vpop.permute.xlu0 %3152
        %3154 = vrot.lane.b32.xlu0 %v428, 96
        %v3155 = vpop.permute.xlu0 %3154
        %3156 = vrot.lane.b32.xlu0 %v431, 96
        %v3157 = vpop.permute.xlu0 %3156
        %3158 = vrot.lane.b32.xlu0 %v434, 96
        %v3159 = vpop.permute.xlu0 %3158
        %3160 = vrot.lane.b32.xlu0 %v437, 96
        %v3161 = vpop.permute.xlu0 %3160
        %v3162 = vsel %vm536, %v3131, 0
        %v3164 = vsel %vm536, %v3133, 0
        %v3166 = vsel %vm536, %v3135, 0
        %v3168 = vsel %vm536, %v3137, 0
        %v3170 = vsel %vm536, %v3139, 0
        %v3172 = vsel %vm536, %v3141, 0
        %v3174 = vsel %vm536, %v3143, 0
        %v3176 = vsel %vm536, %v3145, 0
        %v3178 = vsel %vm536, %v3147, 0
        %v3180 = vsel %vm536, %v3149, 0
        %v3182 = vsel %vm536, %v3151, 0
        %v3184 = vsel %vm536, %v3153, 0
        %v3186 = vsel %vm536, %v3155, 0
        %v3188 = vsel %vm536, %v3157, 0
        %v3190 = vsel %vm536, %v3159, 0
        %v3192 = vsel %vm536, %v3161, 0
        %3194 = vmatpush.xpose.msra.mxu0 0.0
        %3195 = vmatpush.xpose.msra.mxu0 0.0
        %3196 = vmatpush.xpose.msra.mxu0 0.0
        %3197 = vmatpush.xpose.msra.mxu0 0.0
        %3198 = vmatpush.xpose.msra.mxu0 0.0
        %3199 = vmatpush.xpose.msra.mxu0 0.0
        %3200 = vmatpush.xpose.msra.mxu0 0.0
        %3201 = vmatpush.xpose.msra.mxu0 0.0
        %3202 = vmatpush.xpose.msra.mxu0 %v3192
        %3203 = vmatpush.xpose.msra.mxu0 %v3190
        %3204 = vmatpush.xpose.msra.mxu0 %v3188
        %3205 = vmatpush.xpose.msra.mxu0 %v3186
        %3206 = vmatpush.xpose.msra.mxu0 %v3184
        %3207 = vmatpush.xpose.msra.mxu0 %v3182
        %3208 = vmatpush.xpose.msra.mxu0 %v3180
        %3209 = vmatpush.xpose.msra.mxu0 %v3178
        %3210 = vmatmul.f32.gmra.mxu0 %v3162
        %v3211 = vpop.f32.mrf.mxu0
        %v3212 = vadd.f32 0.0, %v3211
        %3213 = vmatmul.f32.gmra.mxu0 %v3164
        %v3214 = vpop.f32.mrf.mxu0
        %v3215 = vadd.f32 0.0, %v3214
        %3216 = vmatmul.f32.gmra.mxu0 %v3166
        %v3217 = vpop.f32.mrf.mxu0
        %v3218 = vadd.f32 0.0, %v3217
        %3219 = vmatmul.f32.gmra.mxu0 %v3168
        %v3220 = vpop.f32.mrf.mxu0
        %v3221 = vadd.f32 0.0, %v3220
        %3222 = vmatmul.f32.gmra.mxu0 %v3170
        %v3223 = vpop.f32.mrf.mxu0
        %v3224 = vadd.f32 0.0, %v3223
        %3225 = vmatmul.f32.gmra.mxu0 %v3172
        %v3226 = vpop.f32.mrf.mxu0
        %v3227 = vadd.f32 0.0, %v3226
        %3228 = vmatmul.f32.gmra.mxu0 %v3174
        %v3229 = vpop.f32.mrf.mxu0
        %v3230 = vadd.f32 0.0, %v3229
        %3231 = vmatmul.f32.gmra.mxu0 %v3176
        %v3232 = vpop.f32.mrf.mxu0
        %v3233 = vadd.f32 0.0, %v3232
        %3234 = vdwg.mxu0
        %v3236 = vsel %vm536, %v3122, 0
        %v3239 = vsel %vm536, %v3123, 0
        %v3242 = vsel %vm536, %v3124, 0
        %v3245 = vsel %vm536, %v3125, 0
        %v3248 = vsel %vm536, %v3126, 0
        %v3251 = vsel %vm536, %v3127, 0
        %v3254 = vsel %vm536, %v3128, 0
        %v3257 = vsel %vm536, %v3129, 0
        %3259 = vmatpush.xpose.msra.mxu0 0.0
        %3260 = vmatpush.xpose.msra.mxu0 0.0
        %3261 = vmatpush.xpose.msra.mxu0 0.0
        %3262 = vmatpush.xpose.msra.mxu0 0.0
        %3263 = vmatpush.xpose.msra.mxu0 0.0
        %3264 = vmatpush.xpose.msra.mxu0 0.0
        %3265 = vmatpush.xpose.msra.mxu0 0.0
        %3266 = vmatpush.xpose.msra.mxu0 0.0
        %3267 = vmatpush.xpose.msra.mxu0 %v3192
        %3268 = vmatpush.xpose.msra.mxu0 %v3190
        %3269 = vmatpush.xpose.msra.mxu0 %v3188
        %3270 = vmatpush.xpose.msra.mxu0 %v3186
        %3271 = vmatpush.xpose.msra.mxu0 %v3184
        %3272 = vmatpush.xpose.msra.mxu0 %v3182
        %3273 = vmatpush.xpose.msra.mxu0 %v3180
        %3274 = vmatpush.xpose.msra.mxu0 %v3178
        %3275 = vmatmul.f32.gmra.mxu0 %v3236
        %v3276 = vpop.f32.mrf.mxu0
        %v3277 = vadd.f32 0.0, %v3276
        %3278 = vmatmul.f32.gmra.mxu0 %v3239
        %v3279 = vpop.f32.mrf.mxu0
        %v3280 = vadd.f32 0.0, %v3279
        %3281 = vmatmul.f32.gmra.mxu0 %v3242
        %v3282 = vpop.f32.mrf.mxu0
        %v3283 = vadd.f32 0.0, %v3282
        %3284 = vmatmul.f32.gmra.mxu0 %v3245
        %v3285 = vpop.f32.mrf.mxu0
        %v3286 = vadd.f32 0.0, %v3285
        %3287 = vmatmul.f32.gmra.mxu0 %v3248
        %v3288 = vpop.f32.mrf.mxu0
        %v3289 = vadd.f32 0.0, %v3288
        %3290 = vmatmul.f32.gmra.mxu0 %v3251
        %v3291 = vpop.f32.mrf.mxu0
        %v3292 = vadd.f32 0.0, %v3291
        %3293 = vmatmul.f32.gmra.mxu0 %v3254
        %v3294 = vpop.f32.mrf.mxu0
        %v3295 = vadd.f32 0.0, %v3294
        %3296 = vmatmul.f32.gmra.mxu0 %v3257
        %v3297 = vpop.f32.mrf.mxu0
        %v3298 = vadd.f32 0.0, %v3297
        %3299 = vdwg.mxu0
        %v3300 = vmul.f32 %v3212, 0.35355338
        %v3301 = vmul.f32 %v3215, 0.35355338
        %v3302 = vmul.f32 %v3218, 0.35355338
        %v3303 = vmul.f32 %v3221, 0.35355338
        %v3304 = vmul.f32 %v3224, 0.35355338
        %v3305 = vmul.f32 %v3227, 0.35355338
        %v3306 = vmul.f32 %v3230, 0.35355338
        %v3307 = vmul.f32 %v3233, 0.35355338
        %v3308 = vadd.f32 %v3300, %v324
        %v3309 = vadd.f32 %v3301, %v325
        %v3310 = vadd.f32 %v3302, %v326
        %v3311 = vadd.f32 %v3303, %v327
        %v3312 = vadd.f32 %v3304, %v328
        %v3313 = vadd.f32 %v3305, %v329
        %v3314 = vadd.f32 %v3306, %v330
        %v3315 = vadd.f32 %v3307, %v331
        %v3316 = vmul.f32 %v3277, 0.35355338
        %v3317 = vmul.f32 %v3280, 0.35355338
        %v3318 = vmul.f32 %v3283, 0.35355338
        %v3319 = vmul.f32 %v3286, 0.35355338
        %v3320 = vmul.f32 %v3289, 0.35355338
        %v3321 = vmul.f32 %v3292, 0.35355338
        %v3322 = vmul.f32 %v3295, 0.35355338
        %v3323 = vmul.f32 %v3298, 0.35355338
        %v3324 = vmul.f32 %v3308, %v3308
        %v3325 = vmul.f32 %v3309, %v3309
        %v3326 = vmul.f32 %v3310, %v3310
        %v3327 = vmul.f32 %v3311, %v3311
        %v3328 = vmul.f32 %v3312, %v3312
        %v3329 = vmul.f32 %v3313, %v3313
        %v3330 = vmul.f32 %v3314, %v3314
        %v3331 = vmul.f32 %v3315, %v3315
        %v3332 = vmul.f32 %v3316, %v3316
        %v3333 = vmul.f32 %v3317, %v3317
        %v3334 = vmul.f32 %v3318, %v3318
        %v3335 = vmul.f32 %v3319, %v3319
        %v3336 = vmul.f32 %v3320, %v3320
        %v3337 = vmul.f32 %v3321, %v3321
        %v3338 = vmul.f32 %v3322, %v3322
        %v3339 = vmul.f32 %v3323, %v3323
        %v3340 = vadd.f32 %v3324, %v3332
        %v3341 = vadd.f32 %v3325, %v3333
        %v3342 = vadd.f32 %v3326, %v3334
        %v3343 = vadd.f32 %v3327, %v3335
        %v3344 = vadd.f32 %v3328, %v3336
        %v3345 = vadd.f32 %v3329, %v3337
        %v3346 = vadd.f32 %v3330, %v3338
        %v3347 = vadd.f32 %v3331, %v3339
        %v3348 = vrsqrt.pop %v3340
        %v3349 = vmul.f32 %v3348, %v3340
        %v3350 = vmul.f32 %v3349, %v3348
        %v3351 = vmul.f32 0.5, %v3350
        %v3352 = vsub.f32 1.5, %v3351
        %v3353 = vmul.f32 %v3348, %v3352
        %v3354 = vmul.f32 %v3340, %v3353
        %vm3355 = vcmp.eq.f32.partialorder %v3340, inf
        %v3356 = vsel %vm3355, %v3340, %v3354
        %vm3357 = vcmp.eq.f32.partialorder %v3340, 0.0
        %v3358 = vand.u32 %v3340, 2147483648
        %v3359 = vsel %vm3357, %v3358, %v3356
        %v3360 = vrsqrt.pop %v3341
        %v3361 = vmul.f32 %v3360, %v3341
        %v3362 = vmul.f32 %v3361, %v3360
        %v3363 = vmul.f32 0.5, %v3362
        %v3364 = vsub.f32 1.5, %v3363
        %v3365 = vmul.f32 %v3360, %v3364
        %v3366 = vmul.f32 %v3341, %v3365
        %vm3367 = vcmp.eq.f32.partialorder %v3341, inf
        %v3368 = vsel %vm3367, %v3341, %v3366
        %vm3369 = vcmp.eq.f32.partialorder %v3341, 0.0
        %v3370 = vand.u32 %v3341, 2147483648
        %v3371 = vsel %vm3369, %v3370, %v3368
        %v3372 = vrsqrt.pop %v3342
        %v3373 = vmul.f32 %v3372, %v3342
        %v3374 = vmul.f32 %v3373, %v3372
        %v3375 = vmul.f32 0.5, %v3374
        %v3376 = vsub.f32 1.5, %v3375
        %v3377 = vmul.f32 %v3372, %v3376
        %v3378 = vmul.f32 %v3342, %v3377
        %vm3379 = vcmp.eq.f32.partialorder %v3342, inf
        %v3380 = vsel %vm3379, %v3342, %v3378
        %vm3381 = vcmp.eq.f32.partialorder %v3342, 0.0
        %v3382 = vand.u32 %v3342, 2147483648
        %v3383 = vsel %vm3381, %v3382, %v3380
        %v3384 = vrsqrt.pop %v3343
        %v3385 = vmul.f32 %v3384, %v3343
        %v3386 = vmul.f32 %v3385, %v3384
        %v3387 = vmul.f32 0.5, %v3386
        %v3388 = vsub.f32 1.5, %v3387
        %v3389 = vmul.f32 %v3384, %v3388
        %v3390 = vmul.f32 %v3343, %v3389
        %vm3391 = vcmp.eq.f32.partialorder %v3343, inf
        %v3392 = vsel %vm3391, %v3343, %v3390
        %vm3393 = vcmp.eq.f32.partialorder %v3343, 0.0
        %v3394 = vand.u32 %v3343, 2147483648
        %v3395 = vsel %vm3393, %v3394, %v3392
        %v3396 = vrsqrt.pop %v3344
        %v3397 = vmul.f32 %v3396, %v3344
        %v3398 = vmul.f32 %v3397, %v3396
        %v3399 = vmul.f32 0.5, %v3398
        %v3400 = vsub.f32 1.5, %v3399
        %v3401 = vmul.f32 %v3396, %v3400
        %v3402 = vmul.f32 %v3344, %v3401
        %vm3403 = vcmp.eq.f32.partialorder %v3344, inf
        %v3404 = vsel %vm3403, %v3344, %v3402
        %vm3405 = vcmp.eq.f32.partialorder %v3344, 0.0
        %v3406 = vand.u32 %v3344, 2147483648
        %v3407 = vsel %vm3405, %v3406, %v3404
        %v3408 = vrsqrt.pop %v3345
        %v3409 = vmul.f32 %v3408, %v3345
        %v3410 = vmul.f32 %v3409, %v3408
        %v3411 = vmul.f32 0.5, %v3410
        %v3412 = vsub.f32 1.5, %v3411
        %v3413 = vmul.f32 %v3408, %v3412
        %v3414 = vmul.f32 %v3345, %v3413
        %vm3415 = vcmp.eq.f32.partialorder %v3345, inf
        %v3416 = vsel %vm3415, %v3345, %v3414
        %vm3417 = vcmp.eq.f32.partialorder %v3345, 0.0
        %v3418 = vand.u32 %v3345, 2147483648
        %v3419 = vsel %vm3417, %v3418, %v3416
        %v3420 = vrsqrt.pop %v3346
        %v3421 = vmul.f32 %v3420, %v3346
        %v3422 = vmul.f32 %v3421, %v3420
        %v3423 = vmul.f32 0.5, %v3422
        %v3424 = vsub.f32 1.5, %v3423
        %v3425 = vmul.f32 %v3420, %v3424
        %v3426 = vmul.f32 %v3346, %v3425
        %vm3427 = vcmp.eq.f32.partialorder %v3346, inf
        %v3428 = vsel %vm3427, %v3346, %v3426
        %vm3429 = vcmp.eq.f32.partialorder %v3346, 0.0
        %v3430 = vand.u32 %v3346, 2147483648
        %v3431 = vsel %vm3429, %v3430, %v3428
        %v3432 = vrsqrt.pop %v3347
        %v3433 = vmul.f32 %v3432, %v3347
        %v3434 = vmul.f32 %v3433, %v3432
        %v3435 = vmul.f32 0.5, %v3434
        %v3436 = vsub.f32 1.5, %v3435
        %v3437 = vmul.f32 %v3432, %v3436
        %v3438 = vmul.f32 %v3347, %v3437
        %vm3439 = vcmp.eq.f32.partialorder %v3347, inf
        %v3440 = vsel %vm3439, %v3347, %v3438
        %vm3441 = vcmp.eq.f32.partialorder %v3347, 0.0
        %v3442 = vand.u32 %v3347, 2147483648
        %v3443 = vsel %vm3441, %v3442, %v3440
        %v3444 = vsel %vm332, %v3359, -inf
        %3445 = vmax.xlane.f32.xlu0 %v3444
        %v3446 = vpop.xlane.xlu0 %3445
        %v3447 = vsel %vm332, %v3371, -inf
        %3448 = vmax.xlane.f32.xlu0 %v3447
        %v3449 = vpop.xlane.xlu0 %3448
        %v3450 = vsel %vm332, %v3383, -inf
        %3451 = vmax.xlane.f32.xlu0 %v3450
        %v3452 = vpop.xlane.xlu0 %3451
        %v3453 = vsel %vm332, %v3395, -inf
        %3454 = vmax.xlane.f32.xlu0 %v3453
        %v3455 = vpop.xlane.xlu0 %3454
        %v3456 = vsel %vm332, %v3407, -inf
        %3457 = vmax.xlane.f32.xlu0 %v3456
        %v3458 = vpop.xlane.xlu0 %3457
        %v3459 = vsel %vm332, %v3419, -inf
        %3460 = vmax.xlane.f32.xlu0 %v3459
        %v3461 = vpop.xlane.xlu0 %3460
        %v3462 = vsel %vm332, %v3431, -inf
        %3463 = vmax.xlane.f32.xlu0 %v3462
        %v3464 = vpop.xlane.xlu0 %3463
        %v3465 = vsel %vm332, %v3443, -inf
        %3466 = vmax.xlane.f32.xlu0 %v3465
        %v3467 = vpop.xlane.xlu0 %3466
        %v3468 = vsub.f32 %v3359, %v3446
        %v3469 = vsub.f32 %v3371, %v3449
        %v3470 = vsub.f32 %v3383, %v3452
        %v3471 = vsub.f32 %v3395, %v3455
        %v3472 = vsub.f32 %v3407, %v3458
        %v3473 = vsub.f32 %v3419, %v3461
        %v3474 = vsub.f32 %v3431, %v3464
        %v3475 = vsub.f32 %v3443, %v3467
        %v3476 = vmul.f32 %v3468, 1.442695
        %v3477 = vpow.pop %v3476
        %v3478 = vmul.f32 %v3469, 1.442695
        %v3479 = vpow.pop %v3478
        %v3480 = vmul.f32 %v3470, 1.442695
        %v3481 = vpow.pop %v3480
        %v3482 = vmul.f32 %v3471, 1.442695
        %v3483 = vpow.pop %v3482
        %v3484 = vmul.f32 %v3472, 1.442695
        %v3485 = vpow.pop %v3484
        %v3486 = vmul.f32 %v3473, 1.442695
        %v3487 = vpow.pop %v3486
        %v3488 = vmul.f32 %v3474, 1.442695
        %v3489 = vpow.pop %v3488
        %v3490 = vmul.f32 %v3475, 1.442695
        %v3491 = vpow.pop %v3490
        %v3492 = vsel %vm332, %v3477, 0.0
        %3493 = vadd.xlane.f32.xlu0 %v3492
        %v3494 = vpop.xlane.xlu0 %3493
        %v3495 = vsel %vm332, %v3479, 0.0
        %3496 = vadd.xlane.f32.xlu0 %v3495
        %v3497 = vpop.xlane.xlu0 %3496
        %v3498 = vsel %vm332, %v3481, 0.0
        %3499 = vadd.xlane.f32.xlu0 %v3498
        %v3500 = vpop.xlane.xlu0 %3499
        %v3501 = vsel %vm332, %v3483, 0.0
        %3502 = vadd.xlane.f32.xlu0 %v3501
        %v3503 = vpop.xlane.xlu0 %3502
        %v3504 = vsel %vm332, %v3485, 0.0
        %3505 = vadd.xlane.f32.xlu0 %v3504
        %v3506 = vpop.xlane.xlu0 %3505
        %v3507 = vsel %vm332, %v3487, 0.0
        %3508 = vadd.xlane.f32.xlu0 %v3507
        %v3509 = vpop.xlane.xlu0 %3508
        %v3510 = vsel %vm332, %v3489, 0.0
        %3511 = vadd.xlane.f32.xlu0 %v3510
        %v3512 = vpop.xlane.xlu0 %3511
        %v3513 = vsel %vm332, %v3491, 0.0
        %3514 = vadd.xlane.f32.xlu0 %v3513
        %v3515 = vpop.xlane.xlu0 %3514
        %v3516 = vrcp.pop %v3494
        %v3517 = vmul.f32 %v3494, %v3516
        %v3518 = vsub.f32 1.0, %v3517
        %v3519 = vmul.f32 %v3516, %v3518
        %v3520 = vadd.f32 %v3516, %v3519
        %vm3521 = vweird.f32 %v3494
        %vm3522 = vweird.f32 %v3516
        %vm3523 = vmor %vm3521, %vm3522
        %v3524 = vsel %vm3523, %v3516, %v3520
        %v3525 = vand.u32 2147483647, %v3494
        %vm3526 = vcmp.eq.f32.partialorder %v3525, 8.507059e+37
        %v3527 = vand.u32 %v3494, 2147483648
        %v3528 = vor.u32 1.1754944e-38, %v3527
        %v3529 = vsel %vm3526, %v3528, %v3524
        %v3530 = vrcp.pop %v3497
        %v3531 = vmul.f32 %v3497, %v3530
        %v3532 = vsub.f32 1.0, %v3531
        %v3533 = vmul.f32 %v3530, %v3532
        %v3534 = vadd.f32 %v3530, %v3533
        %vm3535 = vweird.f32 %v3497
        %vm3536 = vweird.f32 %v3530
        %vm3537 = vmor %vm3535, %vm3536
        %v3538 = vsel %vm3537, %v3530, %v3534
        %v3539 = vand.u32 2147483647, %v3497
        %vm3540 = vcmp.eq.f32.partialorder %v3539, 8.507059e+37
        %v3541 = vand.u32 %v3497, 2147483648
        %v3542 = vor.u32 1.1754944e-38, %v3541
        %v3543 = vsel %vm3540, %v3542, %v3538
        %v3544 = vrcp.pop %v3500
        %v3545 = vmul.f32 %v3500, %v3544
        %v3546 = vsub.f32 1.0, %v3545
        %v3547 = vmul.f32 %v3544, %v3546
        %v3548 = vadd.f32 %v3544, %v3547
        %vm3549 = vweird.f32 %v3500
        %vm3550 = vweird.f32 %v3544
        %vm3551 = vmor %vm3549, %vm3550
        %v3552 = vsel %vm3551, %v3544, %v3548
        %v3553 = vand.u32 2147483647, %v3500
        %vm3554 = vcmp.eq.f32.partialorder %v3553, 8.507059e+37
        %v3555 = vand.u32 %v3500, 2147483648
        %v3556 = vor.u32 1.1754944e-38, %v3555
        %v3557 = vsel %vm3554, %v3556, %v3552
        %v3558 = vrcp.pop %v3503
        %v3559 = vmul.f32 %v3503, %v3558
        %v3560 = vsub.f32 1.0, %v3559
        %v3561 = vmul.f32 %v3558, %v3560
        %v3562 = vadd.f32 %v3558, %v3561
        %vm3563 = vweird.f32 %v3503
        %vm3564 = vweird.f32 %v3558
        %vm3565 = vmor %vm3563, %vm3564
        %v3566 = vsel %vm3565, %v3558, %v3562
        %v3567 = vand.u32 2147483647, %v3503
        %vm3568 = vcmp.eq.f32.partialorder %v3567, 8.507059e+37
        %v3569 = vand.u32 %v3503, 2147483648
        %v3570 = vor.u32 1.1754944e-38, %v3569
        %v3571 = vsel %vm3568, %v3570, %v3566
        %v3572 = vrcp.pop %v3506
        %v3573 = vmul.f32 %v3506, %v3572
        %v3574 = vsub.f32 1.0, %v3573
        %v3575 = vmul.f32 %v3572, %v3574
        %v3576 = vadd.f32 %v3572, %v3575
        %vm3577 = vweird.f32 %v3506
        %vm3578 = vweird.f32 %v3572
        %vm3579 = vmor %vm3577, %vm3578
        %v3580 = vsel %vm3579, %v3572, %v3576
        %v3581 = vand.u32 2147483647, %v3506
        %vm3582 = vcmp.eq.f32.partialorder %v3581, 8.507059e+37
        %v3583 = vand.u32 %v3506, 2147483648
        %v3584 = vor.u32 1.1754944e-38, %v3583
        %v3585 = vsel %vm3582, %v3584, %v3580
        %v3586 = vrcp.pop %v3509
        %v3587 = vmul.f32 %v3509, %v3586
        %v3588 = vsub.f32 1.0, %v3587
        %v3589 = vmul.f32 %v3586, %v3588
        %v3590 = vadd.f32 %v3586, %v3589
        %vm3591 = vweird.f32 %v3509
        %vm3592 = vweird.f32 %v3586
        %vm3593 = vmor %vm3591, %vm3592
        %v3594 = vsel %vm3593, %v3586, %v3590
        %v3595 = vand.u32 2147483647, %v3509
        %vm3596 = vcmp.eq.f32.partialorder %v3595, 8.507059e+37
        %v3597 = vand.u32 %v3509, 2147483648
        %v3598 = vor.u32 1.1754944e-38, %v3597
        %v3599 = vsel %vm3596, %v3598, %v3594
        %v3600 = vrcp.pop %v3512
        %v3601 = vmul.f32 %v3512, %v3600
        %v3602 = vsub.f32 1.0, %v3601
        %v3603 = vmul.f32 %v3600, %v3602
        %v3604 = vadd.f32 %v3600, %v3603
        %vm3605 = vweird.f32 %v3512
        %vm3606 = vweird.f32 %v3600
        %vm3607 = vmor %vm3605, %vm3606
        %v3608 = vsel %vm3607, %v3600, %v3604
        %v3609 = vand.u32 2147483647, %v3512
        %vm3610 = vcmp.eq.f32.partialorder %v3609, 8.507059e+37
        %v3611 = vand.u32 %v3512, 2147483648
        %v3612 = vor.u32 1.1754944e-38, %v3611
        %v3613 = vsel %vm3610, %v3612, %v3608
        %v3614 = vrcp.pop %v3515
        %v3615 = vmul.f32 %v3515, %v3614
        %v3616 = vsub.f32 1.0, %v3615
        %v3617 = vmul.f32 %v3614, %v3616
        %v3618 = vadd.f32 %v3614, %v3617
        %vm3619 = vweird.f32 %v3515
        %vm3620 = vweird.f32 %v3614
        %vm3621 = vmor %vm3619, %vm3620
        %v3622 = vsel %vm3621, %v3614, %v3618
        %v3623 = vand.u32 2147483647, %v3515
        %vm3624 = vcmp.eq.f32.partialorder %v3623, 8.507059e+37
        %v3625 = vand.u32 %v3515, 2147483648
        %v3626 = vor.u32 1.1754944e-38, %v3625
        %v3627 = vsel %vm3624, %v3626, %v3622
        %v3628 = vmul.f32 %v3477, %v3529
        %v3629 = vmul.f32 %v3479, %v3543
        %v3630 = vmul.f32 %v3481, %v3557
        %v3631 = vmul.f32 %v3483, %v3571
        %v3632 = vmul.f32 %v3485, %v3585
        %v3633 = vmul.f32 %v3487, %v3599
        %v3634 = vmul.f32 %v3489, %v3613
        %v3635 = vmul.f32 %v3491, %v3627
        %v3636 = vadd.f32 %v3359, 1e-08
        %v3637 = vadd.f32 %v3371, 1e-08
        %v3638 = vadd.f32 %v3383, 1e-08
        %v3639 = vadd.f32 %v3395, 1e-08
        %v3640 = vadd.f32 %v3407, 1e-08
        %v3641 = vadd.f32 %v3419, 1e-08
        %v3642 = vadd.f32 %v3431, 1e-08
        %v3643 = vadd.f32 %v3443, 1e-08
        %v3644 = vrcp.pop %v3636
        %v3645 = vmul.f32 %v3636, %v3644
        %v3646 = vsub.f32 1.0, %v3645
        %v3647 = vmul.f32 %v3644, %v3646
        %v3648 = vadd.f32 %v3644, %v3647
        %vm3649 = vweird.f32 %v3636
        %vm3650 = vweird.f32 %v3644
        %vm3651 = vmor %vm3649, %vm3650
        %v3652 = vsel %vm3651, %v3644, %v3648
        %v3653 = vand.u32 2147483647, %v3636
        %vm3654 = vcmp.eq.f32.partialorder %v3653, 8.507059e+37
        %v3655 = vand.u32 %v3636, 2147483648
        %v3656 = vor.u32 1.1754944e-38, %v3655
        %v3657 = vsel %vm3654, %v3656, %v3652
        %v3658 = vrcp.pop %v3637
        %v3659 = vmul.f32 %v3637, %v3658
        %v3660 = vsub.f32 1.0, %v3659
        %v3661 = vmul.f32 %v3658, %v3660
        %v3662 = vadd.f32 %v3658, %v3661
        %vm3663 = vweird.f32 %v3637
        %vm3664 = vweird.f32 %v3658
        %vm3665 = vmor %vm3663, %vm3664
        %v3666 = vsel %vm3665, %v3658, %v3662
        %v3667 = vand.u32 2147483647, %v3637
        %vm3668 = vcmp.eq.f32.partialorder %v3667, 8.507059e+37
        %v3669 = vand.u32 %v3637, 2147483648
        %v3670 = vor.u32 1.1754944e-38, %v3669
        %v3671 = vsel %vm3668, %v3670, %v3666
        %v3672 = vrcp.pop %v3638
        %v3673 = vmul.f32 %v3638, %v3672
        %v3674 = vsub.f32 1.0, %v3673
        %v3675 = vmul.f32 %v3672, %v3674
        %v3676 = vadd.f32 %v3672, %v3675
        %vm3677 = vweird.f32 %v3638
        %vm3678 = vweird.f32 %v3672
        %vm3679 = vmor %vm3677, %vm3678
        %v3680 = vsel %vm3679, %v3672, %v3676
        %v3681 = vand.u32 2147483647, %v3638
        %vm3682 = vcmp.eq.f32.partialorder %v3681, 8.507059e+37
        %v3683 = vand.u32 %v3638, 2147483648
        %v3684 = vor.u32 1.1754944e-38, %v3683
        %v3685 = vsel %vm3682, %v3684, %v3680
        %v3686 = vrcp.pop %v3639
        %v3687 = vmul.f32 %v3639, %v3686
        %v3688 = vsub.f32 1.0, %v3687
        %v3689 = vmul.f32 %v3686, %v3688
        %v3690 = vadd.f32 %v3686, %v3689
        %vm3691 = vweird.f32 %v3639
        %vm3692 = vweird.f32 %v3686
        %vm3693 = vmor %vm3691, %vm3692
        %v3694 = vsel %vm3693, %v3686, %v3690
        %v3695 = vand.u32 2147483647, %v3639
        %vm3696 = vcmp.eq.f32.partialorder %v3695, 8.507059e+37
        %v3697 = vand.u32 %v3639, 2147483648
        %v3698 = vor.u32 1.1754944e-38, %v3697
        %v3699 = vsel %vm3696, %v3698, %v3694
        %v3700 = vrcp.pop %v3640
        %v3701 = vmul.f32 %v3640, %v3700
        %v3702 = vsub.f32 1.0, %v3701
        %v3703 = vmul.f32 %v3700, %v3702
        %v3704 = vadd.f32 %v3700, %v3703
        %vm3705 = vweird.f32 %v3640
        %vm3706 = vweird.f32 %v3700
        %vm3707 = vmor %vm3705, %vm3706
        %v3708 = vsel %vm3707, %v3700, %v3704
        %v3709 = vand.u32 2147483647, %v3640
        %vm3710 = vcmp.eq.f32.partialorder %v3709, 8.507059e+37
        %v3711 = vand.u32 %v3640, 2147483648
        %v3712 = vor.u32 1.1754944e-38, %v3711
        %v3713 = vsel %vm3710, %v3712, %v3708
        %v3714 = vrcp.pop %v3641
        %v3715 = vmul.f32 %v3641, %v3714
        %v3716 = vsub.f32 1.0, %v3715
        %v3717 = vmul.f32 %v3714, %v3716
        %v3718 = vadd.f32 %v3714, %v3717
        %vm3719 = vweird.f32 %v3641
        %vm3720 = vweird.f32 %v3714
        %vm3721 = vmor %vm3719, %vm3720
        %v3722 = vsel %vm3721, %v3714, %v3718
        %v3723 = vand.u32 2147483647, %v3641
        %vm3724 = vcmp.eq.f32.partialorder %v3723, 8.507059e+37
        %v3725 = vand.u32 %v3641, 2147483648
        %v3726 = vor.u32 1.1754944e-38, %v3725
        %v3727 = vsel %vm3724, %v3726, %v3722
        %v3728 = vrcp.pop %v3642
        %v3729 = vmul.f32 %v3642, %v3728
        %v3730 = vsub.f32 1.0, %v3729
        %v3731 = vmul.f32 %v3728, %v3730
        %v3732 = vadd.f32 %v3728, %v3731
        %vm3733 = vweird.f32 %v3642
        %vm3734 = vweird.f32 %v3728
        %vm3735 = vmor %vm3733, %vm3734
        %v3736 = vsel %vm3735, %v3728, %v3732
        %v3737 = vand.u32 2147483647, %v3642
        %vm3738 = vcmp.eq.f32.partialorder %v3737, 8.507059e+37
        %v3739 = vand.u32 %v3642, 2147483648
        %v3740 = vor.u32 1.1754944e-38, %v3739
        %v3741 = vsel %vm3738, %v3740, %v3736
        %v3742 = vrcp.pop %v3643
        %v3743 = vmul.f32 %v3643, %v3742
        %v3744 = vsub.f32 1.0, %v3743
        %v3745 = vmul.f32 %v3742, %v3744
        %v3746 = vadd.f32 %v3742, %v3745
        %vm3747 = vweird.f32 %v3643
        %vm3748 = vweird.f32 %v3742
        %vm3749 = vmor %vm3747, %vm3748
        %v3750 = vsel %vm3749, %v3742, %v3746
        %v3751 = vand.u32 2147483647, %v3643
        %vm3752 = vcmp.eq.f32.partialorder %v3751, 8.507059e+37
        %v3753 = vand.u32 %v3643, 2147483648
        %v3754 = vor.u32 1.1754944e-38, %v3753
        %v3755 = vsel %vm3752, %v3754, %v3750
        %v3756 = vmul.f32 %v3628, %v3657
        %v3757 = vmul.f32 %v3629, %v3671
        %v3758 = vmul.f32 %v3630, %v3685
        %v3759 = vmul.f32 %v3631, %v3699
        %v3760 = vmul.f32 %v3632, %v3713
        %v3761 = vmul.f32 %v3633, %v3727
        %v3762 = vmul.f32 %v3634, %v3741
        %v3763 = vmul.f32 %v3635, %v3755
        %v3764 = vmul.f32 %v3308, %v3756
        %v3765 = vmul.f32 %v3309, %v3757
        %v3766 = vmul.f32 %v3310, %v3758
        %v3767 = vmul.f32 %v3311, %v3759
        %v3768 = vmul.f32 %v3312, %v3760
        %v3769 = vmul.f32 %v3313, %v3761
        %v3770 = vmul.f32 %v3314, %v3762
        %v3771 = vmul.f32 %v3315, %v3763
        %v3772 = vmul.f32 %v3316, %v3756
        %v3773 = vmul.f32 %v3317, %v3757
        %v3774 = vmul.f32 %v3318, %v3758
        %v3775 = vmul.f32 %v3319, %v3759
        %v3776 = vmul.f32 %v3320, %v3760
        %v3777 = vmul.f32 %v3321, %v3761
        %v3778 = vmul.f32 %v3322, %v3762
        %v3779 = vmul.f32 %v3323, %v3763
        %3780 = vrot.lane.b32.xlu0 %v2937, 72
        %v3781 = vpop.permute.xlu0 %3780
        %3782 = vrot.lane.b32.xlu0 %v2938, 72
        %v3783 = vpop.permute.xlu0 %3782
        %3784 = vrot.lane.b32.xlu0 %v2939, 72
        %v3785 = vpop.permute.xlu0 %3784
        %3786 = vrot.lane.b32.xlu0 %v2940, 72
        %v3787 = vpop.permute.xlu0 %3786
        %3788 = vrot.lane.b32.xlu0 %v2941, 72
        %v3789 = vpop.permute.xlu0 %3788
        %3790 = vrot.lane.b32.xlu0 %v2942, 72
        %v3791 = vpop.permute.xlu0 %3790
        %3792 = vrot.lane.b32.xlu0 %v2943, 72
        %v3793 = vpop.permute.xlu0 %3792
        %3794 = vrot.lane.b32.xlu0 %v2944, 72
        %v3795 = vpop.permute.xlu0 %3794
        %3804 = vrot.lane.b32.xlu0 %v416, 88
        %v3805 = vpop.permute.xlu0 %3804
        %3806 = vrot.lane.b32.xlu0 %v419, 88
        %v3807 = vpop.permute.xlu0 %3806
        %3808 = vrot.lane.b32.xlu0 %v422, 88
        %v3809 = vpop.permute.xlu0 %3808
        %3810 = vrot.lane.b32.xlu0 %v425, 88
        %v3811 = vpop.permute.xlu0 %3810
        %3812 = vrot.lane.b32.xlu0 %v428, 88
        %v3813 = vpop.permute.xlu0 %3812
        %3814 = vrot.lane.b32.xlu0 %v431, 88
        %v3815 = vpop.permute.xlu0 %3814
        %3816 = vrot.lane.b32.xlu0 %v434, 88
        %v3817 = vpop.permute.xlu0 %3816
        %3818 = vrot.lane.b32.xlu0 %v437, 88
        %v3819 = vpop.permute.xlu0 %3818
        %v3828 = vsel %vm511, %v3781, %v3805
        %v3829 = vsel %vm511, %v3783, %v3807
        %v3830 = vsel %vm511, %v3785, %v3809
        %v3831 = vsel %vm511, %v3787, %v3811
        %v3832 = vsel %vm511, %v3789, %v3813
        %v3833 = vsel %vm511, %v3791, %v3815
        %v3834 = vsel %vm511, %v3793, %v3817
        %v3835 = vsel %vm511, %v3795, %v3819
        %3844 = vrot.lane.b32.xlu0 %v3828, 48
        %v3845 = vpop.permute.xlu0 %3844
        %3846 = vrot.lane.b32.xlu0 %v3829, 48
        %v3847 = vpop.permute.xlu0 %3846
        %3848 = vrot.lane.b32.xlu0 %v3830, 48
        %v3849 = vpop.permute.xlu0 %3848
        %3850 = vrot.lane.b32.xlu0 %v3831, 48
        %v3851 = vpop.permute.xlu0 %3850
        %3852 = vrot.lane.b32.xlu0 %v3832, 48
        %v3853 = vpop.permute.xlu0 %3852
        %3854 = vrot.lane.b32.xlu0 %v3833, 48
        %v3855 = vpop.permute.xlu0 %3854
        %3856 = vrot.lane.b32.xlu0 %v3834, 48
        %v3857 = vpop.permute.xlu0 %3856
        %3858 = vrot.lane.b32.xlu0 %v3835, 48
        %v3859 = vpop.permute.xlu0 %3858
        %3868 = vrot.lane.b32.xlu0 %v3772, 64
        %v3869 = vpop.permute.xlu0 %3868
        %3870 = vrot.lane.b32.xlu0 %v3773, 64
        %v3871 = vpop.permute.xlu0 %3870
        %3872 = vrot.lane.b32.xlu0 %v3774, 64
        %v3873 = vpop.permute.xlu0 %3872
        %3874 = vrot.lane.b32.xlu0 %v3775, 64
        %v3875 = vpop.permute.xlu0 %3874
        %3876 = vrot.lane.b32.xlu0 %v3776, 64
        %v3877 = vpop.permute.xlu0 %3876
        %3878 = vrot.lane.b32.xlu0 %v3777, 64
        %v3879 = vpop.permute.xlu0 %3878
        %3880 = vrot.lane.b32.xlu0 %v3778, 64
        %v3881 = vpop.permute.xlu0 %3880
        %3882 = vrot.lane.b32.xlu0 %v3779, 64
        %v3883 = vpop.permute.xlu0 %3882
        %v3892 = vsel %vm332, %v3764, %v3869
        %v3893 = vsel %vm332, %v3765, %v3871
        %v3894 = vsel %vm332, %v3766, %v3873
        %v3895 = vsel %vm332, %v3767, %v3875
        %v3896 = vsel %vm332, %v3768, %v3877
        %v3897 = vsel %vm332, %v3769, %v3879
        %v3898 = vsel %vm332, %v3770, %v3881
        %v3899 = vsel %vm332, %v3771, %v3883
        %3900 = vrot.lane.b32.xlu0 %v416, 80
        %v3901 = vpop.permute.xlu0 %3900
        %3902 = vrot.lane.b32.xlu0 %v419, 80
        %v3903 = vpop.permute.xlu0 %3902
        %3904 = vrot.lane.b32.xlu0 %v422, 80
        %v3905 = vpop.permute.xlu0 %3904
        %3906 = vrot.lane.b32.xlu0 %v425, 80
        %v3907 = vpop.permute.xlu0 %3906
        %3908 = vrot.lane.b32.xlu0 %v428, 80
        %v3909 = vpop.permute.xlu0 %3908
        %3910 = vrot.lane.b32.xlu0 %v431, 80
        %v3911 = vpop.permute.xlu0 %3910
        %3912 = vrot.lane.b32.xlu0 %v434, 80
        %v3913 = vpop.permute.xlu0 %3912
        %3914 = vrot.lane.b32.xlu0 %v437, 80
        %v3915 = vpop.permute.xlu0 %3914
        %3916 = vrot.lane.b32.xlu0 %v3845, 80
        %v3917 = vpop.permute.xlu0 %3916
        %3918 = vrot.lane.b32.xlu0 %v3847, 80
        %v3919 = vpop.permute.xlu0 %3918
        %3920 = vrot.lane.b32.xlu0 %v3849, 80
        %v3921 = vpop.permute.xlu0 %3920
        %3922 = vrot.lane.b32.xlu0 %v3851, 80
        %v3923 = vpop.permute.xlu0 %3922
        %3924 = vrot.lane.b32.xlu0 %v3853, 80
        %v3925 = vpop.permute.xlu0 %3924
        %3926 = vrot.lane.b32.xlu0 %v3855, 80
        %v3927 = vpop.permute.xlu0 %3926
        %3928 = vrot.lane.b32.xlu0 %v3857, 80
        %v3929 = vpop.permute.xlu0 %3928
        %3930 = vrot.lane.b32.xlu0 %v3859, 80
        %v3931 = vpop.permute.xlu0 %3930
        %3948 = vmatpush.msra.mxu0 %v3931
        %3949 = vmatpush.msra.mxu0 %v3929
        %3950 = vmatpush.msra.mxu0 %v3927
        %3951 = vmatpush.msra.mxu0 %v3925
        %3952 = vmatpush.msra.mxu0 %v3923
        %3953 = vmatpush.msra.mxu0 %v3921
        %3954 = vmatpush.msra.mxu0 %v3919
        %3955 = vmatpush.msra.mxu0 %v3917
        %3956 = vmatpush.msra.mxu0 %v3915
        %3957 = vmatpush.msra.mxu0 %v3913
        %3958 = vmatpush.msra.mxu0 %v3911
        %3959 = vmatpush.msra.mxu0 %v3909
        %3960 = vmatpush.msra.mxu0 %v3907
        %3961 = vmatpush.msra.mxu0 %v3905
        %3962 = vmatpush.msra.mxu0 %v3903
        %3963 = vmatpush.msra.mxu0 %v3901
        %3964 = vmatmul.f32.gmra.mxu0 %v3892
        %v3965 = vpop.f32.mrf.mxu0
        %v3966 = vadd.f32 0.0, %v3965
        %3967 = vmatmul.f32.gmra.mxu0 %v3893
        %v3968 = vpop.f32.mrf.mxu0
        %v3969 = vadd.f32 0.0, %v3968
        %3970 = vmatmul.f32.gmra.mxu0 %v3894
        %v3971 = vpop.f32.mrf.mxu0
        %v3972 = vadd.f32 0.0, %v3971
        %3973 = vmatmul.f32.gmra.mxu0 %v3895
        %v3974 = vpop.f32.mrf.mxu0
        %v3975 = vadd.f32 0.0, %v3974
        %3976 = vmatmul.f32.gmra.mxu0 %v3896
        %v3977 = vpop.f32.mrf.mxu0
        %v3978 = vadd.f32 0.0, %v3977
        %3979 = vmatmul.f32.gmra.mxu0 %v3897
        %v3980 = vpop.f32.mrf.mxu0
        %v3981 = vadd.f32 0.0, %v3980
        %3982 = vmatmul.f32.gmra.mxu0 %v3898
        %v3983 = vpop.f32.mrf.mxu0
        %v3984 = vadd.f32 0.0, %v3983
        %3985 = vmatmul.f32.gmra.mxu0 %v3899
        %v3986 = vpop.f32.mrf.mxu0
        %v3987 = vadd.f32 0.0, %v3986
        %3988 = vdwg.mxu0
        %3997 = vrot.lane.b32.xlu0 %v2232, 16
        %v3998 = vpop.permute.xlu0 %3997
        %3999 = vrot.lane.b32.xlu0 %v2235, 16
        %v4000 = vpop.permute.xlu0 %3999
        %4001 = vrot.lane.b32.xlu0 %v2238, 16
        %v4002 = vpop.permute.xlu0 %4001
        %4003 = vrot.lane.b32.xlu0 %v2241, 16
        %v4004 = vpop.permute.xlu0 %4003
        %4005 = vrot.lane.b32.xlu0 %v2244, 16
        %v4006 = vpop.permute.xlu0 %4005
        %4007 = vrot.lane.b32.xlu0 %v2247, 16
        %v4008 = vpop.permute.xlu0 %4007
        %4009 = vrot.lane.b32.xlu0 %v2250, 16
        %v4010 = vpop.permute.xlu0 %4009
        %4011 = vrot.lane.b32.xlu0 %v2253, 16
        %v4012 = vpop.permute.xlu0 %4011
        %4029 = vrot.lane.b32.xlu0 %v3075, 32
        %v4030 = vpop.permute.xlu0 %4029
        %4031 = vrot.lane.b32.xlu0 %v3078, 32
        %v4032 = vpop.permute.xlu0 %4031
        %4033 = vrot.lane.b32.xlu0 %v3081, 32
        %v4034 = vpop.permute.xlu0 %4033
        %4035 = vrot.lane.b32.xlu0 %v3084, 32
        %v4036 = vpop.permute.xlu0 %4035
        %4037 = vrot.lane.b32.xlu0 %v3087, 32
        %v4038 = vpop.permute.xlu0 %4037
        %4039 = vrot.lane.b32.xlu0 %v3090, 32
        %v4040 = vpop.permute.xlu0 %4039
        %4041 = vrot.lane.b32.xlu0 %v3093, 32
        %v4042 = vpop.permute.xlu0 %4041
        %4043 = vrot.lane.b32.xlu0 %v3096, 32
        %v4044 = vpop.permute.xlu0 %4043
        %4061 = vrot.lane.b32.xlu0 %v3966, 48
        %v4062 = vpop.permute.xlu0 %4061
        %4063 = vrot.lane.b32.xlu0 %v3969, 48
        %v4064 = vpop.permute.xlu0 %4063
        %4065 = vrot.lane.b32.xlu0 %v3972, 48
        %v4066 = vpop.permute.xlu0 %4065
        %4067 = vrot.lane.b32.xlu0 %v3975, 48
        %v4068 = vpop.permute.xlu0 %4067
        %4069 = vrot.lane.b32.xlu0 %v3978, 48
        %v4070 = vpop.permute.xlu0 %4069
        %4071 = vrot.lane.b32.xlu0 %v3981, 48
        %v4072 = vpop.permute.xlu0 %4071
        %4073 = vrot.lane.b32.xlu0 %v3984, 48
        %v4074 = vpop.permute.xlu0 %4073
        %4075 = vrot.lane.b32.xlu0 %v3987, 48
        %v4076 = vpop.permute.xlu0 %4075
        %v4085 = vsel %vm536, %v1341, %v3998
        %v4086 = vsel %vm536, %v1344, %v4000
        %v4087 = vsel %vm536, %v1347, %v4002
        %v4088 = vsel %vm536, %v1350, %v4004
        %v4089 = vsel %vm536, %v1353, %v4006
        %v4090 = vsel %vm536, %v1356, %v4008
        %v4091 = vsel %vm536, %v1359, %v4010
        %v4092 = vsel %vm536, %v1362, %v4012
        %vm4093 = vcmask 261120
        %v4094 = vsel %vm4093, %v4085, %v4030
        %v4095 = vsel %vm4093, %v4086, %v4032
        %v4096 = vsel %vm4093, %v4087, %v4034
        %v4097 = vsel %vm4093, %v4088, %v4036
        %v4098 = vsel %vm4093, %v4089, %v4038
        %v4099 = vsel %vm4093, %v4090, %v4040
        %v4100 = vsel %vm4093, %v4091, %v4042
        %v4101 = vsel %vm4093, %v4092, %v4044
        %vm4102 = vcmask 392192
        %v4103 = vsel %vm4102, %v4094, %v4062
        %v4104 = vsel %vm4102, %v4095, %v4064
        %v4105 = vsel %vm4102, %v4096, %v4066
        %v4106 = vsel %vm4102, %v4097, %v4068
        %v4107 = vsel %vm4102, %v4098, %v4070
        %v4108 = vsel %vm4102, %v4099, %v4072
        %v4109 = vsel %vm4102, %v4100, %v4074
        %v4110 = vsel %vm4102, %v4101, %v4076
        %v4112 = vsel %vm332, %v4103, 0
        %v4115 = vsel %vm332, %v4104, 0
        %v4118 = vsel %vm332, %v4105, 0
        %v4121 = vsel %vm332, %v4106, 0
        %v4124 = vsel %vm332, %v4107, 0
        %v4127 = vsel %vm332, %v4108, 0
        %v4130 = vsel %vm332, %v4109, 0
        %v4133 = vsel %vm332, %v4110, 0
        %4135 = vmatpush.msra.mxu0 0.0
        %4136 = vmatpush.msra.mxu0 0.0
        %4137 = vmatpush.msra.mxu0 0.0
        %4138 = vmatpush.msra.mxu0 0.0
        %4139 = vmatpush.msra.mxu0 0.0
        %4140 = vmatpush.msra.mxu0 0.0
        %4141 = vmatpush.msra.mxu0 0.0
        %4142 = vmatpush.msra.mxu0 0.0
        %4143 = vmatpush.msra.mxu0 %v299
        %4144 = vmatpush.msra.mxu0 %v298
        %4145 = vmatpush.msra.mxu0 %v297
        %4146 = vmatpush.msra.mxu0 %v296
        %4147 = vmatpush.msra.mxu0 %v295
        %4148 = vmatpush.msra.mxu0 %v294
        %4149 = vmatpush.msra.mxu0 %v293
        %4150 = vmatpush.msra.mxu0 %v292
        %4151 = vmatmul.f32.gmra.mxu0 %v4112
        %v4152 = vpop.f32.mrf.mxu0
        %v4153 = vadd.f32 0.0, %v4152
        %4154 = vmatmul.f32.gmra.mxu0 %v4115
        %v4155 = vpop.f32.mrf.mxu0
        %v4156 = vadd.f32 0.0, %v4155
        %4157 = vmatmul.f32.gmra.mxu0 %v4118
        %v4158 = vpop.f32.mrf.mxu0
        %v4159 = vadd.f32 0.0, %v4158
        %4160 = vmatmul.f32.gmra.mxu0 %v4121
        %v4161 = vpop.f32.mrf.mxu0
        %v4162 = vadd.f32 0.0, %v4161
        %4163 = vmatmul.f32.gmra.mxu0 %v4124
        %v4164 = vpop.f32.mrf.mxu0
        %v4165 = vadd.f32 0.0, %v4164
        %4166 = vmatmul.f32.gmra.mxu0 %v4127
        %v4167 = vpop.f32.mrf.mxu0
        %v4168 = vadd.f32 0.0, %v4167
        %4169 = vmatmul.f32.gmra.mxu0 %v4130
        %v4170 = vpop.f32.mrf.mxu0
        %v4171 = vadd.f32 0.0, %v4170
        %4172 = vmatmul.f32.gmra.mxu0 %v4133
        %v4173 = vpop.f32.mrf.mxu0
        %v4174 = vadd.f32 0.0, %v4173
        %4175 = vdwg.mxu0
        %4176 = vst.msk [vmem:[%s267] sm:$0xff] %vm332, %v4153
        %4177 = vst.msk [vmem:[%s267 + $0x8] sm:$0xff] %vm332, %v4156
        %4178 = vst.msk [vmem:[%s267 + $0x10] sm:$0xff] %vm332, %v4159
        %4179 = vst.msk [vmem:[%s267 + $0x18] sm:$0xff] %vm332, %v4162
        %4180 = vst.msk [vmem:[%s267 + $0x20] sm:$0xff] %vm332, %v4165
        %4181 = vst.msk [vmem:[%s267 + $0x28] sm:$0xff] %vm332, %v4168
        %4182 = vst.msk [vmem:[%s267 + $0x30] sm:$0xff] %vm332, %v4171
        %4183 = vst.msk [vmem:[%s267 + $0x38] sm:$0xff] %vm332, %v4174
        %s4184 = sand.u32 %s120, 1
        %s4185 = scalar_lea.sflag [#allocation4], %s4184
        %s4186 = sand.u32 %s120, 1
        %s4187 = smul.addr %s4186, 64
        %s4188 = scalar_lea.vmem [#allocation10], %s4187
        // Predicated region
        $region53: #{tpu_custom_call.1} parent=35 // pred_check
          %p4189 = pneg %p130
        $region54: #{tpu_custom_call.1} parent=35 // pred_check_branch
          %4191 = sbr.rel (%p4189) target = $region56
        $region55: #{tpu_custom_call.1} parent=35 // pred_region
          %4193 = vsyncadd %s4185, 0
          %s4194 = smul.addr %s23, 8
          %s4195 = smul.addr %s4194, 8
          %s4196 = scalar_lea.hbm %s4, %s4195
          %s4197 = sshll.u32 %s4188, 4
          %s4198 = int_to_ptr.vmem [resolvable:$true] %s4197
          %s4199 = sshll.u32 %s4196, 4
          %s4200 = int_to_ptr.hbm [resolvable:$true] %s4199
          %4205 = dma.vmem_to_hbm [thread:$0]  %s4198, 1024, %s4200, %s4185, 128, 128, 8
        $region56: #{tpu_custom_call.1} parent=35 // pred_fallthru
          _
      $region36: #{tpu_custom_call.1} parent=5 // pred_fallthru
        _
      %p4206 = scmp.le.s32.totalorder 2, %s18
      // Predicated region
      $region57: #{tpu_custom_call.1} parent=5 // pred_check
        %p4207 = pneg %p4206
      $region58: #{tpu_custom_call.1} parent=5 // pred_check_branch
        %4209 = sbr.rel (%p4207) target = $region60
      $region59: #{tpu_custom_call.1} parent=5 // pred_region
        %s4210 = ssub.s32 %s18, 2
        // Predicated region
        $region61: #{tpu_custom_call.1} parent=59 // pred_check
          %p4211 = pneg %p136
        $region62: #{tpu_custom_call.1} parent=59 // pred_check_branch
          %4213 = sbr.rel (%p4211) target = $region64
        $region63: #{tpu_custom_call.1} parent=59 // pred_region
          %s4214 = sand.u32 %s121, 1
          %s4215 = scalar_lea.sflag [#allocation4], %s4214
          %s4216 = sand.u32 %s121, 1
          %s4217 = smul.addr %s4216, 64
          %s4218 = scalar_lea.vmem [#allocation10], %s4217
          %4220 = dma.done %s4215, 1024
        $region64: #{tpu_custom_call.1} parent=59 // pred_fallthru
          _
      $region60: #{tpu_custom_call.1} parent=5 // pred_fallthru
        _
    $region6: #{tpu_custom_call.1} parent=1 // loop_footer
      %s22 = sadd.s32 1, %s18
    $region7: #{tpu_custom_call.1} parent=1 // loop_footer_branch
      %17 = sbr.rel target = $region3
    $region8: #{tpu_custom_call.1} parent=1 // loop_exit
      _
    %4221 = vsyncpa [#allocation3], 1
    %s4222 = scalar_lea.sflag [#allocation3], 1
    %4223 = vsyncpa %s4222, 1
    %4224 = vsyncpa [#allocation6], 1
    %4225 = vsyncpa [#allocation9], 1
    %4226 = vsyncpa [#allocation4], 1
    %s4227 = scalar_lea.sflag [#allocation4], 1
    %4228 = vsyncpa %s4227, 1

</llo_original>
